<compile_context>
chip_gen: v7x
topology: tpu7x:2x2x1
jax: 0.10.0
libtpu: 0.0.40
codegen_flags: <defaults>
</compile_context>

<pallas_src>
import functools

import jax
import jax.numpy as jnp
import numpy as np
from jax.experimental import pallas as pl
from jax.experimental.pallas import tpu as pltpu


def _round_up(x, m):
    return (x + m - 1) // m * m


def _const_spec(shape):
    # Un-tiled operand: same (full-size) block at every grid step.
    ndim = len(shape)
    return pl.BlockSpec(shape, lambda *_: (0,) * ndim)


# ----------------------------------------------------------------------------
# Fused kernel.
# Grid: (B_pad // TB, N_pad // TN), dims = ("parallel", "arbitrary").
#   - point trunk: conv1 (K=2, two VPU broadcast FMAs), conv2 / conv3 on the
#     MXU (bf16 in, f32 acc).  conv3 emits RAW scores (bias/ReLU hoisted).
#   - running max of raw bf16 scores in a (TB, 1024) VMEM scratch, reset at
#     the first point tile of each batch tile.
#   - at the last point tile: hoisted bias+ReLU, then fc1/fc2/fc3 head, store
#     a lane-dense (TB, 128) output block (cols 4.. are zero padding).
# ----------------------------------------------------------------------------
def _stn2d_fused_kernel(x_ref,
                        w1_ref, b1_ref,
                        w2_ref, b2_ref,
                        w3_ref, b3_ref,
                        wf1_ref, bf1_ref,
                        wf2_ref, bf2_ref,
                        wf3_ref, bf3_ref,
                        o_ref,
                        pool_ref,
                        *, n_valid):
    tb, tn, _ = x_ref.shape
    rows = tb * tn
    nt = pl.program_id(1)
    last_nt = pl.num_programs(1) - 1

    # ---------------- point trunk ----------------
    x = x_ref[...].reshape(rows, 2)                       # (rows, 2) f32

    # conv1 + bn1 + relu: K=2 -> two VPU broadcast FMAs (skip the MXU).
    w1 = w1_ref[...]                                      # (2, 64) f32
    h = x[:, 0:1] * w1[0:1, :] + x[:, 1:2] * w1[1:2, :] + b1_ref[...]
    h = jnp.maximum(h, 0.0).astype(jnp.bfloat16)          # (rows, 64)

    # conv2 + bn2 + relu -> (rows, 128)
    h = jnp.dot(h, w2_ref[...], preferred_element_type=jnp.float32) + b2_ref[...]
    h = jnp.maximum(h, 0.0).astype(jnp.bfloat16)

    # conv3: RAW scores only (bias + ReLU hoisted past the max-pool),
    # downcast to bf16 before the reduction / pooled accumulator.
    z = jnp.dot(h, w3_ref[...], preferred_element_type=jnp.float32)
    z = z.astype(jnp.bfloat16).reshape(tb, tn, -1)        # (TB, TN, 1024)

    # ---------------- running max over points (raw scores, bf16) ------------
    @pl.when(nt == 0)
    def _():
        pool_ref[...] = jnp.full_like(pool_ref, -jnp.inf)

    def _update(tile):
        pool_ref[...] = jnp.maximum(pool_ref[...], jnp.max(tile, axis=1))

    if n_valid % tn != 0:
        # Ragged N: mask padded point rows, but only on the LAST point tile
        # (runtime-gated; every other tile skips the select entirely).
        @pl.when(nt == last_nt)
        def _():
            pt = nt * tn + jax.lax.broadcasted_iota(jnp.int32, (1, tn, 1), 1)
            _update(jnp.where(pt < n_valid, z, jnp.asarray(-1e30, z.dtype)))

        @pl.when(nt < last_nt)
        def _():
            _update(z)
    else:
        _update(z)

    # ---------------- fused FC head (once per batch tile) -------------------
    @pl.when(nt == last_nt)
    def _():
        # Hoisted conv3 bias + ReLU, applied once on the small pooled block.
        g = jnp.maximum(pool_ref[...].astype(jnp.float32) + b3_ref[...], 0.0)
        g = g.astype(jnp.bfloat16)                        # (TB, 1024)
        f = jnp.dot(g, wf1_ref[...], preferred_element_type=jnp.float32) + bf1_ref[...]
        f = jnp.maximum(f, 0.0).astype(jnp.bfloat16)      # (TB, 512)
        f = jnp.dot(f, wf2_ref[...], preferred_element_type=jnp.float32) + bf2_ref[...]
        f = jnp.maximum(f, 0.0).astype(jnp.bfloat16)      # (TB, 256)
        out = jnp.dot(f, wf3_ref[...], preferred_element_type=jnp.float32) + bf3_ref[...]
        o_ref[...] = out.astype(o_ref.dtype)              # (TB, 128) lane-dense


@functools.partial(jax.jit, static_argnames=("point_tile",))
def stn2d_forward(x_ncl, params, *, point_tile=512):
    """x_ncl: (B, 2, N) float32 (PyTorch NCL layout).  Returns (B, 2, 2)."""
    B, c_in, N = x_ncl.shape
    assert c_in == 2

    x_bnc = jnp.transpose(x_ncl, (0, 2, 1)).astype(jnp.float32)   # (B, N, 2)

    # Batch tile: 8 for real batches; B itself for tiny batches (no wasted
    # padded-batch compute, and the output block stays layout-legal).
    # For B >= 16 the "parallel" batch axis has extent >= 2 (v7x dual-core).
    TB = 8 if B >= 8 else B
    # Point tile: 512 fits v7x's 64 MiB VMEM with the bf16 pre-max activation
    # (v6e could go to 1024); small N just uses one tile.
    TN = min(point_tile, _round_up(N, 8))
    B_pad = _round_up(B, TB)
    N_pad = _round_up(N, TN)
    x_bnc = jnp.pad(x_bnc, ((0, B_pad - B), (0, N_pad - N), (0, 0)))

    out = pl.pallas_call(
        functools.partial(_stn2d_fused_kernel, n_valid=N),
        out_shape=jax.ShapeDtypeStruct((B_pad, 128), jnp.float32),
        grid_spec=pltpu.PrefetchScalarGridSpec(
            num_scalar_prefetch=0,
            grid=(B_pad // TB, N_pad // TN),
            in_specs=[pl.BlockSpec((TB, TN, 2), lambda b, n: (b, n, 0))]
                     + [_const_spec(p.shape) for p in params],
            out_specs=pl.BlockSpec((TB, 128), lambda b, n: (b, 0)),
            scratch_shapes=[pltpu.VMEM((TB, 1024), jnp.bfloat16)],
        ),
        compiler_params=pltpu.CompilerParams(
            dimension_semantics=("parallel", "arbitrary"),
            vmem_limit_bytes=48 * 1024 * 1024),
    )(x_bnc, *params)

    return out[:B, :4].reshape(B, 2, 2)


# ----------------------------------------------------------------------------
# Deterministic parameter construction (glue, plain JAX).
# ----------------------------------------------------------------------------
def _bn_fold(w, b, gamma, beta, mean, var, eps=1e-5):
    """Fold eval-mode BatchNorm1d into a (Cin, Cout) weight and a bias."""
    s = gamma / jnp.sqrt(var + eps)                  # (Cout,)
    w_eff = w * s[None, :]
    b_eff = s * (b - mean) + beta
    return w_eff, b_eff


def make_params(key):
    """Weights stored (Cin, Cout).  Conv1 weight kept f32 (VPU path); all MXU
    weights stored bf16; biases stored (1, Cout) f32 with BN folded in.
    fc3 is zero-padded to 128 output columns (lane-dense store); the
    `+ identity` ([1,0,0,1]) offset is folded into its bias."""
    dims = [(2, 64), (64, 128), (128, 1024), (1024, 512), (512, 256), (256, 4)]
    keys = jax.random.split(key, len(dims) * 6)
    params = []
    ki = 0
    for li, (cin, cout) in enumerate(dims):
        w = 0.1 * jax.random.normal(keys[ki], (cin, cout), jnp.float32); ki += 1
        b = 0.1 * jax.random.normal(keys[ki], (cout,), jnp.float32); ki += 1
        if li < 5:  # layers followed by a BatchNorm (bn1..bn5)
            gamma = 1.0 + 0.1 * jax.random.normal(keys[ki], (cout,), jnp.float32); ki += 1
            beta = 0.1 * jax.random.normal(keys[ki], (cout,), jnp.float32); ki += 1
            mean = 0.1 * jax.random.normal(keys[ki], (cout,), jnp.float32); ki += 1
            var = 0.5 + jax.random.uniform(keys[ki], (cout,), jnp.float32); ki += 1
            w, b = _bn_fold(w, b, gamma, beta, mean, var)
        else:       # fc3: no BN; fold identity; pad to 128 lanes
            ki += 4
            b = b + jnp.array([1.0, 0.0, 0.0, 1.0], jnp.float32)
            w = jnp.pad(w, ((0, 0), (0, 128 - cout)))
            b = jnp.pad(b, ((0, 128 - cout),))
        w_dtype = jnp.float32 if li == 0 else jnp.bfloat16
        params.append(w.astype(w_dtype))
        params.append(b.reshape(1, -1).astype(jnp.float32))
    return tuple(params)


def stn2d_reference(x_ncl, params):
    """Pure-JAX reference matching the kernel's numerics (bf16 MXU inputs,
    f32 accumulation, bf16 pre-max conv3 scores, hoisted bias/ReLU)."""
    (w1, b1, w2, b2, w3, b3, wf1, bf1, wf2, bf2, wf3, bf3) = params

    def mm(a, w):
        return jax.lax.dot_general(
            a.astype(jnp.bfloat16), w,
            dimension_numbers=(((a.ndim - 1,), (0,)), ((), ())),
            preferred_element_type=jnp.float32)

    x = jnp.transpose(x_ncl, (0, 2, 1)).astype(jnp.float32)       # (B, N, 2)
    h = x[..., 0:1] * w1[0] + x[..., 1:2] * w1[1] + b1            # (B, N, 64)
    h = jax.nn.relu(h)
    h = jax.nn.relu(mm(h, w2) + b2)
    z = mm(h, w3).astype(jnp.bfloat16)                            # raw conv3 scores
    g = jnp.max(z, axis=1).astype(jnp.float32)                    # max-pool over points
    g = jax.nn.relu(g + b3)                                       # hoisted bias + ReLU
    f = jax.nn.relu(mm(g, wf1) + bf1)
    f = jax.nn.relu(mm(f, wf2) + bf2)
    out = mm(f, wf3) + bf3                                        # (B, 128), cols 4.. zero
    return out[:, :4].reshape(-1, 2, 2)


if __name__ == "__main__":
    key = jax.random.PRNGKey(0)
    k_x, k_p, k_x2 = jax.random.split(key, 3)
    params = make_params(k_p)

    # Main check: small shape, single point tile (PyTorch NCL layout input).
    B, N = 2, 16
    x = jax.random.normal(k_x, (B, 2, N), jnp.float32)
    out = jax.block_until_ready(stn2d_forward(x, params))
    ref = stn2d_reference(x, params)
    assert out.shape == (B, 2, 2)
    np.testing.assert_allclose(np.asarray(out), np.asarray(ref),
                               rtol=1e-2, atol=1e-2)

    # Secondary check: ragged N + multi point-tile running max (tiny tile so
    # the gated mask and the cross-tile accumulator are exercised).
    B2, N2 = 2, 20
    x2 = jax.random.normal(k_x2, (B2, 2, N2), jnp.float32)
    out2 = jax.block_until_ready(stn2d_forward(x2, params, point_tile=8))
    ref2 = stn2d_reference(x2, params)
    np.testing.assert_allclose(np.asarray(out2), np.asarray(ref2),
                               rtol=1e-2, atol=1e-2)

    print("KERNEL_OK")
</pallas_src>

<mosaic_0001>
module attributes {stable_mosaic.version = 11 : i64} {
  func.func @_stn2d_fused_kernel(%arg0: i32, %arg1: i32, %arg2: memref<2x16x2xf32, #tpu.memory_space<vmem>>, %arg3: memref<2x64xf32, #tpu.memory_space<vmem>>, %arg4: memref<1x64xf32, #tpu.memory_space<vmem>>, %arg5: memref<64x128xbf16, #tpu.memory_space<vmem>>, %arg6: memref<1x128xf32, #tpu.memory_space<vmem>>, %arg7: memref<128x1024xbf16, #tpu.memory_space<vmem>>, %arg8: memref<1x1024xf32, #tpu.memory_space<vmem>>, %arg9: memref<1024x512xbf16, #tpu.memory_space<vmem>>, %arg10: memref<1x512xf32, #tpu.memory_space<vmem>>, %arg11: memref<512x256xbf16, #tpu.memory_space<vmem>>, %arg12: memref<1x256xf32, #tpu.memory_space<vmem>>, %arg13: memref<256x128xbf16, #tpu.memory_space<vmem>>, %arg14: memref<1x128xf32, #tpu.memory_space<vmem>>, %arg15: memref<2x128xf32, #tpu.memory_space<vmem>>, %arg16: memref<2x1024xbf16, #tpu.memory_space<vmem>>) attributes {dimension_semantics = [#tpu.dimension_semantics<parallel>, #tpu.dimension_semantics<arbitrary>], iteration_bounds = array<i64: 1, 1>, scalar_prefetch = 0 : i64, scratch_operands = 1 : i64, tpu.core_type = #tpu.core_type<tc>, window_params = [{transform_indices = @transform_0, window_bounds = array<i64: 2, 16, 2>}, {pipeline_mode = #tpu.pipeline_mode<synchronous>, transform_indices = @transform_1, window_bounds = array<i64: 2, 64>}, {pipeline_mode = #tpu.pipeline_mode<synchronous>, transform_indices = @transform_2, window_bounds = array<i64: 1, 64>}, {pipeline_mode = #tpu.pipeline_mode<synchronous>, transform_indices = @transform_3, window_bounds = array<i64: 64, 128>}, {pipeline_mode = #tpu.pipeline_mode<synchronous>, transform_indices = @transform_4, window_bounds = array<i64: 1, 128>}, {pipeline_mode = #tpu.pipeline_mode<synchronous>, transform_indices = @transform_5, window_bounds = array<i64: 128, 1024>}, {pipeline_mode = #tpu.pipeline_mode<synchronous>, transform_indices = @transform_6, window_bounds = array<i64: 1, 1024>}, {pipeline_mode = #tpu.pipeline_mode<synchronous>, transform_indices = @transform_7, window_bounds = array<i64: 1024, 512>}, {pipeline_mode = #tpu.pipeline_mode<synchronous>, transform_indices = @transform_8, window_bounds = array<i64: 1, 512>}, {pipeline_mode = #tpu.pipeline_mode<synchronous>, transform_indices = @transform_9, window_bounds = array<i64: 512, 256>}, {pipeline_mode = #tpu.pipeline_mode<synchronous>, transform_indices = @transform_10, window_bounds = array<i64: 1, 256>}, {pipeline_mode = #tpu.pipeline_mode<synchronous>, transform_indices = @transform_11, window_bounds = array<i64: 256, 128>}, {pipeline_mode = #tpu.pipeline_mode<synchronous>, transform_indices = @transform_12, window_bounds = array<i64: 1, 128>}, {transform_indices = @transform_13, window_bounds = array<i64: 2, 128>}]} {
    %c0 = arith.constant 0 : index
    %c0_0 = arith.constant 0 : index
    %c0_1 = arith.constant 0 : index
    %0 = vector.load %arg2[%c0, %c0_0, %c0_1] : memref<2x16x2xf32, #tpu.memory_space<vmem>>, vector<2x16x2xf32>
    %1 = vector.shape_cast %0 : vector<2x16x2xf32> to vector<32x2xf32>
    %c0_2 = arith.constant 0 : index
    %c0_3 = arith.constant 0 : index
    %2 = vector.load %arg3[%c0_2, %c0_3] : memref<2x64xf32, #tpu.memory_space<vmem>>, vector<2x64xf32>
    %3 = vector.extract_strided_slice %1 {offsets = [0, 0], sizes = [32, 1], strides = [1, 1]} : vector<32x2xf32> to vector<32x1xf32>
    %4 = vector.extract_strided_slice %2 {offsets = [0, 0], sizes = [1, 64], strides = [1, 1]} : vector<2x64xf32> to vector<1x64xf32>
    %5 = vector.broadcast %3 : vector<32x1xf32> to vector<32x64xf32>
    %6 = vector.broadcast %4 : vector<1x64xf32> to vector<32x64xf32>
    %7 = arith.mulf %5, %6 : vector<32x64xf32>
    %8 = vector.extract_strided_slice %1 {offsets = [0, 1], sizes = [32, 1], strides = [1, 1]} : vector<32x2xf32> to vector<32x1xf32>
    %9 = vector.extract_strided_slice %2 {offsets = [1, 0], sizes = [1, 64], strides = [1, 1]} : vector<2x64xf32> to vector<1x64xf32>
    %10 = vector.broadcast %8 : vector<32x1xf32> to vector<32x64xf32>
    %11 = vector.broadcast %9 : vector<1x64xf32> to vector<32x64xf32>
    %12 = arith.mulf %10, %11 : vector<32x64xf32>
    %13 = arith.addf %7, %12 : vector<32x64xf32>
    %c0_4 = arith.constant 0 : index
    %c0_5 = arith.constant 0 : index
    %14 = vector.load %arg4[%c0_4, %c0_5] : memref<1x64xf32, #tpu.memory_space<vmem>>, vector<1x64xf32>
    %15 = vector.broadcast %14 : vector<1x64xf32> to vector<32x64xf32>
    %16 = arith.addf %13, %15 : vector<32x64xf32>
    %cst = arith.constant 0.000000e+00 : f32
    %17 = vector.broadcast %cst : f32 to vector<32x64xf32>
    %18 = arith.maximumf %16, %17 : vector<32x64xf32>
    %19 = arith.truncf %18 : vector<32x64xf32> to vector<32x64xbf16>
    %c0_6 = arith.constant 0 : index
    %c0_7 = arith.constant 0 : index
    %20 = vector.load %arg5[%c0_6, %c0_7] : memref<64x128xbf16, #tpu.memory_space<vmem>>, vector<64x128xbf16>
    %cst_8 = arith.constant dense<0.000000e+00> : vector<32x128xf32>
    %21 = tpu.matmul %19, %20, %cst_8 {dimension_numbers = #tpu.dot_dimension_numbers<[1], [0], [0], [1], [0, 0, 1, 1], [], []>} : vector<32x64xbf16>, vector<64x128xbf16>, vector<32x128xf32> -> vector<32x128xf32>
    %c0_9 = arith.constant 0 : index
    %c0_10 = arith.constant 0 : index
    %22 = vector.load %arg6[%c0_9, %c0_10] : memref<1x128xf32, #tpu.memory_space<vmem>>, vector<1x128xf32>
    %23 = vector.broadcast %22 : vector<1x128xf32> to vector<32x128xf32>
    %24 = arith.addf %21, %23 : vector<32x128xf32>
    %cst_11 = arith.constant 0.000000e+00 : f32
    %25 = vector.broadcast %cst_11 : f32 to vector<32x128xf32>
    %26 = arith.maximumf %24, %25 : vector<32x128xf32>
    %27 = arith.truncf %26 : vector<32x128xf32> to vector<32x128xbf16>
    %c0_12 = arith.constant 0 : index
    %c0_13 = arith.constant 0 : index
    %28 = vector.load %arg7[%c0_12, %c0_13] : memref<128x1024xbf16, #tpu.memory_space<vmem>>, vector<128x1024xbf16>
    %cst_14 = arith.constant dense<0.000000e+00> : vector<32x1024xf32>
    %29 = tpu.matmul %27, %28, %cst_14 {dimension_numbers = #tpu.dot_dimension_numbers<[1], [0], [0], [1], [0, 0, 1, 1], [], []>} : vector<32x128xbf16>, vector<128x1024xbf16>, vector<32x1024xf32> -> vector<32x1024xf32>
    %30 = arith.truncf %29 : vector<32x1024xf32> to vector<32x1024xbf16>
    %31 = vector.shape_cast %30 : vector<32x1024xbf16> to vector<2x16x1024xbf16>
    %c0_i32 = arith.constant 0 : i32
    %32 = arith.cmpi eq, %arg1, %c0_i32 : i32
    %33 = arith.extui %32 : i1 to i32
    %c0_i32_15 = arith.constant 0 : i32
    %34 = arith.cmpi ne, %33, %c0_i32_15 : i32
    scf.if %34 {
      %cst_23 = arith.constant 0xFF80 : bf16
      %42 = vector.broadcast %cst_23 : bf16 to vector<2x1024xbf16>
      %c0_24 = arith.constant 0 : index
      %c0_25 = arith.constant 0 : index
      %43 = vector.load %arg16[%c0_24, %c0_25] : memref<2x1024xbf16, #tpu.memory_space<vmem>>, vector<2x1024xbf16>
      tpu.vector_store %arg16[%c0_24, %c0_25], %42 {strides = array<i32>} : memref<2x1024xbf16, #tpu.memory_space<vmem>>, vector<2x1024xbf16>,
    } else {
    }
    %c0_16 = arith.constant 0 : index
    %c0_17 = arith.constant 0 : index
    %35 = vector.load %arg16[%c0_16, %c0_17] : memref<2x1024xbf16, #tpu.memory_space<vmem>>, vector<2x1024xbf16>
    %cst_18 = arith.constant dense<0xFF80> : vector<2x1024xbf16>
    %36 = vector.multi_reduction <maximumf>, %31, %cst_18 [1] : vector<2x16x1024xbf16> to vector<2x1024xbf16>
    %37 = arith.maximumf %35, %36 : vector<2x1024xbf16>
    %c0_19 = arith.constant 0 : index
    %c0_20 = arith.constant 0 : index
    %38 = vector.load %arg16[%c0_19, %c0_20] : memref<2x1024xbf16, #tpu.memory_space<vmem>>, vector<2x1024xbf16>
    tpu.vector_store %arg16[%c0_19, %c0_20], %37 {strides = array<i32>} : memref<2x1024xbf16, #tpu.memory_space<vmem>>, vector<2x1024xbf16>,
    %c0_i32_21 = arith.constant 0 : i32
    %39 = arith.cmpi eq, %arg1, %c0_i32_21 : i32
    %40 = arith.extui %39 : i1 to i32
    %c0_i32_22 = arith.constant 0 : i32
    %41 = arith.cmpi ne, %40, %c0_i32_22 : i32
    scf.if %41 {
      %c0_23 = arith.constant 0 : index
      %c0_24 = arith.constant 0 : index
      %42 = vector.load %arg16[%c0_23, %c0_24] : memref<2x1024xbf16, #tpu.memory_space<vmem>>, vector<2x1024xbf16>
      %43 = arith.extf %42 : vector<2x1024xbf16> to vector<2x1024xf32>
      %c0_25 = arith.constant 0 : index
      %c0_26 = arith.constant 0 : index
      %44 = vector.load %arg8[%c0_25, %c0_26] : memref<1x1024xf32, #tpu.memory_space<vmem>>, vector<1x1024xf32>
      %45 = vector.broadcast %44 : vector<1x1024xf32> to vector<2x1024xf32>
      %46 = arith.addf %43, %45 : vector<2x1024xf32>
      %cst_27 = arith.constant 0.000000e+00 : f32
      %47 = vector.broadcast %cst_27 : f32 to vector<2x1024xf32>
      %48 = arith.maximumf %46, %47 : vector<2x1024xf32>
      %49 = arith.truncf %48 : vector<2x1024xf32> to vector<2x1024xbf16>
      %c0_28 = arith.constant 0 : index
      %c0_29 = arith.constant 0 : index
      %50 = vector.load %arg9[%c0_28, %c0_29] : memref<1024x512xbf16, #tpu.memory_space<vmem>>, vector<1024x512xbf16>
      %cst_30 = arith.constant dense<0.000000e+00> : vector<2x512xf32>
      %51 = tpu.matmul %49, %50, %cst_30 {dimension_numbers = #tpu.dot_dimension_numbers<[1], [0], [0], [1], [0, 0, 1, 1], [], []>} : vector<2x1024xbf16>, vector<1024x512xbf16>, vector<2x512xf32> -> vector<2x512xf32>
      %c0_31 = arith.constant 0 : index
      %c0_32 = arith.constant 0 : index
      %52 = vector.load %arg10[%c0_31, %c0_32] : memref<1x512xf32, #tpu.memory_space<vmem>>, vector<1x512xf32>
      %53 = vector.broadcast %52 : vector<1x512xf32> to vector<2x512xf32>
      %54 = arith.addf %51, %53 : vector<2x512xf32>
      %cst_33 = arith.constant 0.000000e+00 : f32
      %55 = vector.broadcast %cst_33 : f32 to vector<2x512xf32>
      %56 = arith.maximumf %54, %55 : vector<2x512xf32>
      %57 = arith.truncf %56 : vector<2x512xf32> to vector<2x512xbf16>
      %c0_34 = arith.constant 0 : index
      %c0_35 = arith.constant 0 : index
      %58 = vector.load %arg11[%c0_34, %c0_35] : memref<512x256xbf16, #tpu.memory_space<vmem>>, vector<512x256xbf16>
      %cst_36 = arith.constant dense<0.000000e+00> : vector<2x256xf32>
      %59 = tpu.matmul %57, %58, %cst_36 {dimension_numbers = #tpu.dot_dimension_numbers<[1], [0], [0], [1], [0, 0, 1, 1], [], []>} : vector<2x512xbf16>, vector<512x256xbf16>, vector<2x256xf32> -> vector<2x256xf32>
      %c0_37 = arith.constant 0 : index
      %c0_38 = arith.constant 0 : index
      %60 = vector.load %arg12[%c0_37, %c0_38] : memref<1x256xf32, #tpu.memory_space<vmem>>, vector<1x256xf32>
      %61 = vector.broadcast %60 : vector<1x256xf32> to vector<2x256xf32>
      %62 = arith.addf %59, %61 : vector<2x256xf32>
      %cst_39 = arith.constant 0.000000e+00 : f32
      %63 = vector.broadcast %cst_39 : f32 to vector<2x256xf32>
      %64 = arith.maximumf %62, %63 : vector<2x256xf32>
      %65 = arith.truncf %64 : vector<2x256xf32> to vector<2x256xbf16>
      %c0_40 = arith.constant 0 : index
      %c0_41 = arith.constant 0 : index
      %66 = vector.load %arg13[%c0_40, %c0_41] : memref<256x128xbf16, #tpu.memory_space<vmem>>, vector<256x128xbf16>
      %cst_42 = arith.constant dense<0.000000e+00> : vector<2x128xf32>
      %67 = tpu.matmul %65, %66, %cst_42 {dimension_numbers = #tpu.dot_dimension_numbers<[1], [0], [0], [1], [0, 0, 1, 1], [], []>} : vector<2x256xbf16>, vector<256x128xbf16>, vector<2x128xf32> -> vector<2x128xf32>
      %c0_43 = arith.constant 0 : index
      %c0_44 = arith.constant 0 : index
      %68 = vector.load %arg14[%c0_43, %c0_44] : memref<1x128xf32, #tpu.memory_space<vmem>>, vector<1x128xf32>
      %69 = vector.broadcast %68 : vector<1x128xf32> to vector<2x128xf32>
      %70 = arith.addf %67, %69 : vector<2x128xf32>
      %c0_45 = arith.constant 0 : index
      %c0_46 = arith.constant 0 : index
      %71 = vector.load %arg15[%c0_45, %c0_46] : memref<2x128xf32, #tpu.memory_space<vmem>>, vector<2x128xf32>
      tpu.vector_store %arg15[%c0_45, %c0_46], %70 {strides = array<i32>} : memref<2x128xf32, #tpu.memory_space<vmem>>, vector<2x128xf32>,
    } else {
    }
    return
  }
  func.func @transform_0(%arg0: i32, %arg1: i32) -> (i32, i32, i32) {
    %c0_i32 = arith.constant 0 : i32
    %c0_i32_0 = arith.constant 0 : i32
    return %arg0, %arg1, %c0_i32 : i32, i32, i32
  }
  func.func @transform_1(%arg0: i32, %arg1: i32) -> (i32, i32) {
    %c0_i32 = arith.constant 0 : i32
    %c0_i32_0 = arith.constant 0 : i32
    %c0_i32_1 = arith.constant 0 : i32
    return %c0_i32, %c0_i32_0 : i32, i32
  }
  func.func @transform_2(%arg0: i32, %arg1: i32) -> (i32, i32) {
    %c0_i32 = arith.constant 0 : i32
    %c0_i32_0 = arith.constant 0 : i32
    %c0_i32_1 = arith.constant 0 : i32
    return %c0_i32, %c0_i32_0 : i32, i32
  }
  func.func @transform_3(%arg0: i32, %arg1: i32) -> (i32, i32) {
    %c0_i32 = arith.constant 0 : i32
    %c0_i32_0 = arith.constant 0 : i32
    %c0_i32_1 = arith.constant 0 : i32
    return %c0_i32, %c0_i32_0 : i32, i32
  }
  func.func @transform_4(%arg0: i32, %arg1: i32) -> (i32, i32) {
    %c0_i32 = arith.constant 0 : i32
    %c0_i32_0 = arith.constant 0 : i32
    %c0_i32_1 = arith.constant 0 : i32
    return %c0_i32, %c0_i32_0 : i32, i32
  }
  func.func @transform_5(%arg0: i32, %arg1: i32) -> (i32, i32) {
    %c0_i32 = arith.constant 0 : i32
    %c0_i32_0 = arith.constant 0 : i32
    %c0_i32_1 = arith.constant 0 : i32
    return %c0_i32, %c0_i32_0 : i32, i32
  }
  func.func @transform_6(%arg0: i32, %arg1: i32) -> (i32, i32) {
    %c0_i32 = arith.constant 0 : i32
    %c0_i32_0 = arith.constant 0 : i32
    %c0_i32_1 = arith.constant 0 : i32
    return %c0_i32, %c0_i32_0 : i32, i32
  }
  func.func @transform_7(%arg0: i32, %arg1: i32) -> (i32, i32) {
    %c0_i32 = arith.constant 0 : i32
    %c0_i32_0 = arith.constant 0 : i32
    %c0_i32_1 = arith.constant 0 : i32
    return %c0_i32, %c0_i32_0 : i32, i32
  }
  func.func @transform_8(%arg0: i32, %arg1: i32) -> (i32, i32) {
    %c0_i32 = arith.constant 0 : i32
    %c0_i32_0 = arith.constant 0 : i32
    %c0_i32_1 = arith.constant 0 : i32
    return %c0_i32, %c0_i32_0 : i32, i32
  }
  func.func @transform_9(%arg0: i32, %arg1: i32) -> (i32, i32) {
    %c0_i32 = arith.constant 0 : i32
    %c0_i32_0 = arith.constant 0 : i32
    %c0_i32_1 = arith.constant 0 : i32
    return %c0_i32, %c0_i32_0 : i32, i32
  }
  func.func @transform_10(%arg0: i32, %arg1: i32) -> (i32, i32) {
    %c0_i32 = arith.constant 0 : i32
    %c0_i32_0 = arith.constant 0 : i32
    %c0_i32_1 = arith.constant 0 : i32
    return %c0_i32, %c0_i32_0 : i32, i32
  }
  func.func @transform_11(%arg0: i32, %arg1: i32) -> (i32, i32) {
    %c0_i32 = arith.constant 0 : i32
    %c0_i32_0 = arith.constant 0 : i32
    %c0_i32_1 = arith.constant 0 : i32
    return %c0_i32, %c0_i32_0 : i32, i32
  }
  func.func @transform_12(%arg0: i32, %arg1: i32) -> (i32, i32) {
    %c0_i32 = arith.constant 0 : i32
    %c0_i32_0 = arith.constant 0 : i32
    %c0_i32_1 = arith.constant 0 : i32
    return %c0_i32, %c0_i32_0 : i32, i32
  }
  func.func @transform_13(%arg0: i32, %arg1: i32) -> (i32, i32) {
    %c0_i32 = arith.constant 0 : i32
    %c0_i32_0 = arith.constant 0 : i32
    return %arg0, %c0_i32 : i32, i32
  }
}

</mosaic_0001>

<llo_original>
// kernel: stn2d_forward.1
$region0: #{stn2d_forward.1}
  #allocation0 [shape = 'u32[]', space=smem, size = 0x4, offset = 0x4, fixed_abs, tag = 'smem constant byte address 0x4 - core index']
  #allocation1 [shape = 'u32[144,128]{1,0:T(1,128)}', space=vmem, size = 0x12000, scoped, tag = 'internal scratch']
  #allocation2 [shape = 'bf16[2,1024]{1,0:T(2,128)(2,1)}', space=vmem, size = 0x1000, scoped, tag = 'scratch operand']
  %s0 = inlined_call_operand.vmem [shape: f32[2,16,2], index: 0, kind: input, shape index: {}]
  %s1 = inlined_call_operand.vmem [shape: f32[2,64], index: 1, kind: input, shape index: {}]
  %s2 = inlined_call_operand.vmem [shape: f32[1,64], index: 2, kind: input, shape index: {}]
  %s3 = inlined_call_operand.vmem [shape: bf16[64,128], index: 3, kind: input, shape index: {}]
  %s4 = inlined_call_operand.vmem [shape: f32[1,128], index: 4, kind: input, shape index: {}]
  %s5 = inlined_call_operand.hbm [shape: bf16[128,1024], index: 5, kind: input, shape index: {}]
  %s6 = inlined_call_operand.vmem [shape: f32[1,1024], index: 6, kind: input, shape index: {}]
  %s7 = inlined_call_operand.hbm [shape: bf16[1024,512], index: 7, kind: input, shape index: {}]
  %s8 = inlined_call_operand.vmem [shape: f32[1,512], index: 8, kind: input, shape index: {}]
  %s9 = inlined_call_operand.hbm [shape: bf16[512,256], index: 9, kind: input, shape index: {}]
  %s10 = inlined_call_operand.vmem [shape: f32[1,256], index: 10, kind: input, shape index: {}]
  %s11 = inlined_call_operand.hbm [shape: bf16[256,128], index: 11, kind: input, shape index: {}]
  %s12 = inlined_call_operand.vmem [shape: f32[1,128], index: 12, kind: input, shape index: {}]
  %s13 = inlined_call_operand.vmem [shape: f32[2,128], index: 13, kind: output, shape index: {}]
  %s14 = sld [smem:[#allocation0]]
  $region86: #{stn2d_forward.1} parent=0
    _
  %s16 = ssub.s32 1, %s14
  %s17 = scalar_select 0, %s16, %s14
  $region1: #{stn2d_forward.1} parent=0
    #allocation3 [shape = 'u8[262144]{0}', space=vmem, size = 0x40000, scoped, tag = 'input window, operand 5, single buffered']
    #allocation4 [shape = 's32[1]{0}', space=sflag, size = 0x4, scoped, tag = 'scoped memory for stn2d_forward.1']
    #allocation5 [shape = 'u8[1048576]{0}', space=vmem, size = 0x100000, scoped, tag = 'input window, operand 7, single buffered']
    #allocation6 [shape = 's32[1]{0}', space=sflag, size = 0x4, scoped, tag = 'scoped memory for stn2d_forward.1']
    #allocation7 [shape = 'u8[262144]{0}', space=vmem, size = 0x40000, scoped, tag = 'input window, operand 9, single buffered']
    #allocation8 [shape = 'u8[65536]{0}', space=vmem, size = 0x10000, scoped, tag = 'input window, operand 11, single buffered']
    #allocation9 [shape = 's32[1]{0}', space=sflag, size = 0x4, scoped, tag = 'scoped memory for stn2d_forward.1']
    %18 = vsyncpa [#allocation4], 0
    %19 = vsyncpa [#allocation6], 0
    %20 = vsyncpa [#allocation9], 0
    // Predicated region
    $region2: #{stn2d_forward.1} parent=1 // pred_check
      _
    $region3: #{stn2d_forward.1} parent=1 // pred_check_branch
      %22 = sbr.rel (0) target = $region5
    $region4: #{stn2d_forward.1} parent=1 // pred_region
      _
    $region5: #{stn2d_forward.1} parent=1 // pred_fallthru
      _
    // Predicated region
    $region6: #{stn2d_forward.1} parent=1 // pred_check
      _
    $region7: #{stn2d_forward.1} parent=1 // pred_check_branch
      %24 = sbr.rel (0) target = $region9
    $region8: #{stn2d_forward.1} parent=1 // pred_region
      _
    $region9: #{stn2d_forward.1} parent=1 // pred_fallthru
      _
    // Predicated region
    $region10: #{stn2d_forward.1} parent=1 // pred_check
      _
    $region11: #{stn2d_forward.1} parent=1 // pred_check_branch
      %26 = sbr.rel (0) target = $region13
    $region12: #{stn2d_forward.1} parent=1 // pred_region
      _
    $region13: #{stn2d_forward.1} parent=1 // pred_fallthru
      _
    // Predicated region
    $region14: #{stn2d_forward.1} parent=1 // pred_check
      _
    $region15: #{stn2d_forward.1} parent=1 // pred_check_branch
      %28 = sbr.rel (0) target = $region17
    $region16: #{stn2d_forward.1} parent=1 // pred_region
      _
    $region17: #{stn2d_forward.1} parent=1 // pred_fallthru
      _
    // Predicated region
    $region18: #{stn2d_forward.1} parent=1 // pred_check
      _
    $region19: #{stn2d_forward.1} parent=1 // pred_check_branch
      %30 = sbr.rel (0) target = $region21
    $region20: #{stn2d_forward.1} parent=1 // pred_region
      _
    $region21: #{stn2d_forward.1} parent=1 // pred_fallthru
      _
    // Predicated region
    $region22: #{stn2d_forward.1} parent=1 // pred_check
      _
    $region23: #{stn2d_forward.1} parent=1 // pred_check_branch
      %32 = sbr.rel (0) target = $region25
    $region24: #{stn2d_forward.1} parent=1 // pred_region
      %s34 = ssub.s32 8192, 8192
      %35 = vsyncadd [#allocation4], %s34
      %s36 = sshll.u32 [#allocation3], 4
      %s37 = int_to_ptr.vmem [resolvable:$true] %s36
      %42 = dma.hbm_to_vmem [thread:$0]  %s5, 8192, %s37, [#allocation4], 512, 512, 32
    $region25: #{stn2d_forward.1} parent=1 // pred_fallthru
      _
    // Predicated region
    $region26: #{stn2d_forward.1} parent=1 // pred_check
      _
    $region27: #{stn2d_forward.1} parent=1 // pred_check_branch
      %44 = sbr.rel (0) target = $region29
    $region28: #{stn2d_forward.1} parent=1 // pred_region
      _
    $region29: #{stn2d_forward.1} parent=1 // pred_fallthru
      _
    // Predicated region
    $region30: #{stn2d_forward.1} parent=1 // pred_check
      _
    $region31: #{stn2d_forward.1} parent=1 // pred_check_branch
      %46 = sbr.rel (0) target = $region33
    $region32: #{stn2d_forward.1} parent=1 // pred_region
      %s48 = ssub.s32 32768, 32768
      %49 = vsyncadd [#allocation6], %s48
      %s50 = sshll.u32 [#allocation5], 4
      %s51 = int_to_ptr.vmem [resolvable:$true] %s50
      %56 = dma.hbm_to_vmem [thread:$0]  %s7, 32768, %s51, [#allocation6], 256, 256, 16
    $region33: #{stn2d_forward.1} parent=1 // pred_fallthru
      _
    // Predicated region
    $region34: #{stn2d_forward.1} parent=1 // pred_check
      _
    $region35: #{stn2d_forward.1} parent=1 // pred_check_branch
      %58 = sbr.rel (0) target = $region37
    $region36: #{stn2d_forward.1} parent=1 // pred_region
      _
    $region37: #{stn2d_forward.1} parent=1 // pred_fallthru
      _
    // Predicated region
    $region38: #{stn2d_forward.1} parent=1 // pred_check
      _
    $region39: #{stn2d_forward.1} parent=1 // pred_check_branch
      %60 = sbr.rel (0) target = $region41
    $region40: #{stn2d_forward.1} parent=1 // pred_region
      %s62 = ssub.s32 8192, 8192
      %63 = vsyncadd [#allocation6], %s62
      %s64 = sshll.u32 [#allocation7], 4
      %s65 = int_to_ptr.vmem [resolvable:$true] %s64
      %70 = dma.hbm_to_vmem [thread:$0]  %s9, 8192, %s65, [#allocation6], 128, 128, 8
    $region41: #{stn2d_forward.1} parent=1 // pred_fallthru
      _
    // Predicated region
    $region42: #{stn2d_forward.1} parent=1 // pred_check
      _
    $region43: #{stn2d_forward.1} parent=1 // pred_check_branch
      %72 = sbr.rel (0) target = $region45
    $region44: #{stn2d_forward.1} parent=1 // pred_region
      _
    $region45: #{stn2d_forward.1} parent=1 // pred_fallthru
      _
    // Predicated region
    $region46: #{stn2d_forward.1} parent=1 // pred_check
      _
    $region47: #{stn2d_forward.1} parent=1 // pred_check_branch
      %74 = sbr.rel (0) target = $region49
    $region48: #{stn2d_forward.1} parent=1 // pred_region
      %s76 = ssub.s32 2048, 2048
      %77 = vsyncadd [#allocation9], %s76
      %s78 = sshll.u32 [#allocation8], 4
      %s79 = int_to_ptr.vmem [resolvable:$true] %s78
      %84 = dma.hbm_to_vmem [thread:$0]  %s11, 2048, %s79, [#allocation9], 64, 64, 4
    $region49: #{stn2d_forward.1} parent=1 // pred_fallthru
      _
    // Predicated region
    $region50: #{stn2d_forward.1} parent=1 // pred_check
      _
    $region51: #{stn2d_forward.1} parent=1 // pred_check_branch
      %86 = sbr.rel (0) target = $region53
    $region52: #{stn2d_forward.1} parent=1 // pred_region
      _
    $region53: #{stn2d_forward.1} parent=1 // pred_fallthru
      _
    // Predicated region
    $region54: #{stn2d_forward.1} parent=1 // pred_check
      _
    $region55: #{stn2d_forward.1} parent=1 // pred_check_branch
      %88 = sbr.rel (0) target = $region57
    $region56: #{stn2d_forward.1} parent=1 // pred_region
      %89 = dma.done [#allocation4], 8192
    $region57: #{stn2d_forward.1} parent=1 // pred_fallthru
      _
    // Predicated region
    $region58: #{stn2d_forward.1} parent=1 // pred_check
      _
    $region59: #{stn2d_forward.1} parent=1 // pred_check_branch
      %91 = sbr.rel (0) target = $region61
    $region60: #{stn2d_forward.1} parent=1 // pred_region
      %92 = dma.done [#allocation6], 32768
    $region61: #{stn2d_forward.1} parent=1 // pred_fallthru
      _
    // Predicated region
    $region62: #{stn2d_forward.1} parent=1 // pred_check
      _
    $region63: #{stn2d_forward.1} parent=1 // pred_check_branch
      %94 = sbr.rel (0) target = $region65
    $region64: #{stn2d_forward.1} parent=1 // pred_region
      %95 = dma.done [#allocation6], 8192
    $region65: #{stn2d_forward.1} parent=1 // pred_fallthru
      _
    // Predicated region
    $region66: #{stn2d_forward.1} parent=1 // pred_check
      _
    $region67: #{stn2d_forward.1} parent=1 // pred_check_branch
      %97 = sbr.rel (0) target = $region69
    $region68: #{stn2d_forward.1} parent=1 // pred_region
      %98 = dma.done [#allocation9], 2048
    $region69: #{stn2d_forward.1} parent=1 // pred_fallthru
      _
    %v101 = vld [vmem:[%s0] sm:$0xff]
    %v102 = vld [vmem:[%s0 + $0x8] sm:$0xff]
    %v103 = vld [vmem:[%s0 + $0x10] sm:$0xff]
    %v104 = vld [vmem:[%s0 + $0x18] sm:$0xff]
    %v105 = vld [vmem:[%s1] sm:$0x3]
    %107 = vset.pattern.permute.xlu0 0
    %108 = vperm.xlu0 %107, %v101
    %v109 = vpop.permute.xlu0 %108
    %112 = vset.pattern.permute.xlu0 0
    %113 = vperm.xlu0 %112, %v102
    %v114 = vpop.permute.xlu0 %113
    %117 = vset.pattern.permute.xlu0 0
    %118 = vperm.xlu0 %117, %v103
    %v119 = vpop.permute.xlu0 %118
    %122 = vset.pattern.permute.xlu0 0
    %123 = vperm.xlu0 %122, %v104
    %v124 = vpop.permute.xlu0 %123
    %v126 = vlaneseq
    %v127 = vshrl.u32 %v126, 7
    %v128 = vsub.s32 0, %v127
    %v129 = vrot.slane %v105, %v128
    %v130 = vmul.f32 %v109, %v129
    %v131 = vmul.f32 %v114, %v129
    %v132 = vmul.f32 %v119, %v129
    %v133 = vmul.f32 %v124, %v129
    %134 = vset.pattern.permute.xlu0 1
    %135 = vperm.xlu0 %134, %v101
    %v136 = vpop.permute.xlu0 %135
    %138 = vset.pattern.permute.xlu0 1
    %139 = vperm.xlu0 %138, %v102
    %v140 = vpop.permute.xlu0 %139
    %142 = vset.pattern.permute.xlu0 1
    %143 = vperm.xlu0 %142, %v103
    %v144 = vpop.permute.xlu0 %143
    %146 = vset.pattern.permute.xlu0 1
    %147 = vperm.xlu0 %146, %v104
    %v148 = vpop.permute.xlu0 %147
    %v150 = vlaneseq
    %v151 = vshrl.u32 %v150, 7
    %v152 = vsub.s32 1, %v151
    %v153 = vrot.slane %v105, %v152
    %v154 = vmul.f32 %v136, %v153
    %v155 = vmul.f32 %v140, %v153
    %v156 = vmul.f32 %v144, %v153
    %v157 = vmul.f32 %v148, %v153
    %v158 = vadd.f32 %v130, %v154
    %v159 = vadd.f32 %v131, %v155
    %v160 = vadd.f32 %v132, %v156
    %v161 = vadd.f32 %v133, %v157
    %v162 = vld [vmem:[%s2] sm:$0x1]
    %v164 = vlaneseq
    %v165 = vshrl.u32 %v164, 7
    %v166 = vsub.s32 0, %v165
    %v167 = vrot.slane %v162, %v166
    %v169 = vadd.f32 %v158, %v167
    %v170 = vadd.f32 %v159, %v167
    %v171 = vadd.f32 %v160, %v167
    %v172 = vadd.f32 %v161, %v167
    %v173 = vmax.f32 %v169, 0.0
    %v174 = vmax.f32 %v170, 0.0
    %v175 = vmax.f32 %v171, 0.0
    %v176 = vmax.f32 %v172, 0.0
    %v177 = vpack.c.bf16 %v174, %v173
    %v178 = vpack.c.bf16 %v176, %v175
    %v179 = vld [vmem:[%s3] sm:$0xf]
    %v180 = vld [vmem:[%s3 + $0x4] sm:$0xf]
    %v181 = vld [vmem:[%s3 + $0x8] sm:$0xf]
    %v182 = vld [vmem:[%s3 + $0xc] sm:$0xf]
    %v183 = vld [vmem:[%s3 + $0x10] sm:$0xf]
    %v184 = vld [vmem:[%s3 + $0x14] sm:$0xf]
    %v185 = vld [vmem:[%s3 + $0x18] sm:$0xf]
    %v186 = vld [vmem:[%s3 + $0x1c] sm:$0xf]
    %v187 = vld [vmem:[%s4] sm:$0x1]
    %v189 = vlaneseq
    %v190 = vshrl.u32 %v189, 7
    %v191 = vsub.s32 0, %v190
    %v192 = vrot.slane %v187, %v191
    %v202 = vunpack.c.l.b16 %v179
    %v203 = vunpack.c.l.b16 %v180
    %v204 = vunpack.c.l.b16 %v181
    %v205 = vunpack.c.l.b16 %v182
    %v206 = vunpack.c.l.b16 %v183
    %v207 = vunpack.c.l.b16 %v184
    %v208 = vunpack.c.l.b16 %v185
    %v209 = vunpack.c.l.b16 %v186
    %v210 = vpack.c.b16 %v203, %v202
    %v211 = vpack.c.b16 %v205, %v204
    %v212 = vpack.c.b16 %v207, %v206
    %v213 = vpack.c.b16 %v209, %v208
    %vm218 = vcmask 523264
    %v220 = vsel %vm218, %v177, 0
    %v223 = vsel %vm218, %v178, 0
    %225 = vmatprep.subr.bf16.mxu0 0
    %226 = vmatpush1.bf16.msra.mxu0 %v210
    %227 = vmatprep.subr.bf16.mxu0 0
    %228 = vmatpush1.bf16.msra.mxu0 %v211
    %229 = vmatprep.subr.bf16.mxu0 0
    %230 = vmatpush1.bf16.msra.mxu0 %v212
    %231 = vmatprep.subr.bf16.mxu0 0
    %232 = vmatpush1.bf16.msra.mxu0 %v213
    %233 = vmatprep.subr.bf16.mxu0 0
    %234 = vmatpush1.bf16.msra.mxu0 0
    %235 = vmatprep.subr.bf16.mxu0 0
    %236 = vmatpush1.bf16.msra.mxu0 0
    %237 = vmatprep.subr.bf16.mxu0 0
    %238 = vmatpush1.bf16.msra.mxu0 0
    %239 = vmatprep.subr.bf16.mxu0 0
    %240 = vmatpush1.bf16.msra.mxu0 0
    %241 = vmatprep.subr.bf16.mxu0 0
    %242 = vmatpush1.bf16.msra.mxu0 0
    %243 = vmatprep.subr.bf16.mxu0 0
    %244 = vmatpush1.bf16.msra.mxu0 0
    %245 = vmatprep.subr.bf16.mxu0 0
    %246 = vmatpush1.bf16.msra.mxu0 0
    %247 = vmatprep.subr.bf16.mxu0 0
    %248 = vmatpush1.bf16.msra.mxu0 0
    %249 = vmatprep.subr.bf16.mxu0 0
    %250 = vmatpush1.bf16.msra.mxu0 0
    %251 = vmatprep.subr.bf16.mxu0 0
    %252 = vmatpush1.bf16.msra.mxu0 0
    %253 = vmatprep.subr.bf16.mxu0 0
    %254 = vmatpush1.bf16.msra.mxu0 0
    %255 = vmatprep.subr.bf16.mxu0 0
    %256 = vmatpush1.bf16.msra.mxu0 0
    %257 = vmatprep.mubr.bf16.mxu0 0
    %258 = vmatmul.mubr.bf16.gmra.mrb[0].mxu0 %v220
    %v259 = vpop.f32.mrb[0].mxu0
    %v260 = vadd.f32 %v192, %v259
    %v261 = vpop.f32.mrb[0].mxu0
    %v262 = vpop.f32.mrb[0].mxu0
    %v263 = vadd.f32 %v192, %v262
    %v264 = vpop.f32.mrb[0].mxu0
    %265 = vmatprep.mubr.bf16.mxu0 0
    %266 = vmatmul.mubr.bf16.gmra.mrb[0].mxu0 %v223
    %v267 = vpop.f32.mrb[0].mxu0
    %v268 = vadd.f32 %v192, %v267
    %v269 = vpop.f32.mrb[0].mxu0
    %v270 = vpop.f32.mrb[0].mxu0
    %v271 = vadd.f32 %v192, %v270
    %v272 = vpop.f32.mrb[0].mxu0
    %273 = vdwg.mxu0
    %v274 = vmax.f32 %v260, 0.0
    %v275 = vmax.f32 %v263, 0.0
    %v276 = vmax.f32 %v268, 0.0
    %v277 = vmax.f32 %v271, 0.0
    %v278 = vpack.c.bf16 %v275, %v274
    %v279 = vpack.c.bf16 %v277, %v276
    %v280 = vld [vmem:[#allocation3] sm:$0xff]
    %v281 = vld [vmem:[#allocation3 + $0x8] sm:$0xff]
    %v282 = vld [vmem:[#allocation3 + $0x10] sm:$0xff]
    %v283 = vld [vmem:[#allocation3 + $0x18] sm:$0xff]
    %v284 = vld [vmem:[#allocation3 + $0x20] sm:$0xff]
    %v285 = vld [vmem:[#allocation3 + $0x28] sm:$0xff]
    %v286 = vld [vmem:[#allocation3 + $0x30] sm:$0xff]
    %v287 = vld [vmem:[#allocation3 + $0x38] sm:$0xff]
    %v288 = vld [vmem:[#allocation3 + $0x40] sm:$0xff]
    %v289 = vld [vmem:[#allocation3 + $0x48] sm:$0xff]
    %v290 = vld [vmem:[#allocation3 + $0x50] sm:$0xff]
    %v291 = vld [vmem:[#allocation3 + $0x58] sm:$0xff]
    %v292 = vld [vmem:[#allocation3 + $0x60] sm:$0xff]
    %v293 = vld [vmem:[#allocation3 + $0x68] sm:$0xff]
    %v294 = vld [vmem:[#allocation3 + $0x70] sm:$0xff]
    %v295 = vld [vmem:[#allocation3 + $0x78] sm:$0xff]
    %v296 = vld [vmem:[#allocation3 + $0x80] sm:$0xff]
    %v297 = vld [vmem:[#allocation3 + $0x88] sm:$0xff]
    %v298 = vld [vmem:[#allocation3 + $0x90] sm:$0xff]
    %v299 = vld [vmem:[#allocation3 + $0x98] sm:$0xff]
    %v300 = vld [vmem:[#allocation3 + $0xa0] sm:$0xff]
    %v301 = vld [vmem:[#allocation3 + $0xa8] sm:$0xff]
    %v302 = vld [vmem:[#allocation3 + $0xb0] sm:$0xff]
    %v303 = vld [vmem:[#allocation3 + $0xb8] sm:$0xff]
    %v304 = vld [vmem:[#allocation3 + $0xc0] sm:$0xff]
    %v305 = vld [vmem:[#allocation3 + $0xc8] sm:$0xff]
    %v306 = vld [vmem:[#allocation3 + $0xd0] sm:$0xff]
    %v307 = vld [vmem:[#allocation3 + $0xd8] sm:$0xff]
    %v308 = vld [vmem:[#allocation3 + $0xe0] sm:$0xff]
    %v309 = vld [vmem:[#allocation3 + $0xe8] sm:$0xff]
    %v310 = vld [vmem:[#allocation3 + $0xf0] sm:$0xff]
    %v311 = vld [vmem:[#allocation3 + $0xf8] sm:$0xff]
    %v312 = vld [vmem:[#allocation3 + $0x100] sm:$0xff]
    %v313 = vld [vmem:[#allocation3 + $0x108] sm:$0xff]
    %v314 = vld [vmem:[#allocation3 + $0x110] sm:$0xff]
    %v315 = vld [vmem:[#allocation3 + $0x118] sm:$0xff]
    %v316 = vld [vmem:[#allocation3 + $0x120] sm:$0xff]
    %v317 = vld [vmem:[#allocation3 + $0x128] sm:$0xff]
    %v318 = vld [vmem:[#allocation3 + $0x130] sm:$0xff]
    %v319 = vld [vmem:[#allocation3 + $0x138] sm:$0xff]
    %v320 = vld [vmem:[#allocation3 + $0x140] sm:$0xff]
    %v321 = vld [vmem:[#allocation3 + $0x148] sm:$0xff]
    %v322 = vld [vmem:[#allocation3 + $0x150] sm:$0xff]
    %v323 = vld [vmem:[#allocation3 + $0x158] sm:$0xff]
    %v324 = vld [vmem:[#allocation3 + $0x160] sm:$0xff]
    %v325 = vld [vmem:[#allocation3 + $0x168] sm:$0xff]
    %v326 = vld [vmem:[#allocation3 + $0x170] sm:$0xff]
    %v327 = vld [vmem:[#allocation3 + $0x178] sm:$0xff]
    %v328 = vld [vmem:[#allocation3 + $0x180] sm:$0xff]
    %v329 = vld [vmem:[#allocation3 + $0x188] sm:$0xff]
    %v330 = vld [vmem:[#allocation3 + $0x190] sm:$0xff]
    %v331 = vld [vmem:[#allocation3 + $0x198] sm:$0xff]
    %v332 = vld [vmem:[#allocation3 + $0x1a0] sm:$0xff]
    %v333 = vld [vmem:[#allocation3 + $0x1a8] sm:$0xff]
    %v334 = vld [vmem:[#allocation3 + $0x1b0] sm:$0xff]
    %v335 = vld [vmem:[#allocation3 + $0x1b8] sm:$0xff]
    %v336 = vld [vmem:[#allocation3 + $0x1c0] sm:$0xff]
    %v337 = vld [vmem:[#allocation3 + $0x1c8] sm:$0xff]
    %v338 = vld [vmem:[#allocation3 + $0x1d0] sm:$0xff]
    %v339 = vld [vmem:[#allocation3 + $0x1d8] sm:$0xff]
    %v340 = vld [vmem:[#allocation3 + $0x1e0] sm:$0xff]
    %v341 = vld [vmem:[#allocation3 + $0x1e8] sm:$0xff]
    %v342 = vld [vmem:[#allocation3 + $0x1f0] sm:$0xff]
    %v343 = vld [vmem:[#allocation3 + $0x1f8] sm:$0xff]
    %v408 = vunpack.c.l.b16 %v280
    %v409 = vunpack.c.h.b16 %v280
    %v410 = vunpack.c.l.b16 %v281
    %v411 = vunpack.c.h.b16 %v281
    %v412 = vunpack.c.l.b16 %v282
    %v413 = vunpack.c.h.b16 %v282
    %v414 = vunpack.c.l.b16 %v283
    %v415 = vunpack.c.h.b16 %v283
    %v416 = vunpack.c.l.b16 %v284
    %v417 = vunpack.c.h.b16 %v284
    %v418 = vunpack.c.l.b16 %v285
    %v419 = vunpack.c.h.b16 %v285
    %v420 = vunpack.c.l.b16 %v286
    %v421 = vunpack.c.h.b16 %v286
    %v422 = vunpack.c.l.b16 %v287
    %v423 = vunpack.c.h.b16 %v287
    %v424 = vunpack.c.l.b16 %v288
    %v425 = vunpack.c.h.b16 %v288
    %v426 = vunpack.c.l.b16 %v289
    %v427 = vunpack.c.h.b16 %v289
    %v428 = vunpack.c.l.b16 %v290
    %v429 = vunpack.c.h.b16 %v290
    %v430 = vunpack.c.l.b16 %v291
    %v431 = vunpack.c.h.b16 %v291
    %v432 = vunpack.c.l.b16 %v292
    %v433 = vunpack.c.h.b16 %v292
    %v434 = vunpack.c.l.b16 %v293
    %v435 = vunpack.c.h.b16 %v293
    %v436 = vunpack.c.l.b16 %v294
    %v437 = vunpack.c.h.b16 %v294
    %v438 = vunpack.c.l.b16 %v295
    %v439 = vunpack.c.h.b16 %v295
    %v440 = vunpack.c.l.b16 %v296
    %v441 = vunpack.c.h.b16 %v296
    %v442 = vunpack.c.l.b16 %v297
    %v443 = vunpack.c.h.b16 %v297
    %v444 = vunpack.c.l.b16 %v298
    %v445 = vunpack.c.h.b16 %v298
    %v446 = vunpack.c.l.b16 %v299
    %v447 = vunpack.c.h.b16 %v299
    %v448 = vunpack.c.l.b16 %v300
    %v449 = vunpack.c.h.b16 %v300
    %v450 = vunpack.c.l.b16 %v301
    %v451 = vunpack.c.h.b16 %v301
    %v452 = vunpack.c.l.b16 %v302
    %v453 = vunpack.c.h.b16 %v302
    %v454 = vunpack.c.l.b16 %v303
    %v455 = vunpack.c.h.b16 %v303
    %v456 = vunpack.c.l.b16 %v304
    %v457 = vunpack.c.h.b16 %v304
    %v458 = vunpack.c.l.b16 %v305
    %v459 = vunpack.c.h.b16 %v305
    %v460 = vunpack.c.l.b16 %v306
    %v461 = vunpack.c.h.b16 %v306
    %v462 = vunpack.c.l.b16 %v307
    %v463 = vunpack.c.h.b16 %v307
    %v464 = vunpack.c.l.b16 %v308
    %v465 = vunpack.c.h.b16 %v308
    %v466 = vunpack.c.l.b16 %v309
    %v467 = vunpack.c.h.b16 %v309
    %v468 = vunpack.c.l.b16 %v310
    %v469 = vunpack.c.h.b16 %v310
    %v470 = vunpack.c.l.b16 %v311
    %v471 = vunpack.c.h.b16 %v311
    %v472 = vunpack.c.l.b16 %v312
    %v473 = vunpack.c.h.b16 %v312
    %v474 = vunpack.c.l.b16 %v313
    %v475 = vunpack.c.h.b16 %v313
    %v476 = vunpack.c.l.b16 %v314
    %v477 = vunpack.c.h.b16 %v314
    %v478 = vunpack.c.l.b16 %v315
    %v479 = vunpack.c.h.b16 %v315
    %v480 = vunpack.c.l.b16 %v316
    %v481 = vunpack.c.h.b16 %v316
    %v482 = vunpack.c.l.b16 %v317
    %v483 = vunpack.c.h.b16 %v317
    %v484 = vunpack.c.l.b16 %v318
    %v485 = vunpack.c.h.b16 %v318
    %v486 = vunpack.c.l.b16 %v319
    %v487 = vunpack.c.h.b16 %v319
    %v488 = vunpack.c.l.b16 %v320
    %v489 = vunpack.c.h.b16 %v320
    %v490 = vunpack.c.l.b16 %v321
    %v491 = vunpack.c.h.b16 %v321
    %v492 = vunpack.c.l.b16 %v322
    %v493 = vunpack.c.h.b16 %v322
    %v494 = vunpack.c.l.b16 %v323
    %v495 = vunpack.c.h.b16 %v323
    %v496 = vunpack.c.l.b16 %v324
    %v497 = vunpack.c.h.b16 %v324
    %v498 = vunpack.c.l.b16 %v325
    %v499 = vunpack.c.h.b16 %v325
    %v500 = vunpack.c.l.b16 %v326
    %v501 = vunpack.c.h.b16 %v326
    %v502 = vunpack.c.l.b16 %v327
    %v503 = vunpack.c.h.b16 %v327
    %v504 = vunpack.c.l.b16 %v328
    %v505 = vunpack.c.h.b16 %v328
    %v506 = vunpack.c.l.b16 %v329
    %v507 = vunpack.c.h.b16 %v329
    %v508 = vunpack.c.l.b16 %v330
    %v509 = vunpack.c.h.b16 %v330
    %v510 = vunpack.c.l.b16 %v331
    %v511 = vunpack.c.h.b16 %v331
    %v512 = vunpack.c.l.b16 %v332
    %v513 = vunpack.c.h.b16 %v332
    %v514 = vunpack.c.l.b16 %v333
    %v515 = vunpack.c.h.b16 %v333
    %v516 = vunpack.c.l.b16 %v334
    %v517 = vunpack.c.h.b16 %v334
    %v518 = vunpack.c.l.b16 %v335
    %v519 = vunpack.c.h.b16 %v335
    %v520 = vunpack.c.l.b16 %v336
    %v521 = vunpack.c.h.b16 %v336
    %v522 = vunpack.c.l.b16 %v337
    %v523 = vunpack.c.h.b16 %v337
    %v524 = vunpack.c.l.b16 %v338
    %v525 = vunpack.c.h.b16 %v338
    %v526 = vunpack.c.l.b16 %v339
    %v527 = vunpack.c.h.b16 %v339
    %v528 = vunpack.c.l.b16 %v340
    %v529 = vunpack.c.h.b16 %v340
    %v530 = vunpack.c.l.b16 %v341
    %v531 = vunpack.c.h.b16 %v341
    %v532 = vunpack.c.l.b16 %v342
    %v533 = vunpack.c.h.b16 %v342
    %v534 = vunpack.c.l.b16 %v343
    %v535 = vunpack.c.h.b16 %v343
    %v536 = vpack.c.b16 %v416, %v408
    %v537 = vpack.c.b16 %v417, %v409
    %v538 = vpack.c.b16 %v418, %v410
    %v539 = vpack.c.b16 %v419, %v411
    %v540 = vpack.c.b16 %v420, %v412
    %v541 = vpack.c.b16 %v421, %v413
    %v542 = vpack.c.b16 %v422, %v414
    %v543 = vpack.c.b16 %v423, %v415
    %v544 = vpack.c.b16 %v432, %v424
    %v545 = vpack.c.b16 %v433, %v425
    %v546 = vpack.c.b16 %v434, %v426
    %v547 = vpack.c.b16 %v435, %v427
    %v548 = vpack.c.b16 %v436, %v428
    %v549 = vpack.c.b16 %v437, %v429
    %v550 = vpack.c.b16 %v438, %v430
    %v551 = vpack.c.b16 %v439, %v431
    %v552 = vpack.c.b16 %v448, %v440
    %v553 = vpack.c.b16 %v449, %v441
    %v554 = vpack.c.b16 %v450, %v442
    %v555 = vpack.c.b16 %v451, %v443
    %v556 = vpack.c.b16 %v452, %v444
    %v557 = vpack.c.b16 %v453, %v445
    %v558 = vpack.c.b16 %v454, %v446
    %v559 = vpack.c.b16 %v455, %v447
    %v560 = vpack.c.b16 %v464, %v456
    %v561 = vpack.c.b16 %v465, %v457
    %v562 = vpack.c.b16 %v466, %v458
    %v563 = vpack.c.b16 %v467, %v459
    %v564 = vpack.c.b16 %v468, %v460
    %v565 = vpack.c.b16 %v469, %v461
    %v566 = vpack.c.b16 %v470, %v462
    %v567 = vpack.c.b16 %v471, %v463
    %v568 = vpack.c.b16 %v480, %v472
    %v569 = vpack.c.b16 %v481, %v473
    %v570 = vpack.c.b16 %v482, %v474
    %v571 = vpack.c.b16 %v483, %v475
    %v572 = vpack.c.b16 %v484, %v476
    %v573 = vpack.c.b16 %v485, %v477
    %v574 = vpack.c.b16 %v486, %v478
    %v575 = vpack.c.b16 %v487, %v479
    %v576 = vpack.c.b16 %v496, %v488
    %v577 = vpack.c.b16 %v497, %v489
    %v578 = vpack.c.b16 %v498, %v490
    %v579 = vpack.c.b16 %v499, %v491
    %v580 = vpack.c.b16 %v500, %v492
    %v581 = vpack.c.b16 %v501, %v493
    %v582 = vpack.c.b16 %v502, %v494
    %v583 = vpack.c.b16 %v503, %v495
    %v584 = vpack.c.b16 %v512, %v504
    %v585 = vpack.c.b16 %v513, %v505
    %v586 = vpack.c.b16 %v514, %v506
    %v587 = vpack.c.b16 %v515, %v507
    %v588 = vpack.c.b16 %v516, %v508
    %v589 = vpack.c.b16 %v517, %v509
    %v590 = vpack.c.b16 %v518, %v510
    %v591 = vpack.c.b16 %v519, %v511
    %v592 = vpack.c.b16 %v528, %v520
    %v593 = vpack.c.b16 %v529, %v521
    %v594 = vpack.c.b16 %v530, %v522
    %v595 = vpack.c.b16 %v531, %v523
    %v596 = vpack.c.b16 %v532, %v524
    %v597 = vpack.c.b16 %v533, %v525
    %v598 = vpack.c.b16 %v534, %v526
    %v599 = vpack.c.b16 %v535, %v527
    %664 = vmatprep.subr.bf16.mxu0 %v537
    %665 = vmatpush1.bf16.msra.mxu0 %v536
    %666 = vmatprep.subr.bf16.mxu0 %v545
    %667 = vmatpush1.bf16.msra.mxu0 %v544
    %668 = vmatprep.subr.bf16.mxu0 %v553
    %669 = vmatpush1.bf16.msra.mxu0 %v552
    %670 = vmatprep.subr.bf16.mxu0 %v561
    %671 = vmatpush1.bf16.msra.mxu0 %v560
    %672 = vmatprep.subr.bf16.mxu0 %v569
    %673 = vmatpush1.bf16.msra.mxu0 %v568
    %674 = vmatprep.subr.bf16.mxu0 %v577
    %675 = vmatpush1.bf16.msra.mxu0 %v576
    %676 = vmatprep.subr.bf16.mxu0 %v585
    %677 = vmatpush1.bf16.msra.mxu0 %v584
    %678 = vmatprep.subr.bf16.mxu0 %v593
    %679 = vmatpush1.bf16.msra.mxu0 %v592
    %680 = vmatprep.subr.bf16.mxu0 0
    %681 = vmatpush1.bf16.msra.mxu0 0
    %682 = vmatprep.subr.bf16.mxu0 0
    %683 = vmatpush1.bf16.msra.mxu0 0
    %684 = vmatprep.subr.bf16.mxu0 0
    %685 = vmatpush1.bf16.msra.mxu0 0
    %686 = vmatprep.subr.bf16.mxu0 0
    %687 = vmatpush1.bf16.msra.mxu0 0
    %688 = vmatprep.subr.bf16.mxu0 0
    %689 = vmatpush1.bf16.msra.mxu0 0
    %690 = vmatprep.subr.bf16.mxu0 0
    %691 = vmatpush1.bf16.msra.mxu0 0
    %692 = vmatprep.subr.bf16.mxu0 0
    %693 = vmatpush1.bf16.msra.mxu0 0
    %694 = vmatprep.subr.bf16.mxu0 0
    %695 = vmatpush1.bf16.msra.mxu0 0
    %696 = vmatprep.mubr.bf16.mxu0 0
    %697 = vmatmul.mubr.bf16.gmra.mrb[0].mxu0 %v278
    %v698 = vpop.f32.mrb[0].mxu0
    %v699 = vadd.f32 0.0, %v698
    %v700 = vpop.f32.mrb[0].mxu0
    %v701 = vadd.f32 0.0, %v700
    %v702 = vpop.f32.mrb[0].mxu0
    %v703 = vadd.f32 0.0, %v702
    %v704 = vpop.f32.mrb[0].mxu0
    %v705 = vadd.f32 0.0, %v704
    %706 = vmatprep.mubr.bf16.mxu0 0
    %707 = vmatmul.mubr.bf16.gmra.mrb[0].mxu0 %v279
    %v708 = vpop.f32.mrb[0].mxu0
    %v709 = vadd.f32 0.0, %v708
    %v710 = vpop.f32.mrb[0].mxu0
    %v711 = vadd.f32 0.0, %v710
    %v712 = vpop.f32.mrb[0].mxu0
    %v713 = vadd.f32 0.0, %v712
    %v714 = vpop.f32.mrb[0].mxu0
    %v715 = vadd.f32 0.0, %v714
    %716 = vdwg.mxu0
    %717 = vmatprep.subr.bf16.mxu0 %v539
    %718 = vmatpush1.bf16.msra.mxu0 %v538
    %719 = vmatprep.subr.bf16.mxu0 %v547
    %720 = vmatpush1.bf16.msra.mxu0 %v546
    %721 = vmatprep.subr.bf16.mxu0 %v555
    %722 = vmatpush1.bf16.msra.mxu0 %v554
    %723 = vmatprep.subr.bf16.mxu0 %v563
    %724 = vmatpush1.bf16.msra.mxu0 %v562
    %725 = vmatprep.subr.bf16.mxu0 %v571
    %726 = vmatpush1.bf16.msra.mxu0 %v570
    %727 = vmatprep.subr.bf16.mxu0 %v579
    %728 = vmatpush1.bf16.msra.mxu0 %v578
    %729 = vmatprep.subr.bf16.mxu0 %v587
    %730 = vmatpush1.bf16.msra.mxu0 %v586
    %731 = vmatprep.subr.bf16.mxu0 %v595
    %732 = vmatpush1.bf16.msra.mxu0 %v594
    %733 = vmatprep.subr.bf16.mxu0 0
    %734 = vmatpush1.bf16.msra.mxu0 0
    %735 = vmatprep.subr.bf16.mxu0 0
    %736 = vmatpush1.bf16.msra.mxu0 0
    %737 = vmatprep.subr.bf16.mxu0 0
    %738 = vmatpush1.bf16.msra.mxu0 0
    %739 = vmatprep.subr.bf16.mxu0 0
    %740 = vmatpush1.bf16.msra.mxu0 0
    %741 = vmatprep.subr.bf16.mxu0 0
    %742 = vmatpush1.bf16.msra.mxu0 0
    %743 = vmatprep.subr.bf16.mxu0 0
    %744 = vmatpush1.bf16.msra.mxu0 0
    %745 = vmatprep.subr.bf16.mxu0 0
    %746 = vmatpush1.bf16.msra.mxu0 0
    %747 = vmatprep.subr.bf16.mxu0 0
    %748 = vmatpush1.bf16.msra.mxu0 0
    %749 = vmatprep.mubr.bf16.mxu0 0
    %750 = vmatmul.mubr.bf16.gmra.mrb[0].mxu0 %v278
    %v751 = vpop.f32.mrb[0].mxu0
    %v752 = vadd.f32 0.0, %v751
    %v753 = vpop.f32.mrb[0].mxu0
    %v754 = vadd.f32 0.0, %v753
    %v755 = vpop.f32.mrb[0].mxu0
    %v756 = vadd.f32 0.0, %v755
    %v757 = vpop.f32.mrb[0].mxu0
    %v758 = vadd.f32 0.0, %v757
    %759 = vmatprep.mubr.bf16.mxu0 0
    %760 = vmatmul.mubr.bf16.gmra.mrb[0].mxu0 %v279
    %v761 = vpop.f32.mrb[0].mxu0
    %v762 = vadd.f32 0.0, %v761
    %v763 = vpop.f32.mrb[0].mxu0
    %v764 = vadd.f32 0.0, %v763
    %v765 = vpop.f32.mrb[0].mxu0
    %v766 = vadd.f32 0.0, %v765
    %v767 = vpop.f32.mrb[0].mxu0
    %v768 = vadd.f32 0.0, %v767
    %769 = vdwg.mxu0
    %770 = vmatprep.subr.bf16.mxu0 %v541
    %771 = vmatpush1.bf16.msra.mxu0 %v540
    %772 = vmatprep.subr.bf16.mxu0 %v549
    %773 = vmatpush1.bf16.msra.mxu0 %v548
    %774 = vmatprep.subr.bf16.mxu0 %v557
    %775 = vmatpush1.bf16.msra.mxu0 %v556
    %776 = vmatprep.subr.bf16.mxu0 %v565
    %777 = vmatpush1.bf16.msra.mxu0 %v564
    %778 = vmatprep.subr.bf16.mxu0 %v573
    %779 = vmatpush1.bf16.msra.mxu0 %v572
    %780 = vmatprep.subr.bf16.mxu0 %v581
    %781 = vmatpush1.bf16.msra.mxu0 %v580
    %782 = vmatprep.subr.bf16.mxu0 %v589
    %783 = vmatpush1.bf16.msra.mxu0 %v588
    %784 = vmatprep.subr.bf16.mxu0 %v597
    %785 = vmatpush1.bf16.msra.mxu0 %v596
    %786 = vmatprep.subr.bf16.mxu0 0
    %787 = vmatpush1.bf16.msra.mxu0 0
    %788 = vmatprep.subr.bf16.mxu0 0
    %789 = vmatpush1.bf16.msra.mxu0 0
    %790 = vmatprep.subr.bf16.mxu0 0
    %791 = vmatpush1.bf16.msra.mxu0 0
    %792 = vmatprep.subr.bf16.mxu0 0
    %793 = vmatpush1.bf16.msra.mxu0 0
    %794 = vmatprep.subr.bf16.mxu0 0
    %795 = vmatpush1.bf16.msra.mxu0 0
    %796 = vmatprep.subr.bf16.mxu0 0
    %797 = vmatpush1.bf16.msra.mxu0 0
    %798 = vmatprep.subr.bf16.mxu0 0
    %799 = vmatpush1.bf16.msra.mxu0 0
    %800 = vmatprep.subr.bf16.mxu0 0
    %801 = vmatpush1.bf16.msra.mxu0 0
    %802 = vmatprep.mubr.bf16.mxu0 0
    %803 = vmatmul.mubr.bf16.gmra.mrb[0].mxu0 %v278
    %v804 = vpop.f32.mrb[0].mxu0
    %v805 = vadd.f32 0.0, %v804
    %v806 = vpop.f32.mrb[0].mxu0
    %v807 = vadd.f32 0.0, %v806
    %v808 = vpop.f32.mrb[0].mxu0
    %v809 = vadd.f32 0.0, %v808
    %v810 = vpop.f32.mrb[0].mxu0
    %v811 = vadd.f32 0.0, %v810
    %812 = vmatprep.mubr.bf16.mxu0 0
    %813 = vmatmul.mubr.bf16.gmra.mrb[0].mxu0 %v279
    %v814 = vpop.f32.mrb[0].mxu0
    %v815 = vadd.f32 0.0, %v814
    %v816 = vpop.f32.mrb[0].mxu0
    %v817 = vadd.f32 0.0, %v816
    %v818 = vpop.f32.mrb[0].mxu0
    %v819 = vadd.f32 0.0, %v818
    %v820 = vpop.f32.mrb[0].mxu0
    %v821 = vadd.f32 0.0, %v820
    %822 = vdwg.mxu0
    %823 = vmatprep.subr.bf16.mxu0 %v543
    %824 = vmatpush1.bf16.msra.mxu0 %v542
    %825 = vmatprep.subr.bf16.mxu0 %v551
    %826 = vmatpush1.bf16.msra.mxu0 %v550
    %827 = vmatprep.subr.bf16.mxu0 %v559
    %828 = vmatpush1.bf16.msra.mxu0 %v558
    %829 = vmatprep.subr.bf16.mxu0 %v567
    %830 = vmatpush1.bf16.msra.mxu0 %v566
    %831 = vmatprep.subr.bf16.mxu0 %v575
    %832 = vmatpush1.bf16.msra.mxu0 %v574
    %833 = vmatprep.subr.bf16.mxu0 %v583
    %834 = vmatpush1.bf16.msra.mxu0 %v582
    %835 = vmatprep.subr.bf16.mxu0 %v591
    %836 = vmatpush1.bf16.msra.mxu0 %v590
    %837 = vmatprep.subr.bf16.mxu0 %v599
    %838 = vmatpush1.bf16.msra.mxu0 %v598
    %839 = vmatprep.subr.bf16.mxu0 0
    %840 = vmatpush1.bf16.msra.mxu0 0
    %841 = vmatprep.subr.bf16.mxu0 0
    %842 = vmatpush1.bf16.msra.mxu0 0
    %843 = vmatprep.subr.bf16.mxu0 0
    %844 = vmatpush1.bf16.msra.mxu0 0
    %845 = vmatprep.subr.bf16.mxu0 0
    %846 = vmatpush1.bf16.msra.mxu0 0
    %847 = vmatprep.subr.bf16.mxu0 0
    %848 = vmatpush1.bf16.msra.mxu0 0
    %849 = vmatprep.subr.bf16.mxu0 0
    %850 = vmatpush1.bf16.msra.mxu0 0
    %851 = vmatprep.subr.bf16.mxu0 0
    %852 = vmatpush1.bf16.msra.mxu0 0
    %853 = vmatprep.subr.bf16.mxu0 0
    %854 = vmatpush1.bf16.msra.mxu0 0
    %855 = vmatprep.mubr.bf16.mxu0 0
    %856 = vmatmul.mubr.bf16.gmra.mrb[0].mxu0 %v278
    %v857 = vpop.f32.mrb[0].mxu0
    %v858 = vadd.f32 0.0, %v857
    %v859 = vpop.f32.mrb[0].mxu0
    %v860 = vadd.f32 0.0, %v859
    %v861 = vpop.f32.mrb[0].mxu0
    %v862 = vadd.f32 0.0, %v861
    %v863 = vpop.f32.mrb[0].mxu0
    %v864 = vadd.f32 0.0, %v863
    %865 = vmatprep.mubr.bf16.mxu0 0
    %866 = vmatmul.mubr.bf16.gmra.mrb[0].mxu0 %v279
    %v867 = vpop.f32.mrb[0].mxu0
    %v868 = vadd.f32 0.0, %v867
    %v869 = vpop.f32.mrb[0].mxu0
    %v870 = vadd.f32 0.0, %v869
    %v871 = vpop.f32.mrb[0].mxu0
    %v872 = vadd.f32 0.0, %v871
    %v873 = vpop.f32.mrb[0].mxu0
    %v874 = vadd.f32 0.0, %v873
    %875 = vdwg.mxu0
    %v876 = vpack.c.bf16 %v703, %v699
    %v877 = vpack.c.bf16 %v705, %v701
    %v878 = vpack.c.bf16 %v756, %v752
    %v879 = vpack.c.bf16 %v758, %v754
    %v880 = vpack.c.bf16 %v809, %v805
    %v881 = vpack.c.bf16 %v811, %v807
    %v882 = vpack.c.bf16 %v862, %v858
    %v883 = vpack.c.bf16 %v864, %v860
    %v884 = vpack.c.bf16 %v713, %v709
    %v885 = vpack.c.bf16 %v715, %v711
    %v886 = vpack.c.bf16 %v766, %v762
    %v887 = vpack.c.bf16 %v768, %v764
    %v888 = vpack.c.bf16 %v819, %v815
    %v889 = vpack.c.bf16 %v821, %v817
    %v890 = vpack.c.bf16 %v872, %v868
    %v891 = vpack.c.bf16 %v874, %v870
    %p892 = scmp.eq.s32.totalorder 0, 0
    // Predicated region
    $region70: #{stn2d_forward.1} parent=1 // pred_check
      %p893 = pneg %p892
    $region71: #{stn2d_forward.1} parent=1 // pred_check_branch
      %895 = sbr.rel (%p893) target = $region73
    $region72: #{stn2d_forward.1} parent=1 // pred_region
      %896 = vst [vmem:[#allocation2] sm:$0xff] 4286644096
    $region73: #{stn2d_forward.1} parent=1 // pred_fallthru
      _
    %v897 = vld [vmem:[#allocation2] sm:$0xff]
    %v898 = vunpack.i.l.bf16 %v876
    %v899 = vunpack.i.h.bf16 %v876
    %v900 = vmax.f32 %v898, %v899
    %v901 = vrot.slane %v900, 4
    %v902 = vmax.f32 %v900, %v901
    %v903 = vrot.slane %v902, 2
    %v904 = vmax.f32 %v902, %v903
    %v905 = vrot.slane %v904, 1
    %v906 = vmax.f32 %v904, %v905
    %v907 = vpack.i.bf16 %v906, %v906
    %v908 = vunpack.i.l.bf16 %v877
    %v909 = vunpack.i.h.bf16 %v877
    %v910 = vmax.f32 %v908, %v909
    %v911 = vrot.slane %v910, 4
    %v912 = vmax.f32 %v910, %v911
    %v913 = vrot.slane %v912, 2
    %v914 = vmax.f32 %v912, %v913
    %v915 = vrot.slane %v914, 1
    %v916 = vmax.f32 %v914, %v915
    %v917 = vpack.i.bf16 %v916, %v916
    %v918 = vunpack.i.l.bf16 %v878
    %v919 = vunpack.i.h.bf16 %v878
    %v920 = vmax.f32 %v918, %v919
    %v921 = vrot.slane %v920, 4
    %v922 = vmax.f32 %v920, %v921
    %v923 = vrot.slane %v922, 2
    %v924 = vmax.f32 %v922, %v923
    %v925 = vrot.slane %v924, 1
    %v926 = vmax.f32 %v924, %v925
    %v927 = vpack.i.bf16 %v926, %v926
    %v928 = vunpack.i.l.bf16 %v879
    %v929 = vunpack.i.h.bf16 %v879
    %v930 = vmax.f32 %v928, %v929
    %v931 = vrot.slane %v930, 4
    %v932 = vmax.f32 %v930, %v931
    %v933 = vrot.slane %v932, 2
    %v934 = vmax.f32 %v932, %v933
    %v935 = vrot.slane %v934, 1
    %v936 = vmax.f32 %v934, %v935
    %v937 = vpack.i.bf16 %v936, %v936
    %v938 = vunpack.i.l.bf16 %v880
    %v939 = vunpack.i.h.bf16 %v880
    %v940 = vmax.f32 %v938, %v939
    %v941 = vrot.slane %v940, 4
    %v942 = vmax.f32 %v940, %v941
    %v943 = vrot.slane %v942, 2
    %v944 = vmax.f32 %v942, %v943
    %v945 = vrot.slane %v944, 1
    %v946 = vmax.f32 %v944, %v945
    %v947 = vpack.i.bf16 %v946, %v946
    %v948 = vunpack.i.l.bf16 %v881
    %v949 = vunpack.i.h.bf16 %v881
    %v950 = vmax.f32 %v948, %v949
    %v951 = vrot.slane %v950, 4
    %v952 = vmax.f32 %v950, %v951
    %v953 = vrot.slane %v952, 2
    %v954 = vmax.f32 %v952, %v953
    %v955 = vrot.slane %v954, 1
    %v956 = vmax.f32 %v954, %v955
    %v957 = vpack.i.bf16 %v956, %v956
    %v958 = vunpack.i.l.bf16 %v882
    %v959 = vunpack.i.h.bf16 %v882
    %v960 = vmax.f32 %v958, %v959
    %v961 = vrot.slane %v960, 4
    %v962 = vmax.f32 %v960, %v961
    %v963 = vrot.slane %v962, 2
    %v964 = vmax.f32 %v962, %v963
    %v965 = vrot.slane %v964, 1
    %v966 = vmax.f32 %v964, %v965
    %v967 = vpack.i.bf16 %v966, %v966
    %v968 = vunpack.i.l.bf16 %v883
    %v969 = vunpack.i.h.bf16 %v883
    %v970 = vmax.f32 %v968, %v969
    %v971 = vrot.slane %v970, 4
    %v972 = vmax.f32 %v970, %v971
    %v973 = vrot.slane %v972, 2
    %v974 = vmax.f32 %v972, %v973
    %v975 = vrot.slane %v974, 1
    %v976 = vmax.f32 %v974, %v975
    %v977 = vpack.i.bf16 %v976, %v976
    %v978 = vunpack.i.l.bf16 %v884
    %v979 = vunpack.i.h.bf16 %v884
    %v980 = vmax.f32 %v978, %v979
    %v981 = vrot.slane %v980, 4
    %v982 = vmax.f32 %v980, %v981
    %v983 = vrot.slane %v982, 2
    %v984 = vmax.f32 %v982, %v983
    %v985 = vrot.slane %v984, 1
    %v986 = vmax.f32 %v984, %v985
    %v987 = vpack.i.bf16 %v986, %v986
    %v988 = vunpack.i.l.bf16 %v885
    %v989 = vunpack.i.h.bf16 %v885
    %v990 = vmax.f32 %v988, %v989
    %v991 = vrot.slane %v990, 4
    %v992 = vmax.f32 %v990, %v991
    %v993 = vrot.slane %v992, 2
    %v994 = vmax.f32 %v992, %v993
    %v995 = vrot.slane %v994, 1
    %v996 = vmax.f32 %v994, %v995
    %v997 = vpack.i.bf16 %v996, %v996
    %v998 = vunpack.i.l.bf16 %v886
    %v999 = vunpack.i.h.bf16 %v886
    %v1000 = vmax.f32 %v998, %v999
    %v1001 = vrot.slane %v1000, 4
    %v1002 = vmax.f32 %v1000, %v1001
    %v1003 = vrot.slane %v1002, 2
    %v1004 = vmax.f32 %v1002, %v1003
    %v1005 = vrot.slane %v1004, 1
    %v1006 = vmax.f32 %v1004, %v1005
    %v1007 = vpack.i.bf16 %v1006, %v1006
    %v1008 = vunpack.i.l.bf16 %v887
    %v1009 = vunpack.i.h.bf16 %v887
    %v1010 = vmax.f32 %v1008, %v1009
    %v1011 = vrot.slane %v1010, 4
    %v1012 = vmax.f32 %v1010, %v1011
    %v1013 = vrot.slane %v1012, 2
    %v1014 = vmax.f32 %v1012, %v1013
    %v1015 = vrot.slane %v1014, 1
    %v1016 = vmax.f32 %v1014, %v1015
    %v1017 = vpack.i.bf16 %v1016, %v1016
    %v1018 = vunpack.i.l.bf16 %v888
    %v1019 = vunpack.i.h.bf16 %v888
    %v1020 = vmax.f32 %v1018, %v1019
    %v1021 = vrot.slane %v1020, 4
    %v1022 = vmax.f32 %v1020, %v1021
    %v1023 = vrot.slane %v1022, 2
    %v1024 = vmax.f32 %v1022, %v1023
    %v1025 = vrot.slane %v1024, 1
    %v1026 = vmax.f32 %v1024, %v1025
    %v1027 = vpack.i.bf16 %v1026, %v1026
    %v1028 = vunpack.i.l.bf16 %v889
    %v1029 = vunpack.i.h.bf16 %v889
    %v1030 = vmax.f32 %v1028, %v1029
    %v1031 = vrot.slane %v1030, 4
    %v1032 = vmax.f32 %v1030, %v1031
    %v1033 = vrot.slane %v1032, 2
    %v1034 = vmax.f32 %v1032, %v1033
    %v1035 = vrot.slane %v1034, 1
    %v1036 = vmax.f32 %v1034, %v1035
    %v1037 = vpack.i.bf16 %v1036, %v1036
    %v1038 = vunpack.i.l.bf16 %v890
    %v1039 = vunpack.i.h.bf16 %v890
    %v1040 = vmax.f32 %v1038, %v1039
    %v1041 = vrot.slane %v1040, 4
    %v1042 = vmax.f32 %v1040, %v1041
    %v1043 = vrot.slane %v1042, 2
    %v1044 = vmax.f32 %v1042, %v1043
    %v1045 = vrot.slane %v1044, 1
    %v1046 = vmax.f32 %v1044, %v1045
    %v1047 = vpack.i.bf16 %v1046, %v1046
    %v1048 = vunpack.i.l.bf16 %v891
    %v1049 = vunpack.i.h.bf16 %v891
    %v1050 = vmax.f32 %v1048, %v1049
    %v1051 = vrot.slane %v1050, 4
    %v1052 = vmax.f32 %v1050, %v1051
    %v1053 = vrot.slane %v1052, 2
    %v1054 = vmax.f32 %v1052, %v1053
    %v1055 = vrot.slane %v1054, 1
    %v1056 = vmax.f32 %v1054, %v1055
    %v1057 = vpack.i.bf16 %v1056, %v1056
    %v1074 = vcombine.low %v907, %v917
    %v1075 = vcombine.low %v927, %v937
    %v1076 = vcombine.low %v947, %v957
    %v1077 = vcombine.low %v967, %v977
    %v1079 = vunpack.c.l.s4 1966171168
    %v1080 = vunpack.c.0.s8 %v1079
    %v1081 = vlaneseq
    %v1082 = vshrl.u32 %v1081, 7
    %v1083 = vsub.s32 %v1080, %v1082
    %v1084 = vrot.slane %v1074, %v1083
    %v1086 = vunpack.c.l.s4 1966171168
    %v1087 = vunpack.c.0.s8 %v1086
    %v1088 = vlaneseq
    %v1089 = vshrl.u32 %v1088, 7
    %v1090 = vsub.s32 %v1087, %v1089
    %v1091 = vrot.slane %v1075, %v1090
    %v1093 = vunpack.c.l.s4 1966171168
    %v1094 = vunpack.c.0.s8 %v1093
    %v1095 = vlaneseq
    %v1096 = vshrl.u32 %v1095, 7
    %v1097 = vsub.s32 %v1094, %v1096
    %v1098 = vrot.slane %v1076, %v1097
    %v1100 = vunpack.c.l.s4 1966171168
    %v1101 = vunpack.c.0.s8 %v1100
    %v1102 = vlaneseq
    %v1103 = vshrl.u32 %v1102, 7
    %v1104 = vsub.s32 %v1101, %v1103
    %v1105 = vrot.slane %v1077, %v1104
    %v1106 = vcombine.low %v1084, %v1091
    %v1107 = vcombine.low %v1098, %v1105
    %v1109 = vunpack.c.l.s4 1966171168
    %v1110 = vunpack.c.0.s8 %v1109
    %v1111 = vlaneseq
    %v1112 = vshrl.u32 %v1111, 7
    %v1113 = vsub.s32 %v1110, %v1112
    %v1114 = vrot.slane %v1106, %v1113
    %v1116 = vunpack.c.l.s4 1966171168
    %v1117 = vunpack.c.0.s8 %v1116
    %v1118 = vlaneseq
    %v1119 = vshrl.u32 %v1118, 7
    %v1120 = vsub.s32 %v1117, %v1119
    %v1121 = vrot.slane %v1107, %v1120
    %v1122 = vcombine.low %v1114, %v1121
    %v1123 = vcombine.low %v987, %v997
    %v1124 = vcombine.low %v1007, %v1017
    %v1125 = vcombine.low %v1027, %v1037
    %v1126 = vcombine.low %v1047, %v1057
    %v1128 = vunpack.c.l.s4 1966171168
    %v1129 = vunpack.c.0.s8 %v1128
    %v1130 = vlaneseq
    %v1131 = vshrl.u32 %v1130, 7
    %v1132 = vsub.s32 %v1129, %v1131
    %v1133 = vrot.slane %v1123, %v1132
    %v1135 = vunpack.c.l.s4 1966171168
    %v1136 = vunpack.c.0.s8 %v1135
    %v1137 = vlaneseq
    %v1138 = vshrl.u32 %v1137, 7
    %v1139 = vsub.s32 %v1136, %v1138
    %v1140 = vrot.slane %v1124, %v1139
    %v1142 = vunpack.c.l.s4 1966171168
    %v1143 = vunpack.c.0.s8 %v1142
    %v1144 = vlaneseq
    %v1145 = vshrl.u32 %v1144, 7
    %v1146 = vsub.s32 %v1143, %v1145
    %v1147 = vrot.slane %v1125, %v1146
    %v1149 = vunpack.c.l.s4 1966171168
    %v1150 = vunpack.c.0.s8 %v1149
    %v1151 = vlaneseq
    %v1152 = vshrl.u32 %v1151, 7
    %v1153 = vsub.s32 %v1150, %v1152
    %v1154 = vrot.slane %v1126, %v1153
    %v1155 = vcombine.low %v1133, %v1140
    %v1156 = vcombine.low %v1147, %v1154
    %v1158 = vunpack.c.l.s4 1966171168
    %v1159 = vunpack.c.0.s8 %v1158
    %v1160 = vlaneseq
    %v1161 = vshrl.u32 %v1160, 7
    %v1162 = vsub.s32 %v1159, %v1161
    %v1163 = vrot.slane %v1155, %v1162
    %v1165 = vunpack.c.l.s4 1966171168
    %v1166 = vunpack.c.0.s8 %v1165
    %v1167 = vlaneseq
    %v1168 = vshrl.u32 %v1167, 7
    %v1169 = vsub.s32 %v1166, %v1168
    %v1170 = vrot.slane %v1156, %v1169
    %v1171 = vcombine.low %v1163, %v1170
    %v1172 = vcombine.high %v1122, %v1122
    %v1174 = vunpack.c.l.s4 1935823168
    %v1175 = vunpack.c.0.s8 %v1174
    %v1176 = vlaneseq
    %v1177 = vshrl.u32 %v1176, 7
    %v1178 = vsub.s32 %v1175, %v1177
    %v1179 = vrot.slane %v1122, %v1178
    %v1181 = vunpack.c.l.s4 1935823168
    %v1182 = vunpack.c.0.s8 %v1181
    %v1183 = vlaneseq
    %v1184 = vshrl.u32 %v1183, 7
    %v1185 = vsub.s32 %v1182, %v1184
    %v1186 = vrot.slane %v1172, %v1185
    %v1187 = vcombine.high %v1179, %v1179
    %v1188 = vcombine.high %v1186, %v1186
    %v1190 = vunpack.c.l.s4 1935823168
    %v1191 = vunpack.c.0.s8 %v1190
    %v1192 = vlaneseq
    %v1193 = vshrl.u32 %v1192, 7
    %v1194 = vsub.s32 %v1191, %v1193
    %v1195 = vrot.slane %v1179, %v1194
    %v1197 = vunpack.c.l.s4 1935823168
    %v1198 = vunpack.c.0.s8 %v1197
    %v1199 = vlaneseq
    %v1200 = vshrl.u32 %v1199, 7
    %v1201 = vsub.s32 %v1198, %v1200
    %v1202 = vrot.slane %v1187, %v1201
    %v1204 = vunpack.c.l.s4 1935823168
    %v1205 = vunpack.c.0.s8 %v1204
    %v1206 = vlaneseq
    %v1207 = vshrl.u32 %v1206, 7
    %v1208 = vsub.s32 %v1205, %v1207
    %v1209 = vrot.slane %v1186, %v1208
    %v1211 = vunpack.c.l.s4 1935823168
    %v1212 = vunpack.c.0.s8 %v1211
    %v1213 = vlaneseq
    %v1214 = vshrl.u32 %v1213, 7
    %v1215 = vsub.s32 %v1212, %v1214
    %v1216 = vrot.slane %v1188, %v1215
    %v1217 = vcombine.high %v1171, %v1171
    %v1219 = vunpack.c.l.s4 1935823168
    %v1220 = vunpack.c.0.s8 %v1219
    %v1221 = vlaneseq
    %v1222 = vshrl.u32 %v1221, 7
    %v1223 = vsub.s32 %v1220, %v1222
    %v1224 = vrot.slane %v1171, %v1223
    %v1226 = vunpack.c.l.s4 1935823168
    %v1227 = vunpack.c.0.s8 %v1226
    %v1228 = vlaneseq
    %v1229 = vshrl.u32 %v1228, 7
    %v1230 = vsub.s32 %v1227, %v1229
    %v1231 = vrot.slane %v1217, %v1230
    %v1232 = vcombine.high %v1224, %v1224
    %v1233 = vcombine.high %v1231, %v1231
    %v1235 = vunpack.c.l.s4 1935823168
    %v1236 = vunpack.c.0.s8 %v1235
    %v1237 = vlaneseq
    %v1238 = vshrl.u32 %v1237, 7
    %v1239 = vsub.s32 %v1236, %v1238
    %v1240 = vrot.slane %v1224, %v1239
    %v1242 = vunpack.c.l.s4 1935823168
    %v1243 = vunpack.c.0.s8 %v1242
    %v1244 = vlaneseq
    %v1245 = vshrl.u32 %v1244, 7
    %v1246 = vsub.s32 %v1243, %v1245
    %v1247 = vrot.slane %v1232, %v1246
    %v1249 = vunpack.c.l.s4 1935823168
    %v1250 = vunpack.c.0.s8 %v1249
    %v1251 = vlaneseq
    %v1252 = vshrl.u32 %v1251, 7
    %v1253 = vsub.s32 %v1250, %v1252
    %v1254 = vrot.slane %v1231, %v1253
    %v1256 = vunpack.c.l.s4 1935823168
    %v1257 = vunpack.c.0.s8 %v1256
    %v1258 = vlaneseq
    %v1259 = vshrl.u32 %v1258, 7
    %v1260 = vsub.s32 %v1257, %v1259
    %v1261 = vrot.slane %v1233, %v1260
    %v1262 = vunpack.c.l.b16 %v1195
    %v1263 = vunpack.c.h.b16 %v1195
    %v1264 = vunpack.c.l.b16 %v1202
    %v1265 = vunpack.c.h.b16 %v1202
    %v1266 = vunpack.c.l.b16 %v1209
    %v1267 = vunpack.c.h.b16 %v1209
    %v1268 = vunpack.c.l.b16 %v1216
    %v1269 = vunpack.c.h.b16 %v1216
    %v1270 = vunpack.c.l.b16 %v1240
    %v1271 = vunpack.c.h.b16 %v1240
    %v1272 = vunpack.c.l.b16 %v1247
    %v1273 = vunpack.c.h.b16 %v1247
    %v1274 = vunpack.c.l.b16 %v1254
    %v1275 = vunpack.c.h.b16 %v1254
    %v1276 = vunpack.c.l.b16 %v1261
    %v1277 = vunpack.c.h.b16 %v1261
    %v1278 = vrot.slane %v1270, 7
    %vm1279 = vcmask 1041409
    %v1280 = vsel %vm1279, %v1278, %v1262
    %v1281 = vrot.slane %v1271, 7
    %v1282 = vsel %vm1279, %v1281, %v1263
    %v1283 = vrot.slane %v1272, 7
    %v1284 = vsel %vm1279, %v1283, %v1264
    %v1285 = vrot.slane %v1273, 7
    %v1286 = vsel %vm1279, %v1285, %v1265
    %v1287 = vrot.slane %v1274, 7
    %v1288 = vsel %vm1279, %v1287, %v1266
    %v1289 = vrot.slane %v1275, 7
    %v1290 = vsel %vm1279, %v1289, %v1267
    %v1291 = vrot.slane %v1276, 7
    %v1292 = vsel %vm1279, %v1291, %v1268
    %v1293 = vrot.slane %v1277, 7
    %v1294 = vsel %vm1279, %v1293, %v1269
    %v1295 = vpack.c.b16 %v1282, %v1280
    %v1296 = vpack.c.b16 %v1286, %v1284
    %v1297 = vpack.c.b16 %v1290, %v1288
    %v1298 = vpack.c.b16 %v1294, %v1292
    %v1300 = vunpack.c.l.s4 1966171168
    %v1301 = vunpack.c.0.s8 %v1300
    %v1302 = vlaneseq
    %v1303 = vshrl.u32 %v1302, 7
    %v1304 = vsub.s32 %v1301, %v1303
    %v1305 = vrot.slane %v1295, %v1304
    %v1307 = vunpack.c.l.s4 1966171168
    %v1308 = vunpack.c.0.s8 %v1307
    %v1309 = vlaneseq
    %v1310 = vshrl.u32 %v1309, 7
    %v1311 = vsub.s32 %v1308, %v1310
    %v1312 = vrot.slane %v1296, %v1311
    %v1314 = vunpack.c.l.s4 1966171168
    %v1315 = vunpack.c.0.s8 %v1314
    %v1316 = vlaneseq
    %v1317 = vshrl.u32 %v1316, 7
    %v1318 = vsub.s32 %v1315, %v1317
    %v1319 = vrot.slane %v1297, %v1318
    %v1321 = vunpack.c.l.s4 1966171168
    %v1322 = vunpack.c.0.s8 %v1321
    %v1323 = vlaneseq
    %v1324 = vshrl.u32 %v1323, 7
    %v1325 = vsub.s32 %v1322, %v1324
    %v1326 = vrot.slane %v1298, %v1325
    %v1327 = vcombine.low %v1305, %v1312
    %v1328 = vcombine.low %v1319, %v1326
    %v1330 = vunpack.c.l.s4 1966171168
    %v1331 = vunpack.c.0.s8 %v1330
    %v1332 = vlaneseq
    %v1333 = vshrl.u32 %v1332, 7
    %v1334 = vsub.s32 %v1331, %v1333
    %v1335 = vrot.slane %v1327, %v1334
    %v1337 = vunpack.c.l.s4 1966171168
    %v1338 = vunpack.c.0.s8 %v1337
    %v1339 = vlaneseq
    %v1340 = vshrl.u32 %v1339, 7
    %v1341 = vsub.s32 %v1338, %v1340
    %v1342 = vrot.slane %v1328, %v1341
    %v1343 = vcombine.low %v1335, %v1342
    %v1345 = vmax.bf16 %v897, %v1343
    %1346 = vst [vmem:[#allocation2] sm:$0xff] %v1345
    // Predicated region
    $region74: #{stn2d_forward.1} parent=1 // pred_check
      %p1347 = pneg %p892
    $region75: #{stn2d_forward.1} parent=1 // pred_check_branch
      %1349 = sbr.rel (%p1347) target = $region77
    $region76: #{stn2d_forward.1} parent=1 // pred_region
      %v1350 = vld [vmem:[#allocation2] sm:$0xff]
      %v1351 = vunpack.c.l.bf16 %v1350
      %v1352 = vunpack.c.h.bf16 %v1350
      %v1353 = vld [vmem:[%s6] sm:$0xff]
      %v1355 = vlaneseq
      %v1356 = vshrl.u32 %v1355, 7
      %v1357 = vsub.s32 0, %v1356
      %v1358 = vrot.slane %v1353, %v1357
      %v1359 = vlaneseq
      %v1360 = vshrl.u32 %v1359, 7
      %v1361 = vsub.s32 1, %v1360
      %v1362 = vrot.slane %v1353, %v1361
      %v1363 = vlaneseq
      %v1364 = vshrl.u32 %v1363, 7
      %v1365 = vsub.s32 2, %v1364
      %v1366 = vrot.slane %v1353, %v1365
      %v1367 = vlaneseq
      %v1368 = vshrl.u32 %v1367, 7
      %v1369 = vsub.s32 3, %v1368
      %v1370 = vrot.slane %v1353, %v1369
      %v1371 = vlaneseq
      %v1372 = vshrl.u32 %v1371, 7
      %v1373 = vsub.s32 4, %v1372
      %v1374 = vrot.slane %v1353, %v1373
      %v1375 = vlaneseq
      %v1376 = vshrl.u32 %v1375, 7
      %v1377 = vsub.s32 5, %v1376
      %v1378 = vrot.slane %v1353, %v1377
      %v1379 = vlaneseq
      %v1380 = vshrl.u32 %v1379, 7
      %v1381 = vsub.s32 6, %v1380
      %v1382 = vrot.slane %v1353, %v1381
      %v1383 = vlaneseq
      %v1384 = vshrl.u32 %v1383, 7
      %v1385 = vsub.s32 7, %v1384
      %v1386 = vrot.slane %v1353, %v1385
      %v1387 = vcombine.low %v1358, %v1362
      %v1388 = vcombine.low %v1366, %v1370
      %v1390 = vunpack.c.l.s4 1983009808
      %v1391 = vunpack.c.0.s8 %v1390
      %v1392 = vlaneseq
      %v1393 = vshrl.u32 %v1392, 7
      %v1394 = vsub.s32 %v1391, %v1393
      %v1395 = vrot.slane %v1387, %v1394
      %v1397 = vunpack.c.l.s4 1983009808
      %v1398 = vunpack.c.0.s8 %v1397
      %v1399 = vlaneseq
      %v1400 = vshrl.u32 %v1399, 7
      %v1401 = vsub.s32 %v1398, %v1400
      %v1402 = vrot.slane %v1388, %v1401
      %v1403 = vcombine.low %v1395, %v1402
      %v1404 = vcombine.low %v1374, %v1378
      %v1405 = vcombine.low %v1382, %v1386
      %v1407 = vunpack.c.l.s4 1983009808
      %v1408 = vunpack.c.0.s8 %v1407
      %v1409 = vlaneseq
      %v1410 = vshrl.u32 %v1409, 7
      %v1411 = vsub.s32 %v1408, %v1410
      %v1412 = vrot.slane %v1404, %v1411
      %v1414 = vunpack.c.l.s4 1983009808
      %v1415 = vunpack.c.0.s8 %v1414
      %v1416 = vlaneseq
      %v1417 = vshrl.u32 %v1416, 7
      %v1418 = vsub.s32 %v1415, %v1417
      %v1419 = vrot.slane %v1405, %v1418
      %v1420 = vcombine.low %v1412, %v1419
      %v1423 = vadd.f32 %v1351, %v1403
      %v1424 = vadd.f32 %v1352, %v1420
      %v1425 = vmax.f32 %v1423, 0.0
      %v1426 = vmax.f32 %v1424, 0.0
      %v1429 = vcombine.high %v1425, %v1425
      %v1431 = vunpack.c.l.s4 1983009808
      %v1432 = vunpack.c.0.s8 %v1431
      %v1433 = vlaneseq
      %v1434 = vshrl.u32 %v1433, 7
      %v1435 = vsub.s32 %v1432, %v1434
      %v1436 = vrot.slane %v1425, %v1435
      %v1438 = vunpack.c.l.s4 1983009808
      %v1439 = vunpack.c.0.s8 %v1438
      %v1440 = vlaneseq
      %v1441 = vshrl.u32 %v1440, 7
      %v1442 = vsub.s32 %v1439, %v1441
      %v1443 = vrot.slane %v1429, %v1442
      %v1444 = vcombine.high %v1436, %v1436
      %v1445 = vcombine.high %v1443, %v1443
      %v1446 = vcombine.high %v1426, %v1426
      %v1448 = vunpack.c.l.s4 1983009808
      %v1449 = vunpack.c.0.s8 %v1448
      %v1450 = vlaneseq
      %v1451 = vshrl.u32 %v1450, 7
      %v1452 = vsub.s32 %v1449, %v1451
      %v1453 = vrot.slane %v1426, %v1452
      %v1455 = vunpack.c.l.s4 1983009808
      %v1456 = vunpack.c.0.s8 %v1455
      %v1457 = vlaneseq
      %v1458 = vshrl.u32 %v1457, 7
      %v1459 = vsub.s32 %v1456, %v1458
      %v1460 = vrot.slane %v1446, %v1459
      %v1461 = vcombine.high %v1453, %v1453
      %v1462 = vcombine.high %v1460, %v1460
      %v1471 = vpack.c.bf16 %v1436, %v1436
      %v1472 = vpack.c.bf16 %v1444, %v1444
      %v1473 = vpack.c.bf16 %v1443, %v1443
      %v1474 = vpack.c.bf16 %v1445, %v1445
      %v1475 = vpack.c.bf16 %v1453, %v1453
      %v1476 = vpack.c.bf16 %v1461, %v1461
      %v1477 = vpack.c.bf16 %v1460, %v1460
      %v1478 = vpack.c.bf16 %v1462, %v1462
      %v1479 = vld [vmem:[#allocation5] sm:$0xff]
      %v1480 = vld [vmem:[#allocation5 + $0x8] sm:$0xff]
      %v1481 = vld [vmem:[#allocation5 + $0x10] sm:$0xff]
      %v1482 = vld [vmem:[#allocation5 + $0x18] sm:$0xff]
      %v1483 = vld [vmem:[#allocation5 + $0x20] sm:$0xff]
      %v1484 = vld [vmem:[#allocation5 + $0x28] sm:$0xff]
      %v1485 = vld [vmem:[#allocation5 + $0x30] sm:$0xff]
      %v1486 = vld [vmem:[#allocation5 + $0x38] sm:$0xff]
      %v1487 = vld [vmem:[#allocation5 + $0x40] sm:$0xff]
      %v1488 = vld [vmem:[#allocation5 + $0x48] sm:$0xff]
      %v1489 = vld [vmem:[#allocation5 + $0x50] sm:$0xff]
      %v1490 = vld [vmem:[#allocation5 + $0x58] sm:$0xff]
      %v1491 = vld [vmem:[#allocation5 + $0x60] sm:$0xff]
      %v1492 = vld [vmem:[#allocation5 + $0x68] sm:$0xff]
      %v1493 = vld [vmem:[#allocation5 + $0x70] sm:$0xff]
      %v1494 = vld [vmem:[#allocation5 + $0x78] sm:$0xff]
      %v1495 = vld [vmem:[#allocation5 + $0x80] sm:$0xff]
      %v1496 = vld [vmem:[#allocation5 + $0x88] sm:$0xff]
      %v1497 = vld [vmem:[#allocation5 + $0x90] sm:$0xff]
      %v1498 = vld [vmem:[#allocation5 + $0x98] sm:$0xff]
      %v1499 = vld [vmem:[#allocation5 + $0xa0] sm:$0xff]
      %v1500 = vld [vmem:[#allocation5 + $0xa8] sm:$0xff]
      %v1501 = vld [vmem:[#allocation5 + $0xb0] sm:$0xff]
      %v1502 = vld [vmem:[#allocation5 + $0xb8] sm:$0xff]
      %v1503 = vld [vmem:[#allocation5 + $0xc0] sm:$0xff]
      %v1504 = vld [vmem:[#allocation5 + $0xc8] sm:$0xff]
      %v1505 = vld [vmem:[#allocation5 + $0xd0] sm:$0xff]
      %v1506 = vld [vmem:[#allocation5 + $0xd8] sm:$0xff]
      %v1507 = vld [vmem:[#allocation5 + $0xe0] sm:$0xff]
      %v1508 = vld [vmem:[#allocation5 + $0xe8] sm:$0xff]
      %v1509 = vld [vmem:[#allocation5 + $0xf0] sm:$0xff]
      %v1510 = vld [vmem:[#allocation5 + $0xf8] sm:$0xff]
      %v1511 = vld [vmem:[#allocation5 + $0x100] sm:$0xff]
      %v1512 = vld [vmem:[#allocation5 + $0x108] sm:$0xff]
      %v1513 = vld [vmem:[#allocation5 + $0x110] sm:$0xff]
      %v1514 = vld [vmem:[#allocation5 + $0x118] sm:$0xff]
      %v1515 = vld [vmem:[#allocation5 + $0x120] sm:$0xff]
      %v1516 = vld [vmem:[#allocation5 + $0x128] sm:$0xff]
      %v1517 = vld [vmem:[#allocation5 + $0x130] sm:$0xff]
      %v1518 = vld [vmem:[#allocation5 + $0x138] sm:$0xff]
      %v1519 = vld [vmem:[#allocation5 + $0x140] sm:$0xff]
      %v1520 = vld [vmem:[#allocation5 + $0x148] sm:$0xff]
      %v1521 = vld [vmem:[#allocation5 + $0x150] sm:$0xff]
      %v1522 = vld [vmem:[#allocation5 + $0x158] sm:$0xff]
      %v1523 = vld [vmem:[#allocation5 + $0x160] sm:$0xff]
      %v1524 = vld [vmem:[#allocation5 + $0x168] sm:$0xff]
      %v1525 = vld [vmem:[#allocation5 + $0x170] sm:$0xff]
      %v1526 = vld [vmem:[#allocation5 + $0x178] sm:$0xff]
      %v1527 = vld [vmem:[#allocation5 + $0x180] sm:$0xff]
      %v1528 = vld [vmem:[#allocation5 + $0x188] sm:$0xff]
      %v1529 = vld [vmem:[#allocation5 + $0x190] sm:$0xff]
      %v1530 = vld [vmem:[#allocation5 + $0x198] sm:$0xff]
      %v1531 = vld [vmem:[#allocation5 + $0x1a0] sm:$0xff]
      %v1532 = vld [vmem:[#allocation5 + $0x1a8] sm:$0xff]
      %v1533 = vld [vmem:[#allocation5 + $0x1b0] sm:$0xff]
      %v1534 = vld [vmem:[#allocation5 + $0x1b8] sm:$0xff]
      %v1535 = vld [vmem:[#allocation5 + $0x1c0] sm:$0xff]
      %v1536 = vld [vmem:[#allocation5 + $0x1c8] sm:$0xff]
      %v1537 = vld [vmem:[#allocation5 + $0x1d0] sm:$0xff]
      %v1538 = vld [vmem:[#allocation5 + $0x1d8] sm:$0xff]
      %v1539 = vld [vmem:[#allocation5 + $0x1e0] sm:$0xff]
      %v1540 = vld [vmem:[#allocation5 + $0x1e8] sm:$0xff]
      %v1541 = vld [vmem:[#allocation5 + $0x1f0] sm:$0xff]
      %v1542 = vld [vmem:[#allocation5 + $0x1f8] sm:$0xff]
      %v1543 = vld [vmem:[#allocation5 + $0x200] sm:$0xff]
      %v1544 = vld [vmem:[#allocation5 + $0x208] sm:$0xff]
      %v1545 = vld [vmem:[#allocation5 + $0x210] sm:$0xff]
      %v1546 = vld [vmem:[#allocation5 + $0x218] sm:$0xff]
      %v1547 = vld [vmem:[#allocation5 + $0x220] sm:$0xff]
      %v1548 = vld [vmem:[#allocation5 + $0x228] sm:$0xff]
      %v1549 = vld [vmem:[#allocation5 + $0x230] sm:$0xff]
      %v1550 = vld [vmem:[#allocation5 + $0x238] sm:$0xff]
      %v1551 = vld [vmem:[#allocation5 + $0x240] sm:$0xff]
      %v1552 = vld [vmem:[#allocation5 + $0x248] sm:$0xff]
      %v1553 = vld [vmem:[#allocation5 + $0x250] sm:$0xff]
      %v1554 = vld [vmem:[#allocation5 + $0x258] sm:$0xff]
      %v1555 = vld [vmem:[#allocation5 + $0x260] sm:$0xff]
      %v1556 = vld [vmem:[#allocation5 + $0x268] sm:$0xff]
      %v1557 = vld [vmem:[#allocation5 + $0x270] sm:$0xff]
      %v1558 = vld [vmem:[#allocation5 + $0x278] sm:$0xff]
      %v1559 = vld [vmem:[#allocation5 + $0x280] sm:$0xff]
      %v1560 = vld [vmem:[#allocation5 + $0x288] sm:$0xff]
      %v1561 = vld [vmem:[#allocation5 + $0x290] sm:$0xff]
      %v1562 = vld [vmem:[#allocation5 + $0x298] sm:$0xff]
      %v1563 = vld [vmem:[#allocation5 + $0x2a0] sm:$0xff]
      %v1564 = vld [vmem:[#allocation5 + $0x2a8] sm:$0xff]
      %v1565 = vld [vmem:[#allocation5 + $0x2b0] sm:$0xff]
      %v1566 = vld [vmem:[#allocation5 + $0x2b8] sm:$0xff]
      %v1567 = vld [vmem:[#allocation5 + $0x2c0] sm:$0xff]
      %v1568 = vld [vmem:[#allocation5 + $0x2c8] sm:$0xff]
      %v1569 = vld [vmem:[#allocation5 + $0x2d0] sm:$0xff]
      %v1570 = vld [vmem:[#allocation5 + $0x2d8] sm:$0xff]
      %v1571 = vld [vmem:[#allocation5 + $0x2e0] sm:$0xff]
      %v1572 = vld [vmem:[#allocation5 + $0x2e8] sm:$0xff]
      %v1573 = vld [vmem:[#allocation5 + $0x2f0] sm:$0xff]
      %v1574 = vld [vmem:[#allocation5 + $0x2f8] sm:$0xff]
      %v1575 = vld [vmem:[#allocation5 + $0x300] sm:$0xff]
      %v1576 = vld [vmem:[#allocation5 + $0x308] sm:$0xff]
      %v1577 = vld [vmem:[#allocation5 + $0x310] sm:$0xff]
      %v1578 = vld [vmem:[#allocation5 + $0x318] sm:$0xff]
      %v1579 = vld [vmem:[#allocation5 + $0x320] sm:$0xff]
      %v1580 = vld [vmem:[#allocation5 + $0x328] sm:$0xff]
      %v1581 = vld [vmem:[#allocation5 + $0x330] sm:$0xff]
      %v1582 = vld [vmem:[#allocation5 + $0x338] sm:$0xff]
      %v1583 = vld [vmem:[#allocation5 + $0x340] sm:$0xff]
      %v1584 = vld [vmem:[#allocation5 + $0x348] sm:$0xff]
      %v1585 = vld [vmem:[#allocation5 + $0x350] sm:$0xff]
      %v1586 = vld [vmem:[#allocation5 + $0x358] sm:$0xff]
      %v1587 = vld [vmem:[#allocation5 + $0x360] sm:$0xff]
      %v1588 = vld [vmem:[#allocation5 + $0x368] sm:$0xff]
      %v1589 = vld [vmem:[#allocation5 + $0x370] sm:$0xff]
      %v1590 = vld [vmem:[#allocation5 + $0x378] sm:$0xff]
      %v1591 = vld [vmem:[#allocation5 + $0x380] sm:$0xff]
      %v1592 = vld [vmem:[#allocation5 + $0x388] sm:$0xff]
      %v1593 = vld [vmem:[#allocation5 + $0x390] sm:$0xff]
      %v1594 = vld [vmem:[#allocation5 + $0x398] sm:$0xff]
      %v1595 = vld [vmem:[#allocation5 + $0x3a0] sm:$0xff]
      %v1596 = vld [vmem:[#allocation5 + $0x3a8] sm:$0xff]
      %v1597 = vld [vmem:[#allocation5 + $0x3b0] sm:$0xff]
      %v1598 = vld [vmem:[#allocation5 + $0x3b8] sm:$0xff]
      %v1599 = vld [vmem:[#allocation5 + $0x3c0] sm:$0xff]
      %v1600 = vld [vmem:[#allocation5 + $0x3c8] sm:$0xff]
      %v1601 = vld [vmem:[#allocation5 + $0x3d0] sm:$0xff]
      %v1602 = vld [vmem:[#allocation5 + $0x3d8] sm:$0xff]
      %v1603 = vld [vmem:[#allocation5 + $0x3e0] sm:$0xff]
      %v1604 = vld [vmem:[#allocation5 + $0x3e8] sm:$0xff]
      %v1605 = vld [vmem:[#allocation5 + $0x3f0] sm:$0xff]
      %v1606 = vld [vmem:[#allocation5 + $0x3f8] sm:$0xff]
      %v1607 = vld [vmem:[#allocation5 + $0x400] sm:$0xff]
      %v1608 = vld [vmem:[#allocation5 + $0x408] sm:$0xff]
      %v1609 = vld [vmem:[#allocation5 + $0x410] sm:$0xff]
      %v1610 = vld [vmem:[#allocation5 + $0x418] sm:$0xff]
      %v1611 = vld [vmem:[#allocation5 + $0x420] sm:$0xff]
      %v1612 = vld [vmem:[#allocation5 + $0x428] sm:$0xff]
      %v1613 = vld [vmem:[#allocation5 + $0x430] sm:$0xff]
      %v1614 = vld [vmem:[#allocation5 + $0x438] sm:$0xff]
      %v1615 = vld [vmem:[#allocation5 + $0x440] sm:$0xff]
      %v1616 = vld [vmem:[#allocation5 + $0x448] sm:$0xff]
      %v1617 = vld [vmem:[#allocation5 + $0x450] sm:$0xff]
      %v1618 = vld [vmem:[#allocation5 + $0x458] sm:$0xff]
      %v1619 = vld [vmem:[#allocation5 + $0x460] sm:$0xff]
      %v1620 = vld [vmem:[#allocation5 + $0x468] sm:$0xff]
      %v1621 = vld [vmem:[#allocation5 + $0x470] sm:$0xff]
      %v1622 = vld [vmem:[#allocation5 + $0x478] sm:$0xff]
      %v1623 = vld [vmem:[#allocation5 + $0x480] sm:$0xff]
      %v1624 = vld [vmem:[#allocation5 + $0x488] sm:$0xff]
      %v1625 = vld [vmem:[#allocation5 + $0x490] sm:$0xff]
      %v1626 = vld [vmem:[#allocation5 + $0x498] sm:$0xff]
      %v1627 = vld [vmem:[#allocation5 + $0x4a0] sm:$0xff]
      %v1628 = vld [vmem:[#allocation5 + $0x4a8] sm:$0xff]
      %v1629 = vld [vmem:[#allocation5 + $0x4b0] sm:$0xff]
      %v1630 = vld [vmem:[#allocation5 + $0x4b8] sm:$0xff]
      %v1631 = vld [vmem:[#allocation5 + $0x4c0] sm:$0xff]
      %v1632 = vld [vmem:[#allocation5 + $0x4c8] sm:$0xff]
      %v1633 = vld [vmem:[#allocation5 + $0x4d0] sm:$0xff]
      %v1634 = vld [vmem:[#allocation5 + $0x4d8] sm:$0xff]
      %v1635 = vld [vmem:[#allocation5 + $0x4e0] sm:$0xff]
      %v1636 = vld [vmem:[#allocation5 + $0x4e8] sm:$0xff]
      %v1637 = vld [vmem:[#allocation5 + $0x4f0] sm:$0xff]
      %v1638 = vld [vmem:[#allocation5 + $0x4f8] sm:$0xff]
      %v1639 = vld [vmem:[#allocation5 + $0x500] sm:$0xff]
      %v1640 = vld [vmem:[#allocation5 + $0x508] sm:$0xff]
      %v1641 = vld [vmem:[#allocation5 + $0x510] sm:$0xff]
      %v1642 = vld [vmem:[#allocation5 + $0x518] sm:$0xff]
      %v1643 = vld [vmem:[#allocation5 + $0x520] sm:$0xff]
      %v1644 = vld [vmem:[#allocation5 + $0x528] sm:$0xff]
      %v1645 = vld [vmem:[#allocation5 + $0x530] sm:$0xff]
      %v1646 = vld [vmem:[#allocation5 + $0x538] sm:$0xff]
      %v1647 = vld [vmem:[#allocation5 + $0x540] sm:$0xff]
      %v1648 = vld [vmem:[#allocation5 + $0x548] sm:$0xff]
      %v1649 = vld [vmem:[#allocation5 + $0x550] sm:$0xff]
      %v1650 = vld [vmem:[#allocation5 + $0x558] sm:$0xff]
      %v1651 = vld [vmem:[#allocation5 + $0x560] sm:$0xff]
      %v1652 = vld [vmem:[#allocation5 + $0x568] sm:$0xff]
      %v1653 = vld [vmem:[#allocation5 + $0x570] sm:$0xff]
      %v1654 = vld [vmem:[#allocation5 + $0x578] sm:$0xff]
      %v1655 = vld [vmem:[#allocation5 + $0x580] sm:$0xff]
      %v1656 = vld [vmem:[#allocation5 + $0x588] sm:$0xff]
      %v1657 = vld [vmem:[#allocation5 + $0x590] sm:$0xff]
      %v1658 = vld [vmem:[#allocation5 + $0x598] sm:$0xff]
      %v1659 = vld [vmem:[#allocation5 + $0x5a0] sm:$0xff]
      %v1660 = vld [vmem:[#allocation5 + $0x5a8] sm:$0xff]
      %v1661 = vld [vmem:[#allocation5 + $0x5b0] sm:$0xff]
      %v1662 = vld [vmem:[#allocation5 + $0x5b8] sm:$0xff]
      %v1663 = vld [vmem:[#allocation5 + $0x5c0] sm:$0xff]
      %v1664 = vld [vmem:[#allocation5 + $0x5c8] sm:$0xff]
      %v1665 = vld [vmem:[#allocation5 + $0x5d0] sm:$0xff]
      %v1666 = vld [vmem:[#allocation5 + $0x5d8] sm:$0xff]
      %v1667 = vld [vmem:[#allocation5 + $0x5e0] sm:$0xff]
      %v1668 = vld [vmem:[#allocation5 + $0x5e8] sm:$0xff]
      %v1669 = vld [vmem:[#allocation5 + $0x5f0] sm:$0xff]
      %v1670 = vld [vmem:[#allocation5 + $0x5f8] sm:$0xff]
      %v1671 = vld [vmem:[#allocation5 + $0x600] sm:$0xff]
      %v1672 = vld [vmem:[#allocation5 + $0x608] sm:$0xff]
      %v1673 = vld [vmem:[#allocation5 + $0x610] sm:$0xff]
      %v1674 = vld [vmem:[#allocation5 + $0x618] sm:$0xff]
      %v1675 = vld [vmem:[#allocation5 + $0x620] sm:$0xff]
      %v1676 = vld [vmem:[#allocation5 + $0x628] sm:$0xff]
      %v1677 = vld [vmem:[#allocation5 + $0x630] sm:$0xff]
      %v1678 = vld [vmem:[#allocation5 + $0x638] sm:$0xff]
      %v1679 = vld [vmem:[#allocation5 + $0x640] sm:$0xff]
      %v1680 = vld [vmem:[#allocation5 + $0x648] sm:$0xff]
      %v1681 = vld [vmem:[#allocation5 + $0x650] sm:$0xff]
      %v1682 = vld [vmem:[#allocation5 + $0x658] sm:$0xff]
      %v1683 = vld [vmem:[#allocation5 + $0x660] sm:$0xff]
      %v1684 = vld [vmem:[#allocation5 + $0x668] sm:$0xff]
      %v1685 = vld [vmem:[#allocation5 + $0x670] sm:$0xff]
      %v1686 = vld [vmem:[#allocation5 + $0x678] sm:$0xff]
      %v1687 = vld [vmem:[#allocation5 + $0x680] sm:$0xff]
      %v1688 = vld [vmem:[#allocation5 + $0x688] sm:$0xff]
      %v1689 = vld [vmem:[#allocation5 + $0x690] sm:$0xff]
      %v1690 = vld [vmem:[#allocation5 + $0x698] sm:$0xff]
      %v1691 = vld [vmem:[#allocation5 + $0x6a0] sm:$0xff]
      %v1692 = vld [vmem:[#allocation5 + $0x6a8] sm:$0xff]
      %v1693 = vld [vmem:[#allocation5 + $0x6b0] sm:$0xff]
      %v1694 = vld [vmem:[#allocation5 + $0x6b8] sm:$0xff]
      %v1695 = vld [vmem:[#allocation5 + $0x6c0] sm:$0xff]
      %v1696 = vld [vmem:[#allocation5 + $0x6c8] sm:$0xff]
      %v1697 = vld [vmem:[#allocation5 + $0x6d0] sm:$0xff]
      %v1698 = vld [vmem:[#allocation5 + $0x6d8] sm:$0xff]
      %v1699 = vld [vmem:[#allocation5 + $0x6e0] sm:$0xff]
      %v1700 = vld [vmem:[#allocation5 + $0x6e8] sm:$0xff]
      %v1701 = vld [vmem:[#allocation5 + $0x6f0] sm:$0xff]
      %v1702 = vld [vmem:[#allocation5 + $0x6f8] sm:$0xff]
      %v1703 = vld [vmem:[#allocation5 + $0x700] sm:$0xff]
      %v1704 = vld [vmem:[#allocation5 + $0x708] sm:$0xff]
      %v1705 = vld [vmem:[#allocation5 + $0x710] sm:$0xff]
      %v1706 = vld [vmem:[#allocation5 + $0x718] sm:$0xff]
      %v1707 = vld [vmem:[#allocation5 + $0x720] sm:$0xff]
      %v1708 = vld [vmem:[#allocation5 + $0x728] sm:$0xff]
      %v1709 = vld [vmem:[#allocation5 + $0x730] sm:$0xff]
      %v1710 = vld [vmem:[#allocation5 + $0x738] sm:$0xff]
      %v1711 = vld [vmem:[#allocation5 + $0x740] sm:$0xff]
      %v1712 = vld [vmem:[#allocation5 + $0x748] sm:$0xff]
      %v1713 = vld [vmem:[#allocation5 + $0x750] sm:$0xff]
      %v1714 = vld [vmem:[#allocation5 + $0x758] sm:$0xff]
      %v1715 = vld [vmem:[#allocation5 + $0x760] sm:$0xff]
      %v1716 = vld [vmem:[#allocation5 + $0x768] sm:$0xff]
      %v1717 = vld [vmem:[#allocation5 + $0x770] sm:$0xff]
      %v1718 = vld [vmem:[#allocation5 + $0x778] sm:$0xff]
      %v1719 = vld [vmem:[#allocation5 + $0x780] sm:$0xff]
      %v1720 = vld [vmem:[#allocation5 + $0x788] sm:$0xff]
      %v1721 = vld [vmem:[#allocation5 + $0x790] sm:$0xff]
      %v1722 = vld [vmem:[#allocation5 + $0x798] sm:$0xff]
      %v1723 = vld [vmem:[#allocation5 + $0x7a0] sm:$0xff]
      %v1724 = vld [vmem:[#allocation5 + $0x7a8] sm:$0xff]
      %v1725 = vld [vmem:[#allocation5 + $0x7b0] sm:$0xff]
      %v1726 = vld [vmem:[#allocation5 + $0x7b8] sm:$0xff]
      %v1727 = vld [vmem:[#allocation5 + $0x7c0] sm:$0xff]
      %v1728 = vld [vmem:[#allocation5 + $0x7c8] sm:$0xff]
      %v1729 = vld [vmem:[#allocation5 + $0x7d0] sm:$0xff]
      %v1730 = vld [vmem:[#allocation5 + $0x7d8] sm:$0xff]
      %v1731 = vld [vmem:[#allocation5 + $0x7e0] sm:$0xff]
      %v1732 = vld [vmem:[#allocation5 + $0x7e8] sm:$0xff]
      %v1733 = vld [vmem:[#allocation5 + $0x7f0] sm:$0xff]
      %v1734 = vld [vmem:[#allocation5 + $0x7f8] sm:$0xff]
      %v1735 = vld [vmem:[%s8] sm:$0xf]
      %v1737 = vlaneseq
      %v1738 = vshrl.u32 %v1737, 7
      %v1739 = vsub.s32 0, %v1738
      %v1740 = vrot.slane %v1735, %v1739
      %v1741 = vlaneseq
      %v1742 = vshrl.u32 %v1741, 7
      %v1743 = vsub.s32 1, %v1742
      %v1744 = vrot.slane %v1735, %v1743
      %v1745 = vlaneseq
      %v1746 = vshrl.u32 %v1745, 7
      %v1747 = vsub.s32 2, %v1746
      %v1748 = vrot.slane %v1735, %v1747
      %v1749 = vlaneseq
      %v1750 = vshrl.u32 %v1749, 7
      %v1751 = vsub.s32 3, %v1750
      %v1752 = vrot.slane %v1735, %v1751
      %v2013 = vunpack.c.l.b16 %v1479
      %v2014 = vunpack.c.h.b16 %v1479
      %v2015 = vunpack.c.l.b16 %v1480
      %v2016 = vunpack.c.h.b16 %v1480
      %v2017 = vunpack.c.l.b16 %v1481
      %v2018 = vunpack.c.h.b16 %v1481
      %v2019 = vunpack.c.l.b16 %v1482
      %v2020 = vunpack.c.h.b16 %v1482
      %v2021 = vunpack.c.l.b16 %v1483
      %v2022 = vunpack.c.h.b16 %v1483
      %v2023 = vunpack.c.l.b16 %v1484
      %v2024 = vunpack.c.h.b16 %v1484
      %v2025 = vunpack.c.l.b16 %v1485
      %v2026 = vunpack.c.h.b16 %v1485
      %v2027 = vunpack.c.l.b16 %v1486
      %v2028 = vunpack.c.h.b16 %v1486
      %v2029 = vunpack.c.l.b16 %v1487
      %v2030 = vunpack.c.h.b16 %v1487
      %v2031 = vunpack.c.l.b16 %v1488
      %v2032 = vunpack.c.h.b16 %v1488
      %v2033 = vunpack.c.l.b16 %v1489
      %v2034 = vunpack.c.h.b16 %v1489
      %v2035 = vunpack.c.l.b16 %v1490
      %v2036 = vunpack.c.h.b16 %v1490
      %v2037 = vunpack.c.l.b16 %v1491
      %v2038 = vunpack.c.h.b16 %v1491
      %v2039 = vunpack.c.l.b16 %v1492
      %v2040 = vunpack.c.h.b16 %v1492
      %v2041 = vunpack.c.l.b16 %v1493
      %v2042 = vunpack.c.h.b16 %v1493
      %v2043 = vunpack.c.l.b16 %v1494
      %v2044 = vunpack.c.h.b16 %v1494
      %v2045 = vunpack.c.l.b16 %v1495
      %v2046 = vunpack.c.h.b16 %v1495
      %v2047 = vunpack.c.l.b16 %v1496
      %v2048 = vunpack.c.h.b16 %v1496
      %v2049 = vunpack.c.l.b16 %v1497
      %v2050 = vunpack.c.h.b16 %v1497
      %v2051 = vunpack.c.l.b16 %v1498
      %v2052 = vunpack.c.h.b16 %v1498
      %v2053 = vunpack.c.l.b16 %v1499
      %v2054 = vunpack.c.h.b16 %v1499
      %v2055 = vunpack.c.l.b16 %v1500
      %v2056 = vunpack.c.h.b16 %v1500
      %v2057 = vunpack.c.l.b16 %v1501
      %v2058 = vunpack.c.h.b16 %v1501
      %v2059 = vunpack.c.l.b16 %v1502
      %v2060 = vunpack.c.h.b16 %v1502
      %v2061 = vunpack.c.l.b16 %v1503
      %v2062 = vunpack.c.h.b16 %v1503
      %v2063 = vunpack.c.l.b16 %v1504
      %v2064 = vunpack.c.h.b16 %v1504
      %v2065 = vunpack.c.l.b16 %v1505
      %v2066 = vunpack.c.h.b16 %v1505
      %v2067 = vunpack.c.l.b16 %v1506
      %v2068 = vunpack.c.h.b16 %v1506
      %v2069 = vunpack.c.l.b16 %v1507
      %v2070 = vunpack.c.h.b16 %v1507
      %v2071 = vunpack.c.l.b16 %v1508
      %v2072 = vunpack.c.h.b16 %v1508
      %v2073 = vunpack.c.l.b16 %v1509
      %v2074 = vunpack.c.h.b16 %v1509
      %v2075 = vunpack.c.l.b16 %v1510
      %v2076 = vunpack.c.h.b16 %v1510
      %v2077 = vunpack.c.l.b16 %v1511
      %v2078 = vunpack.c.h.b16 %v1511
      %v2079 = vunpack.c.l.b16 %v1512
      %v2080 = vunpack.c.h.b16 %v1512
      %v2081 = vunpack.c.l.b16 %v1513
      %v2082 = vunpack.c.h.b16 %v1513
      %v2083 = vunpack.c.l.b16 %v1514
      %v2084 = vunpack.c.h.b16 %v1514
      %v2085 = vunpack.c.l.b16 %v1515
      %v2086 = vunpack.c.h.b16 %v1515
      %v2087 = vunpack.c.l.b16 %v1516
      %v2088 = vunpack.c.h.b16 %v1516
      %v2089 = vunpack.c.l.b16 %v1517
      %v2090 = vunpack.c.h.b16 %v1517
      %v2091 = vunpack.c.l.b16 %v1518
      %v2092 = vunpack.c.h.b16 %v1518
      %v2093 = vunpack.c.l.b16 %v1519
      %v2094 = vunpack.c.h.b16 %v1519
      %v2095 = vunpack.c.l.b16 %v1520
      %v2096 = vunpack.c.h.b16 %v1520
      %v2097 = vunpack.c.l.b16 %v1521
      %v2098 = vunpack.c.h.b16 %v1521
      %v2099 = vunpack.c.l.b16 %v1522
      %v2100 = vunpack.c.h.b16 %v1522
      %v2101 = vunpack.c.l.b16 %v1523
      %v2102 = vunpack.c.h.b16 %v1523
      %v2103 = vunpack.c.l.b16 %v1524
      %v2104 = vunpack.c.h.b16 %v1524
      %v2105 = vunpack.c.l.b16 %v1525
      %v2106 = vunpack.c.h.b16 %v1525
      %v2107 = vunpack.c.l.b16 %v1526
      %v2108 = vunpack.c.h.b16 %v1526
      %v2109 = vunpack.c.l.b16 %v1527
      %v2110 = vunpack.c.h.b16 %v1527
      %v2111 = vunpack.c.l.b16 %v1528
      %v2112 = vunpack.c.h.b16 %v1528
      %v2113 = vunpack.c.l.b16 %v1529
      %v2114 = vunpack.c.h.b16 %v1529
      %v2115 = vunpack.c.l.b16 %v1530
      %v2116 = vunpack.c.h.b16 %v1530
      %v2117 = vunpack.c.l.b16 %v1531
      %v2118 = vunpack.c.h.b16 %v1531
      %v2119 = vunpack.c.l.b16 %v1532
      %v2120 = vunpack.c.h.b16 %v1532
      %v2121 = vunpack.c.l.b16 %v1533
      %v2122 = vunpack.c.h.b16 %v1533
      %v2123 = vunpack.c.l.b16 %v1534
      %v2124 = vunpack.c.h.b16 %v1534
      %v2125 = vunpack.c.l.b16 %v1535
      %v2126 = vunpack.c.h.b16 %v1535
      %v2127 = vunpack.c.l.b16 %v1536
      %v2128 = vunpack.c.h.b16 %v1536
      %v2129 = vunpack.c.l.b16 %v1537
      %v2130 = vunpack.c.h.b16 %v1537
      %v2131 = vunpack.c.l.b16 %v1538
      %v2132 = vunpack.c.h.b16 %v1538
      %v2133 = vunpack.c.l.b16 %v1539
      %v2134 = vunpack.c.h.b16 %v1539
      %v2135 = vunpack.c.l.b16 %v1540
      %v2136 = vunpack.c.h.b16 %v1540
      %v2137 = vunpack.c.l.b16 %v1541
      %v2138 = vunpack.c.h.b16 %v1541
      %v2139 = vunpack.c.l.b16 %v1542
      %v2140 = vunpack.c.h.b16 %v1542
      %v2141 = vunpack.c.l.b16 %v1543
      %v2142 = vunpack.c.h.b16 %v1543
      %v2143 = vunpack.c.l.b16 %v1544
      %v2144 = vunpack.c.h.b16 %v1544
      %v2145 = vunpack.c.l.b16 %v1545
      %v2146 = vunpack.c.h.b16 %v1545
      %v2147 = vunpack.c.l.b16 %v1546
      %v2148 = vunpack.c.h.b16 %v1546
      %v2149 = vunpack.c.l.b16 %v1547
      %v2150 = vunpack.c.h.b16 %v1547
      %v2151 = vunpack.c.l.b16 %v1548
      %v2152 = vunpack.c.h.b16 %v1548
      %v2153 = vunpack.c.l.b16 %v1549
      %v2154 = vunpack.c.h.b16 %v1549
      %v2155 = vunpack.c.l.b16 %v1550
      %v2156 = vunpack.c.h.b16 %v1550
      %v2157 = vunpack.c.l.b16 %v1551
      %v2158 = vunpack.c.h.b16 %v1551
      %v2159 = vunpack.c.l.b16 %v1552
      %v2160 = vunpack.c.h.b16 %v1552
      %v2161 = vunpack.c.l.b16 %v1553
      %v2162 = vunpack.c.h.b16 %v1553
      %v2163 = vunpack.c.l.b16 %v1554
      %v2164 = vunpack.c.h.b16 %v1554
      %v2165 = vunpack.c.l.b16 %v1555
      %v2166 = vunpack.c.h.b16 %v1555
      %v2167 = vunpack.c.l.b16 %v1556
      %v2168 = vunpack.c.h.b16 %v1556
      %v2169 = vunpack.c.l.b16 %v1557
      %v2170 = vunpack.c.h.b16 %v1557
      %v2171 = vunpack.c.l.b16 %v1558
      %v2172 = vunpack.c.h.b16 %v1558
      %v2173 = vunpack.c.l.b16 %v1559
      %v2174 = vunpack.c.h.b16 %v1559
      %v2175 = vunpack.c.l.b16 %v1560
      %v2176 = vunpack.c.h.b16 %v1560
      %v2177 = vunpack.c.l.b16 %v1561
      %v2178 = vunpack.c.h.b16 %v1561
      %v2179 = vunpack.c.l.b16 %v1562
      %v2180 = vunpack.c.h.b16 %v1562
      %v2181 = vunpack.c.l.b16 %v1563
      %v2182 = vunpack.c.h.b16 %v1563
      %v2183 = vunpack.c.l.b16 %v1564
      %v2184 = vunpack.c.h.b16 %v1564
      %v2185 = vunpack.c.l.b16 %v1565
      %v2186 = vunpack.c.h.b16 %v1565
      %v2187 = vunpack.c.l.b16 %v1566
      %v2188 = vunpack.c.h.b16 %v1566
      %v2189 = vunpack.c.l.b16 %v1567
      %v2190 = vunpack.c.h.b16 %v1567
      %v2191 = vunpack.c.l.b16 %v1568
      %v2192 = vunpack.c.h.b16 %v1568
      %v2193 = vunpack.c.l.b16 %v1569
      %v2194 = vunpack.c.h.b16 %v1569
      %v2195 = vunpack.c.l.b16 %v1570
      %v2196 = vunpack.c.h.b16 %v1570
      %v2197 = vunpack.c.l.b16 %v1571
      %v2198 = vunpack.c.h.b16 %v1571
      %v2199 = vunpack.c.l.b16 %v1572
      %v2200 = vunpack.c.h.b16 %v1572
      %v2201 = vunpack.c.l.b16 %v1573
      %v2202 = vunpack.c.h.b16 %v1573
      %v2203 = vunpack.c.l.b16 %v1574
      %v2204 = vunpack.c.h.b16 %v1574
      %v2205 = vunpack.c.l.b16 %v1575
      %v2206 = vunpack.c.h.b16 %v1575
      %v2207 = vunpack.c.l.b16 %v1576
      %v2208 = vunpack.c.h.b16 %v1576
      %v2209 = vunpack.c.l.b16 %v1577
      %v2210 = vunpack.c.h.b16 %v1577
      %v2211 = vunpack.c.l.b16 %v1578
      %v2212 = vunpack.c.h.b16 %v1578
      %v2213 = vunpack.c.l.b16 %v1579
      %v2214 = vunpack.c.h.b16 %v1579
      %v2215 = vunpack.c.l.b16 %v1580
      %v2216 = vunpack.c.h.b16 %v1580
      %v2217 = vunpack.c.l.b16 %v1581
      %v2218 = vunpack.c.h.b16 %v1581
      %v2219 = vunpack.c.l.b16 %v1582
      %v2220 = vunpack.c.h.b16 %v1582
      %v2221 = vunpack.c.l.b16 %v1583
      %v2222 = vunpack.c.h.b16 %v1583
      %v2223 = vunpack.c.l.b16 %v1584
      %v2224 = vunpack.c.h.b16 %v1584
      %v2225 = vunpack.c.l.b16 %v1585
      %v2226 = vunpack.c.h.b16 %v1585
      %v2227 = vunpack.c.l.b16 %v1586
      %v2228 = vunpack.c.h.b16 %v1586
      %v2229 = vunpack.c.l.b16 %v1587
      %v2230 = vunpack.c.h.b16 %v1587
      %v2231 = vunpack.c.l.b16 %v1588
      %v2232 = vunpack.c.h.b16 %v1588
      %v2233 = vunpack.c.l.b16 %v1589
      %v2234 = vunpack.c.h.b16 %v1589
      %v2235 = vunpack.c.l.b16 %v1590
      %v2236 = vunpack.c.h.b16 %v1590
      %v2237 = vunpack.c.l.b16 %v1591
      %v2238 = vunpack.c.h.b16 %v1591
      %v2239 = vunpack.c.l.b16 %v1592
      %v2240 = vunpack.c.h.b16 %v1592
      %v2241 = vunpack.c.l.b16 %v1593
      %v2242 = vunpack.c.h.b16 %v1593
      %v2243 = vunpack.c.l.b16 %v1594
      %v2244 = vunpack.c.h.b16 %v1594
      %v2245 = vunpack.c.l.b16 %v1595
      %v2246 = vunpack.c.h.b16 %v1595
      %v2247 = vunpack.c.l.b16 %v1596
      %v2248 = vunpack.c.h.b16 %v1596
      %v2249 = vunpack.c.l.b16 %v1597
      %v2250 = vunpack.c.h.b16 %v1597
      %v2251 = vunpack.c.l.b16 %v1598
      %v2252 = vunpack.c.h.b16 %v1598
      %v2253 = vunpack.c.l.b16 %v1599
      %v2254 = vunpack.c.h.b16 %v1599
      %v2255 = vunpack.c.l.b16 %v1600
      %v2256 = vunpack.c.h.b16 %v1600
      %v2257 = vunpack.c.l.b16 %v1601
      %v2258 = vunpack.c.h.b16 %v1601
      %v2259 = vunpack.c.l.b16 %v1602
      %v2260 = vunpack.c.h.b16 %v1602
      %v2261 = vunpack.c.l.b16 %v1603
      %v2262 = vunpack.c.h.b16 %v1603
      %v2263 = vunpack.c.l.b16 %v1604
      %v2264 = vunpack.c.h.b16 %v1604
      %v2265 = vunpack.c.l.b16 %v1605
      %v2266 = vunpack.c.h.b16 %v1605
      %v2267 = vunpack.c.l.b16 %v1606
      %v2268 = vunpack.c.h.b16 %v1606
      %v2269 = vunpack.c.l.b16 %v1607
      %v2270 = vunpack.c.h.b16 %v1607
      %v2271 = vunpack.c.l.b16 %v1608
      %v2272 = vunpack.c.h.b16 %v1608
      %v2273 = vunpack.c.l.b16 %v1609
      %v2274 = vunpack.c.h.b16 %v1609
      %v2275 = vunpack.c.l.b16 %v1610
      %v2276 = vunpack.c.h.b16 %v1610
      %v2277 = vunpack.c.l.b16 %v1611
      %v2278 = vunpack.c.h.b16 %v1611
      %v2279 = vunpack.c.l.b16 %v1612
      %v2280 = vunpack.c.h.b16 %v1612
      %v2281 = vunpack.c.l.b16 %v1613
      %v2282 = vunpack.c.h.b16 %v1613
      %v2283 = vunpack.c.l.b16 %v1614
      %v2284 = vunpack.c.h.b16 %v1614
      %v2285 = vunpack.c.l.b16 %v1615
      %v2286 = vunpack.c.h.b16 %v1615
      %v2287 = vunpack.c.l.b16 %v1616
      %v2288 = vunpack.c.h.b16 %v1616
      %v2289 = vunpack.c.l.b16 %v1617
      %v2290 = vunpack.c.h.b16 %v1617
      %v2291 = vunpack.c.l.b16 %v1618
      %v2292 = vunpack.c.h.b16 %v1618
      %v2293 = vunpack.c.l.b16 %v1619
      %v2294 = vunpack.c.h.b16 %v1619
      %v2295 = vunpack.c.l.b16 %v1620
      %v2296 = vunpack.c.h.b16 %v1620
      %v2297 = vunpack.c.l.b16 %v1621
      %v2298 = vunpack.c.h.b16 %v1621
      %v2299 = vunpack.c.l.b16 %v1622
      %v2300 = vunpack.c.h.b16 %v1622
      %v2301 = vunpack.c.l.b16 %v1623
      %v2302 = vunpack.c.h.b16 %v1623
      %v2303 = vunpack.c.l.b16 %v1624
      %v2304 = vunpack.c.h.b16 %v1624
      %v2305 = vunpack.c.l.b16 %v1625
      %v2306 = vunpack.c.h.b16 %v1625
      %v2307 = vunpack.c.l.b16 %v1626
      %v2308 = vunpack.c.h.b16 %v1626
      %v2309 = vunpack.c.l.b16 %v1627
      %v2310 = vunpack.c.h.b16 %v1627
      %v2311 = vunpack.c.l.b16 %v1628
      %v2312 = vunpack.c.h.b16 %v1628
      %v2313 = vunpack.c.l.b16 %v1629
      %v2314 = vunpack.c.h.b16 %v1629
      %v2315 = vunpack.c.l.b16 %v1630
      %v2316 = vunpack.c.h.b16 %v1630
      %v2317 = vunpack.c.l.b16 %v1631
      %v2318 = vunpack.c.h.b16 %v1631
      %v2319 = vunpack.c.l.b16 %v1632
      %v2320 = vunpack.c.h.b16 %v1632
      %v2321 = vunpack.c.l.b16 %v1633
      %v2322 = vunpack.c.h.b16 %v1633
      %v2323 = vunpack.c.l.b16 %v1634
      %v2324 = vunpack.c.h.b16 %v1634
      %v2325 = vunpack.c.l.b16 %v1635
      %v2326 = vunpack.c.h.b16 %v1635
      %v2327 = vunpack.c.l.b16 %v1636
      %v2328 = vunpack.c.h.b16 %v1636
      %v2329 = vunpack.c.l.b16 %v1637
      %v2330 = vunpack.c.h.b16 %v1637
      %v2331 = vunpack.c.l.b16 %v1638
      %v2332 = vunpack.c.h.b16 %v1638
      %v2333 = vunpack.c.l.b16 %v1639
      %v2334 = vunpack.c.h.b16 %v1639
      %v2335 = vunpack.c.l.b16 %v1640
      %v2336 = vunpack.c.h.b16 %v1640
      %v2337 = vunpack.c.l.b16 %v1641
      %v2338 = vunpack.c.h.b16 %v1641
      %v2339 = vunpack.c.l.b16 %v1642
      %v2340 = vunpack.c.h.b16 %v1642
      %v2341 = vunpack.c.l.b16 %v1643
      %v2342 = vunpack.c.h.b16 %v1643
      %v2343 = vunpack.c.l.b16 %v1644
      %v2344 = vunpack.c.h.b16 %v1644
      %v2345 = vunpack.c.l.b16 %v1645
      %v2346 = vunpack.c.h.b16 %v1645
      %v2347 = vunpack.c.l.b16 %v1646
      %v2348 = vunpack.c.h.b16 %v1646
      %v2349 = vunpack.c.l.b16 %v1647
      %v2350 = vunpack.c.h.b16 %v1647
      %v2351 = vunpack.c.l.b16 %v1648
      %v2352 = vunpack.c.h.b16 %v1648
      %v2353 = vunpack.c.l.b16 %v1649
      %v2354 = vunpack.c.h.b16 %v1649
      %v2355 = vunpack.c.l.b16 %v1650
      %v2356 = vunpack.c.h.b16 %v1650
      %v2357 = vunpack.c.l.b16 %v1651
      %v2358 = vunpack.c.h.b16 %v1651
      %v2359 = vunpack.c.l.b16 %v1652
      %v2360 = vunpack.c.h.b16 %v1652
      %v2361 = vunpack.c.l.b16 %v1653
      %v2362 = vunpack.c.h.b16 %v1653
      %v2363 = vunpack.c.l.b16 %v1654
      %v2364 = vunpack.c.h.b16 %v1654
      %v2365 = vunpack.c.l.b16 %v1655
      %v2366 = vunpack.c.h.b16 %v1655
      %v2367 = vunpack.c.l.b16 %v1656
      %v2368 = vunpack.c.h.b16 %v1656
      %v2369 = vunpack.c.l.b16 %v1657
      %v2370 = vunpack.c.h.b16 %v1657
      %v2371 = vunpack.c.l.b16 %v1658
      %v2372 = vunpack.c.h.b16 %v1658
      %v2373 = vunpack.c.l.b16 %v1659
      %v2374 = vunpack.c.h.b16 %v1659
      %v2375 = vunpack.c.l.b16 %v1660
      %v2376 = vunpack.c.h.b16 %v1660
      %v2377 = vunpack.c.l.b16 %v1661
      %v2378 = vunpack.c.h.b16 %v1661
      %v2379 = vunpack.c.l.b16 %v1662
      %v2380 = vunpack.c.h.b16 %v1662
      %v2381 = vunpack.c.l.b16 %v1663
      %v2382 = vunpack.c.h.b16 %v1663
      %v2383 = vunpack.c.l.b16 %v1664
      %v2384 = vunpack.c.h.b16 %v1664
      %v2385 = vunpack.c.l.b16 %v1665
      %v2386 = vunpack.c.h.b16 %v1665
      %v2387 = vunpack.c.l.b16 %v1666
      %v2388 = vunpack.c.h.b16 %v1666
      %v2389 = vunpack.c.l.b16 %v1667
      %v2390 = vunpack.c.h.b16 %v1667
      %v2391 = vunpack.c.l.b16 %v1668
      %v2392 = vunpack.c.h.b16 %v1668
      %v2393 = vunpack.c.l.b16 %v1669
      %v2394 = vunpack.c.h.b16 %v1669
      %v2395 = vunpack.c.l.b16 %v1670
      %v2396 = vunpack.c.h.b16 %v1670
      %v2397 = vunpack.c.l.b16 %v1671
      %v2398 = vunpack.c.h.b16 %v1671
      %v2399 = vunpack.c.l.b16 %v1672
      %v2400 = vunpack.c.h.b16 %v1672
      %v2401 = vunpack.c.l.b16 %v1673
      %v2402 = vunpack.c.h.b16 %v1673
      %v2403 = vunpack.c.l.b16 %v1674
      %v2404 = vunpack.c.h.b16 %v1674
      %v2405 = vunpack.c.l.b16 %v1675
      %v2406 = vunpack.c.h.b16 %v1675
      %v2407 = vunpack.c.l.b16 %v1676
      %v2408 = vunpack.c.h.b16 %v1676
      %v2409 = vunpack.c.l.b16 %v1677
      %v2410 = vunpack.c.h.b16 %v1677
      %v2411 = vunpack.c.l.b16 %v1678
      %v2412 = vunpack.c.h.b16 %v1678
      %v2413 = vunpack.c.l.b16 %v1679
      %v2414 = vunpack.c.h.b16 %v1679
      %v2415 = vunpack.c.l.b16 %v1680
      %v2416 = vunpack.c.h.b16 %v1680
      %v2417 = vunpack.c.l.b16 %v1681
      %v2418 = vunpack.c.h.b16 %v1681
      %v2419 = vunpack.c.l.b16 %v1682
      %v2420 = vunpack.c.h.b16 %v1682
      %v2421 = vunpack.c.l.b16 %v1683
      %v2422 = vunpack.c.h.b16 %v1683
      %v2423 = vunpack.c.l.b16 %v1684
      %v2424 = vunpack.c.h.b16 %v1684
      %v2425 = vunpack.c.l.b16 %v1685
      %v2426 = vunpack.c.h.b16 %v1685
      %v2427 = vunpack.c.l.b16 %v1686
      %v2428 = vunpack.c.h.b16 %v1686
      %v2429 = vunpack.c.l.b16 %v1687
      %v2430 = vunpack.c.h.b16 %v1687
      %v2431 = vunpack.c.l.b16 %v1688
      %v2432 = vunpack.c.h.b16 %v1688
      %v2433 = vunpack.c.l.b16 %v1689
      %v2434 = vunpack.c.h.b16 %v1689
      %v2435 = vunpack.c.l.b16 %v1690
      %v2436 = vunpack.c.h.b16 %v1690
      %v2437 = vunpack.c.l.b16 %v1691
      %v2438 = vunpack.c.h.b16 %v1691
      %v2439 = vunpack.c.l.b16 %v1692
      %v2440 = vunpack.c.h.b16 %v1692
      %v2441 = vunpack.c.l.b16 %v1693
      %v2442 = vunpack.c.h.b16 %v1693
      %v2443 = vunpack.c.l.b16 %v1694
      %v2444 = vunpack.c.h.b16 %v1694
      %v2445 = vunpack.c.l.b16 %v1695
      %v2446 = vunpack.c.h.b16 %v1695
      %v2447 = vunpack.c.l.b16 %v1696
      %v2448 = vunpack.c.h.b16 %v1696
      %v2449 = vunpack.c.l.b16 %v1697
      %v2450 = vunpack.c.h.b16 %v1697
      %v2451 = vunpack.c.l.b16 %v1698
      %v2452 = vunpack.c.h.b16 %v1698
      %v2453 = vunpack.c.l.b16 %v1699
      %v2454 = vunpack.c.h.b16 %v1699
      %v2455 = vunpack.c.l.b16 %v1700
      %v2456 = vunpack.c.h.b16 %v1700
      %v2457 = vunpack.c.l.b16 %v1701
      %v2458 = vunpack.c.h.b16 %v1701
      %v2459 = vunpack.c.l.b16 %v1702
      %v2460 = vunpack.c.h.b16 %v1702
      %v2461 = vunpack.c.l.b16 %v1703
      %v2462 = vunpack.c.h.b16 %v1703
      %v2463 = vunpack.c.l.b16 %v1704
      %v2464 = vunpack.c.h.b16 %v1704
      %v2465 = vunpack.c.l.b16 %v1705
      %v2466 = vunpack.c.h.b16 %v1705
      %v2467 = vunpack.c.l.b16 %v1706
      %v2468 = vunpack.c.h.b16 %v1706
      %v2469 = vunpack.c.l.b16 %v1707
      %v2470 = vunpack.c.h.b16 %v1707
      %v2471 = vunpack.c.l.b16 %v1708
      %v2472 = vunpack.c.h.b16 %v1708
      %v2473 = vunpack.c.l.b16 %v1709
      %v2474 = vunpack.c.h.b16 %v1709
      %v2475 = vunpack.c.l.b16 %v1710
      %v2476 = vunpack.c.h.b16 %v1710
      %v2477 = vunpack.c.l.b16 %v1711
      %v2478 = vunpack.c.h.b16 %v1711
      %v2479 = vunpack.c.l.b16 %v1712
      %v2480 = vunpack.c.h.b16 %v1712
      %v2481 = vunpack.c.l.b16 %v1713
      %v2482 = vunpack.c.h.b16 %v1713
      %v2483 = vunpack.c.l.b16 %v1714
      %v2484 = vunpack.c.h.b16 %v1714
      %v2485 = vunpack.c.l.b16 %v1715
      %v2486 = vunpack.c.h.b16 %v1715
      %v2487 = vunpack.c.l.b16 %v1716
      %v2488 = vunpack.c.h.b16 %v1716
      %v2489 = vunpack.c.l.b16 %v1717
      %v2490 = vunpack.c.h.b16 %v1717
      %v2491 = vunpack.c.l.b16 %v1718
      %v2492 = vunpack.c.h.b16 %v1718
      %v2493 = vunpack.c.l.b16 %v1719
      %v2494 = vunpack.c.h.b16 %v1719
      %v2495 = vunpack.c.l.b16 %v1720
      %v2496 = vunpack.c.h.b16 %v1720
      %v2497 = vunpack.c.l.b16 %v1721
      %v2498 = vunpack.c.h.b16 %v1721
      %v2499 = vunpack.c.l.b16 %v1722
      %v2500 = vunpack.c.h.b16 %v1722
      %v2501 = vunpack.c.l.b16 %v1723
      %v2502 = vunpack.c.h.b16 %v1723
      %v2503 = vunpack.c.l.b16 %v1724
      %v2504 = vunpack.c.h.b16 %v1724
      %v2505 = vunpack.c.l.b16 %v1725
      %v2506 = vunpack.c.h.b16 %v1725
      %v2507 = vunpack.c.l.b16 %v1726
      %v2508 = vunpack.c.h.b16 %v1726
      %v2509 = vunpack.c.l.b16 %v1727
      %v2510 = vunpack.c.h.b16 %v1727
      %v2511 = vunpack.c.l.b16 %v1728
      %v2512 = vunpack.c.h.b16 %v1728
      %v2513 = vunpack.c.l.b16 %v1729
      %v2514 = vunpack.c.h.b16 %v1729
      %v2515 = vunpack.c.l.b16 %v1730
      %v2516 = vunpack.c.h.b16 %v1730
      %v2517 = vunpack.c.l.b16 %v1731
      %v2518 = vunpack.c.h.b16 %v1731
      %v2519 = vunpack.c.l.b16 %v1732
      %v2520 = vunpack.c.h.b16 %v1732
      %v2521 = vunpack.c.l.b16 %v1733
      %v2522 = vunpack.c.h.b16 %v1733
      %v2523 = vunpack.c.l.b16 %v1734
      %v2524 = vunpack.c.h.b16 %v1734
      %v2525 = vpack.c.b16 %v2017, %v2013
      %v2526 = vpack.c.b16 %v2018, %v2014
      %v2527 = vpack.c.b16 %v2019, %v2015
      %v2528 = vpack.c.b16 %v2020, %v2016
      %v2529 = vpack.c.b16 %v2025, %v2021
      %v2530 = vpack.c.b16 %v2026, %v2022
      %v2531 = vpack.c.b16 %v2027, %v2023
      %v2532 = vpack.c.b16 %v2028, %v2024
      %v2533 = vpack.c.b16 %v2033, %v2029
      %v2534 = vpack.c.b16 %v2034, %v2030
      %v2535 = vpack.c.b16 %v2035, %v2031
      %v2536 = vpack.c.b16 %v2036, %v2032
      %v2537 = vpack.c.b16 %v2041, %v2037
      %v2538 = vpack.c.b16 %v2042, %v2038
      %v2539 = vpack.c.b16 %v2043, %v2039
      %v2540 = vpack.c.b16 %v2044, %v2040
      %v2541 = vpack.c.b16 %v2049, %v2045
      %v2542 = vpack.c.b16 %v2050, %v2046
      %v2543 = vpack.c.b16 %v2051, %v2047
      %v2544 = vpack.c.b16 %v2052, %v2048
      %v2545 = vpack.c.b16 %v2057, %v2053
      %v2546 = vpack.c.b16 %v2058, %v2054
      %v2547 = vpack.c.b16 %v2059, %v2055
      %v2548 = vpack.c.b16 %v2060, %v2056
      %v2549 = vpack.c.b16 %v2065, %v2061
      %v2550 = vpack.c.b16 %v2066, %v2062
      %v2551 = vpack.c.b16 %v2067, %v2063
      %v2552 = vpack.c.b16 %v2068, %v2064
      %v2553 = vpack.c.b16 %v2073, %v2069
      %v2554 = vpack.c.b16 %v2074, %v2070
      %v2555 = vpack.c.b16 %v2075, %v2071
      %v2556 = vpack.c.b16 %v2076, %v2072
      %v2557 = vpack.c.b16 %v2081, %v2077
      %v2558 = vpack.c.b16 %v2082, %v2078
      %v2559 = vpack.c.b16 %v2083, %v2079
      %v2560 = vpack.c.b16 %v2084, %v2080
      %v2561 = vpack.c.b16 %v2089, %v2085
      %v2562 = vpack.c.b16 %v2090, %v2086
      %v2563 = vpack.c.b16 %v2091, %v2087
      %v2564 = vpack.c.b16 %v2092, %v2088
      %v2565 = vpack.c.b16 %v2097, %v2093
      %v2566 = vpack.c.b16 %v2098, %v2094
      %v2567 = vpack.c.b16 %v2099, %v2095
      %v2568 = vpack.c.b16 %v2100, %v2096
      %v2569 = vpack.c.b16 %v2105, %v2101
      %v2570 = vpack.c.b16 %v2106, %v2102
      %v2571 = vpack.c.b16 %v2107, %v2103
      %v2572 = vpack.c.b16 %v2108, %v2104
      %v2573 = vpack.c.b16 %v2113, %v2109
      %v2574 = vpack.c.b16 %v2114, %v2110
      %v2575 = vpack.c.b16 %v2115, %v2111
      %v2576 = vpack.c.b16 %v2116, %v2112
      %v2577 = vpack.c.b16 %v2121, %v2117
      %v2578 = vpack.c.b16 %v2122, %v2118
      %v2579 = vpack.c.b16 %v2123, %v2119
      %v2580 = vpack.c.b16 %v2124, %v2120
      %v2581 = vpack.c.b16 %v2129, %v2125
      %v2582 = vpack.c.b16 %v2130, %v2126
      %v2583 = vpack.c.b16 %v2131, %v2127
      %v2584 = vpack.c.b16 %v2132, %v2128
      %v2585 = vpack.c.b16 %v2137, %v2133
      %v2586 = vpack.c.b16 %v2138, %v2134
      %v2587 = vpack.c.b16 %v2139, %v2135
      %v2588 = vpack.c.b16 %v2140, %v2136
      %v2589 = vpack.c.b16 %v2145, %v2141
      %v2590 = vpack.c.b16 %v2146, %v2142
      %v2591 = vpack.c.b16 %v2147, %v2143
      %v2592 = vpack.c.b16 %v2148, %v2144
      %v2593 = vpack.c.b16 %v2153, %v2149
      %v2594 = vpack.c.b16 %v2154, %v2150
      %v2595 = vpack.c.b16 %v2155, %v2151
      %v2596 = vpack.c.b16 %v2156, %v2152
      %v2597 = vpack.c.b16 %v2161, %v2157
      %v2598 = vpack.c.b16 %v2162, %v2158
      %v2599 = vpack.c.b16 %v2163, %v2159
      %v2600 = vpack.c.b16 %v2164, %v2160
      %v2601 = vpack.c.b16 %v2169, %v2165
      %v2602 = vpack.c.b16 %v2170, %v2166
      %v2603 = vpack.c.b16 %v2171, %v2167
      %v2604 = vpack.c.b16 %v2172, %v2168
      %v2605 = vpack.c.b16 %v2177, %v2173
      %v2606 = vpack.c.b16 %v2178, %v2174
      %v2607 = vpack.c.b16 %v2179, %v2175
      %v2608 = vpack.c.b16 %v2180, %v2176
      %v2609 = vpack.c.b16 %v2185, %v2181
      %v2610 = vpack.c.b16 %v2186, %v2182
      %v2611 = vpack.c.b16 %v2187, %v2183
      %v2612 = vpack.c.b16 %v2188, %v2184
      %v2613 = vpack.c.b16 %v2193, %v2189
      %v2614 = vpack.c.b16 %v2194, %v2190
      %v2615 = vpack.c.b16 %v2195, %v2191
      %v2616 = vpack.c.b16 %v2196, %v2192
      %v2617 = vpack.c.b16 %v2201, %v2197
      %v2618 = vpack.c.b16 %v2202, %v2198
      %v2619 = vpack.c.b16 %v2203, %v2199
      %v2620 = vpack.c.b16 %v2204, %v2200
      %v2621 = vpack.c.b16 %v2209, %v2205
      %v2622 = vpack.c.b16 %v2210, %v2206
      %v2623 = vpack.c.b16 %v2211, %v2207
      %v2624 = vpack.c.b16 %v2212, %v2208
      %v2625 = vpack.c.b16 %v2217, %v2213
      %v2626 = vpack.c.b16 %v2218, %v2214
      %v2627 = vpack.c.b16 %v2219, %v2215
      %v2628 = vpack.c.b16 %v2220, %v2216
      %v2629 = vpack.c.b16 %v2225, %v2221
      %v2630 = vpack.c.b16 %v2226, %v2222
      %v2631 = vpack.c.b16 %v2227, %v2223
      %v2632 = vpack.c.b16 %v2228, %v2224
      %v2633 = vpack.c.b16 %v2233, %v2229
      %v2634 = vpack.c.b16 %v2234, %v2230
      %v2635 = vpack.c.b16 %v2235, %v2231
      %v2636 = vpack.c.b16 %v2236, %v2232
      %v2637 = vpack.c.b16 %v2241, %v2237
      %v2638 = vpack.c.b16 %v2242, %v2238
      %v2639 = vpack.c.b16 %v2243, %v2239
      %v2640 = vpack.c.b16 %v2244, %v2240
      %v2641 = vpack.c.b16 %v2249, %v2245
      %v2642 = vpack.c.b16 %v2250, %v2246
      %v2643 = vpack.c.b16 %v2251, %v2247
      %v2644 = vpack.c.b16 %v2252, %v2248
      %v2645 = vpack.c.b16 %v2257, %v2253
      %v2646 = vpack.c.b16 %v2258, %v2254
      %v2647 = vpack.c.b16 %v2259, %v2255
      %v2648 = vpack.c.b16 %v2260, %v2256
      %v2649 = vpack.c.b16 %v2265, %v2261
      %v2650 = vpack.c.b16 %v2266, %v2262
      %v2651 = vpack.c.b16 %v2267, %v2263
      %v2652 = vpack.c.b16 %v2268, %v2264
      %v2653 = vpack.c.b16 %v2273, %v2269
      %v2654 = vpack.c.b16 %v2274, %v2270
      %v2655 = vpack.c.b16 %v2275, %v2271
      %v2656 = vpack.c.b16 %v2276, %v2272
      %v2657 = vpack.c.b16 %v2281, %v2277
      %v2658 = vpack.c.b16 %v2282, %v2278
      %v2659 = vpack.c.b16 %v2283, %v2279
      %v2660 = vpack.c.b16 %v2284, %v2280
      %v2661 = vpack.c.b16 %v2289, %v2285
      %v2662 = vpack.c.b16 %v2290, %v2286
      %v2663 = vpack.c.b16 %v2291, %v2287
      %v2664 = vpack.c.b16 %v2292, %v2288
      %v2665 = vpack.c.b16 %v2297, %v2293
      %v2666 = vpack.c.b16 %v2298, %v2294
      %v2667 = vpack.c.b16 %v2299, %v2295
      %v2668 = vpack.c.b16 %v2300, %v2296
      %v2669 = vpack.c.b16 %v2305, %v2301
      %v2670 = vpack.c.b16 %v2306, %v2302
      %v2671 = vpack.c.b16 %v2307, %v2303
      %v2672 = vpack.c.b16 %v2308, %v2304
      %v2673 = vpack.c.b16 %v2313, %v2309
      %v2674 = vpack.c.b16 %v2314, %v2310
      %v2675 = vpack.c.b16 %v2315, %v2311
      %v2676 = vpack.c.b16 %v2316, %v2312
      %v2677 = vpack.c.b16 %v2321, %v2317
      %v2678 = vpack.c.b16 %v2322, %v2318
      %v2679 = vpack.c.b16 %v2323, %v2319
      %v2680 = vpack.c.b16 %v2324, %v2320
      %v2681 = vpack.c.b16 %v2329, %v2325
      %v2682 = vpack.c.b16 %v2330, %v2326
      %v2683 = vpack.c.b16 %v2331, %v2327
      %v2684 = vpack.c.b16 %v2332, %v2328
      %v2685 = vpack.c.b16 %v2337, %v2333
      %v2686 = vpack.c.b16 %v2338, %v2334
      %v2687 = vpack.c.b16 %v2339, %v2335
      %v2688 = vpack.c.b16 %v2340, %v2336
      %v2689 = vpack.c.b16 %v2345, %v2341
      %v2690 = vpack.c.b16 %v2346, %v2342
      %v2691 = vpack.c.b16 %v2347, %v2343
      %v2692 = vpack.c.b16 %v2348, %v2344
      %v2693 = vpack.c.b16 %v2353, %v2349
      %v2694 = vpack.c.b16 %v2354, %v2350
      %v2695 = vpack.c.b16 %v2355, %v2351
      %v2696 = vpack.c.b16 %v2356, %v2352
      %v2697 = vpack.c.b16 %v2361, %v2357
      %v2698 = vpack.c.b16 %v2362, %v2358
      %v2699 = vpack.c.b16 %v2363, %v2359
      %v2700 = vpack.c.b16 %v2364, %v2360
      %v2701 = vpack.c.b16 %v2369, %v2365
      %v2702 = vpack.c.b16 %v2370, %v2366
      %v2703 = vpack.c.b16 %v2371, %v2367
      %v2704 = vpack.c.b16 %v2372, %v2368
      %v2705 = vpack.c.b16 %v2377, %v2373
      %v2706 = vpack.c.b16 %v2378, %v2374
      %v2707 = vpack.c.b16 %v2379, %v2375
      %v2708 = vpack.c.b16 %v2380, %v2376
      %v2709 = vpack.c.b16 %v2385, %v2381
      %v2710 = vpack.c.b16 %v2386, %v2382
      %v2711 = vpack.c.b16 %v2387, %v2383
      %v2712 = vpack.c.b16 %v2388, %v2384
      %v2713 = vpack.c.b16 %v2393, %v2389
      %v2714 = vpack.c.b16 %v2394, %v2390
      %v2715 = vpack.c.b16 %v2395, %v2391
      %v2716 = vpack.c.b16 %v2396, %v2392
      %v2717 = vpack.c.b16 %v2401, %v2397
      %v2718 = vpack.c.b16 %v2402, %v2398
      %v2719 = vpack.c.b16 %v2403, %v2399
      %v2720 = vpack.c.b16 %v2404, %v2400
      %v2721 = vpack.c.b16 %v2409, %v2405
      %v2722 = vpack.c.b16 %v2410, %v2406
      %v2723 = vpack.c.b16 %v2411, %v2407
      %v2724 = vpack.c.b16 %v2412, %v2408
      %v2725 = vpack.c.b16 %v2417, %v2413
      %v2726 = vpack.c.b16 %v2418, %v2414
      %v2727 = vpack.c.b16 %v2419, %v2415
      %v2728 = vpack.c.b16 %v2420, %v2416
      %v2729 = vpack.c.b16 %v2425, %v2421
      %v2730 = vpack.c.b16 %v2426, %v2422
      %v2731 = vpack.c.b16 %v2427, %v2423
      %v2732 = vpack.c.b16 %v2428, %v2424
      %v2733 = vpack.c.b16 %v2433, %v2429
      %v2734 = vpack.c.b16 %v2434, %v2430
      %v2735 = vpack.c.b16 %v2435, %v2431
      %v2736 = vpack.c.b16 %v2436, %v2432
      %v2737 = vpack.c.b16 %v2441, %v2437
      %v2738 = vpack.c.b16 %v2442, %v2438
      %v2739 = vpack.c.b16 %v2443, %v2439
      %v2740 = vpack.c.b16 %v2444, %v2440
      %v2741 = vpack.c.b16 %v2449, %v2445
      %v2742 = vpack.c.b16 %v2450, %v2446
      %v2743 = vpack.c.b16 %v2451, %v2447
      %v2744 = vpack.c.b16 %v2452, %v2448
      %v2745 = vpack.c.b16 %v2457, %v2453
      %v2746 = vpack.c.b16 %v2458, %v2454
      %v2747 = vpack.c.b16 %v2459, %v2455
      %v2748 = vpack.c.b16 %v2460, %v2456
      %v2749 = vpack.c.b16 %v2465, %v2461
      %v2750 = vpack.c.b16 %v2466, %v2462
      %v2751 = vpack.c.b16 %v2467, %v2463
      %v2752 = vpack.c.b16 %v2468, %v2464
      %v2753 = vpack.c.b16 %v2473, %v2469
      %v2754 = vpack.c.b16 %v2474, %v2470
      %v2755 = vpack.c.b16 %v2475, %v2471
      %v2756 = vpack.c.b16 %v2476, %v2472
      %v2757 = vpack.c.b16 %v2481, %v2477
      %v2758 = vpack.c.b16 %v2482, %v2478
      %v2759 = vpack.c.b16 %v2483, %v2479
      %v2760 = vpack.c.b16 %v2484, %v2480
      %v2761 = vpack.c.b16 %v2489, %v2485
      %v2762 = vpack.c.b16 %v2490, %v2486
      %v2763 = vpack.c.b16 %v2491, %v2487
      %v2764 = vpack.c.b16 %v2492, %v2488
      %v2765 = vpack.c.b16 %v2497, %v2493
      %v2766 = vpack.c.b16 %v2498, %v2494
      %v2767 = vpack.c.b16 %v2499, %v2495
      %v2768 = vpack.c.b16 %v2500, %v2496
      %v2769 = vpack.c.b16 %v2505, %v2501
      %v2770 = vpack.c.b16 %v2506, %v2502
      %v2771 = vpack.c.b16 %v2507, %v2503
      %v2772 = vpack.c.b16 %v2508, %v2504
      %v2773 = vpack.c.b16 %v2513, %v2509
      %v2774 = vpack.c.b16 %v2514, %v2510
      %v2775 = vpack.c.b16 %v2515, %v2511
      %v2776 = vpack.c.b16 %v2516, %v2512
      %v2777 = vpack.c.b16 %v2521, %v2517
      %v2778 = vpack.c.b16 %v2522, %v2518
      %v2779 = vpack.c.b16 %v2523, %v2519
      %v2780 = vpack.c.b16 %v2524, %v2520
      %3037 = vmatprep.subr.bf16.mxu0 %v2526
      %3038 = vmatpush1.bf16.msra.mxu0 %v2525
      %3039 = vmatprep.subr.bf16.mxu0 %v2530
      %3040 = vmatpush1.bf16.msra.mxu0 %v2529
      %3041 = vmatprep.subr.bf16.mxu0 %v2534
      %3042 = vmatpush1.bf16.msra.mxu0 %v2533
      %3043 = vmatprep.subr.bf16.mxu0 %v2538
      %3044 = vmatpush1.bf16.msra.mxu0 %v2537
      %3045 = vmatprep.subr.bf16.mxu0 %v2542
      %3046 = vmatpush1.bf16.msra.mxu0 %v2541
      %3047 = vmatprep.subr.bf16.mxu0 %v2546
      %3048 = vmatpush1.bf16.msra.mxu0 %v2545
      %3049 = vmatprep.subr.bf16.mxu0 %v2550
      %3050 = vmatpush1.bf16.msra.mxu0 %v2549
      %3051 = vmatprep.subr.bf16.mxu0 %v2554
      %3052 = vmatpush1.bf16.msra.mxu0 %v2553
      %3053 = vmatprep.subr.bf16.mxu0 %v2558
      %3054 = vmatpush1.bf16.msra.mxu0 %v2557
      %3055 = vmatprep.subr.bf16.mxu0 %v2562
      %3056 = vmatpush1.bf16.msra.mxu0 %v2561
      %3057 = vmatprep.subr.bf16.mxu0 %v2566
      %3058 = vmatpush1.bf16.msra.mxu0 %v2565
      %3059 = vmatprep.subr.bf16.mxu0 %v2570
      %3060 = vmatpush1.bf16.msra.mxu0 %v2569
      %3061 = vmatprep.subr.bf16.mxu0 %v2574
      %3062 = vmatpush1.bf16.msra.mxu0 %v2573
      %3063 = vmatprep.subr.bf16.mxu0 %v2578
      %3064 = vmatpush1.bf16.msra.mxu0 %v2577
      %3065 = vmatprep.subr.bf16.mxu0 %v2582
      %3066 = vmatpush1.bf16.msra.mxu0 %v2581
      %3067 = vmatprep.subr.bf16.mxu0 %v2586
      %3068 = vmatpush1.bf16.msra.mxu0 %v2585
      %3069 = vmatprep.mubr.bf16.mxu0 %v1472
      %3070 = vmatmul.mubr.bf16.gmra.mrb[0].mxu0 %v1471
      %v3071 = vpop.f32.mrb[0].mxu0
      %v3072 = vadd.f32 %v1740, %v3071
      %v3073 = vpop.f32.mrb[0].mxu0
      %v3074 = vadd.f32 %v1744, %v3073
      %v3075 = vpop.f32.mrb[0].mxu0
      %v3076 = vpop.f32.mrb[0].mxu0
      %3077 = vdwg.mxu0
      %3078 = vmatprep.subr.bf16.mxu0 %v2590
      %3079 = vmatpush1.bf16.msra.mxu0 %v2589
      %3080 = vmatprep.subr.bf16.mxu0 %v2594
      %3081 = vmatpush1.bf16.msra.mxu0 %v2593
      %3082 = vmatprep.subr.bf16.mxu0 %v2598
      %3083 = vmatpush1.bf16.msra.mxu0 %v2597
      %3084 = vmatprep.subr.bf16.mxu0 %v2602
      %3085 = vmatpush1.bf16.msra.mxu0 %v2601
      %3086 = vmatprep.subr.bf16.mxu0 %v2606
      %3087 = vmatpush1.bf16.msra.mxu0 %v2605
      %3088 = vmatprep.subr.bf16.mxu0 %v2610
      %3089 = vmatpush1.bf16.msra.mxu0 %v2609
      %3090 = vmatprep.subr.bf16.mxu0 %v2614
      %3091 = vmatpush1.bf16.msra.mxu0 %v2613
      %3092 = vmatprep.subr.bf16.mxu0 %v2618
      %3093 = vmatpush1.bf16.msra.mxu0 %v2617
      %3094 = vmatprep.subr.bf16.mxu0 %v2622
      %3095 = vmatpush1.bf16.msra.mxu0 %v2621
      %3096 = vmatprep.subr.bf16.mxu0 %v2626
      %3097 = vmatpush1.bf16.msra.mxu0 %v2625
      %3098 = vmatprep.subr.bf16.mxu0 %v2630
      %3099 = vmatpush1.bf16.msra.mxu0 %v2629
      %3100 = vmatprep.subr.bf16.mxu0 %v2634
      %3101 = vmatpush1.bf16.msra.mxu0 %v2633
      %3102 = vmatprep.subr.bf16.mxu0 %v2638
      %3103 = vmatpush1.bf16.msra.mxu0 %v2637
      %3104 = vmatprep.subr.bf16.mxu0 %v2642
      %3105 = vmatpush1.bf16.msra.mxu0 %v2641
      %3106 = vmatprep.subr.bf16.mxu0 %v2646
      %3107 = vmatpush1.bf16.msra.mxu0 %v2645
      %3108 = vmatprep.subr.bf16.mxu0 %v2650
      %3109 = vmatpush1.bf16.msra.mxu0 %v2649
      %3110 = vmatprep.mubr.bf16.mxu0 %v1474
      %3111 = vmatmul.mubr.bf16.gmra.mrb[0].mxu0 %v1473
      %v3112 = vpop.f32.mrb[0].mxu0
      %v3113 = vadd.f32 %v3072, %v3112
      %v3114 = vpop.f32.mrb[0].mxu0
      %v3115 = vadd.f32 %v3074, %v3114
      %v3116 = vpop.f32.mrb[0].mxu0
      %v3117 = vpop.f32.mrb[0].mxu0
      %3118 = vdwg.mxu0
      %3119 = vmatprep.subr.bf16.mxu0 %v2654
      %3120 = vmatpush1.bf16.msra.mxu0 %v2653
      %3121 = vmatprep.subr.bf16.mxu0 %v2658
      %3122 = vmatpush1.bf16.msra.mxu0 %v2657
      %3123 = vmatprep.subr.bf16.mxu0 %v2662
      %3124 = vmatpush1.bf16.msra.mxu0 %v2661
      %3125 = vmatprep.subr.bf16.mxu0 %v2666
      %3126 = vmatpush1.bf16.msra.mxu0 %v2665
      %3127 = vmatprep.subr.bf16.mxu0 %v2670
      %3128 = vmatpush1.bf16.msra.mxu0 %v2669
      %3129 = vmatprep.subr.bf16.mxu0 %v2674
      %3130 = vmatpush1.bf16.msra.mxu0 %v2673
      %3131 = vmatprep.subr.bf16.mxu0 %v2678
      %3132 = vmatpush1.bf16.msra.mxu0 %v2677
      %3133 = vmatprep.subr.bf16.mxu0 %v2682
      %3134 = vmatpush1.bf16.msra.mxu0 %v2681
      %3135 = vmatprep.subr.bf16.mxu0 %v2686
      %3136 = vmatpush1.bf16.msra.mxu0 %v2685
      %3137 = vmatprep.subr.bf16.mxu0 %v2690
      %3138 = vmatpush1.bf16.msra.mxu0 %v2689
      %3139 = vmatprep.subr.bf16.mxu0 %v2694
      %3140 = vmatpush1.bf16.msra.mxu0 %v2693
      %3141 = vmatprep.subr.bf16.mxu0 %v2698
      %3142 = vmatpush1.bf16.msra.mxu0 %v2697
      %3143 = vmatprep.subr.bf16.mxu0 %v2702
      %3144 = vmatpush1.bf16.msra.mxu0 %v2701
      %3145 = vmatprep.subr.bf16.mxu0 %v2706
      %3146 = vmatpush1.bf16.msra.mxu0 %v2705
      %3147 = vmatprep.subr.bf16.mxu0 %v2710
      %3148 = vmatpush1.bf16.msra.mxu0 %v2709
      %3149 = vmatprep.subr.bf16.mxu0 %v2714
      %3150 = vmatpush1.bf16.msra.mxu0 %v2713
      %3151 = vmatprep.mubr.bf16.mxu0 %v1476
      %3152 = vmatmul.mubr.bf16.gmra.mrb[0].mxu0 %v1475
      %v3153 = vpop.f32.mrb[0].mxu0
      %v3154 = vadd.f32 %v3113, %v3153
      %v3155 = vpop.f32.mrb[0].mxu0
      %v3156 = vadd.f32 %v3115, %v3155
      %v3157 = vpop.f32.mrb[0].mxu0
      %v3158 = vpop.f32.mrb[0].mxu0
      %3159 = vdwg.mxu0
      %3160 = vmatprep.subr.bf16.mxu0 %v2718
      %3161 = vmatpush1.bf16.msra.mxu0 %v2717
      %3162 = vmatprep.subr.bf16.mxu0 %v2722
      %3163 = vmatpush1.bf16.msra.mxu0 %v2721
      %3164 = vmatprep.subr.bf16.mxu0 %v2726
      %3165 = vmatpush1.bf16.msra.mxu0 %v2725
      %3166 = vmatprep.subr.bf16.mxu0 %v2730
      %3167 = vmatpush1.bf16.msra.mxu0 %v2729
      %3168 = vmatprep.subr.bf16.mxu0 %v2734
      %3169 = vmatpush1.bf16.msra.mxu0 %v2733
      %3170 = vmatprep.subr.bf16.mxu0 %v2738
      %3171 = vmatpush1.bf16.msra.mxu0 %v2737
      %3172 = vmatprep.subr.bf16.mxu0 %v2742
      %3173 = vmatpush1.bf16.msra.mxu0 %v2741
      %3174 = vmatprep.subr.bf16.mxu0 %v2746
      %3175 = vmatpush1.bf16.msra.mxu0 %v2745
      %3176 = vmatprep.subr.bf16.mxu0 %v2750
      %3177 = vmatpush1.bf16.msra.mxu0 %v2749
      %3178 = vmatprep.subr.bf16.mxu0 %v2754
      %3179 = vmatpush1.bf16.msra.mxu0 %v2753
      %3180 = vmatprep.subr.bf16.mxu0 %v2758
      %3181 = vmatpush1.bf16.msra.mxu0 %v2757
      %3182 = vmatprep.subr.bf16.mxu0 %v2762
      %3183 = vmatpush1.bf16.msra.mxu0 %v2761
      %3184 = vmatprep.subr.bf16.mxu0 %v2766
      %3185 = vmatpush1.bf16.msra.mxu0 %v2765
      %3186 = vmatprep.subr.bf16.mxu0 %v2770
      %3187 = vmatpush1.bf16.msra.mxu0 %v2769
      %3188 = vmatprep.subr.bf16.mxu0 %v2774
      %3189 = vmatpush1.bf16.msra.mxu0 %v2773
      %3190 = vmatprep.subr.bf16.mxu0 %v2778
      %3191 = vmatpush1.bf16.msra.mxu0 %v2777
      %3192 = vmatprep.mubr.bf16.mxu0 %v1478
      %3193 = vmatmul.mubr.bf16.gmra.mrb[0].mxu0 %v1477
      %v3194 = vpop.f32.mrb[0].mxu0
      %v3195 = vadd.f32 %v3154, %v3194
      %v3196 = vpop.f32.mrb[0].mxu0
      %v3197 = vadd.f32 %v3156, %v3196
      %v3198 = vpop.f32.mrb[0].mxu0
      %v3199 = vpop.f32.mrb[0].mxu0
      %3200 = vdwg.mxu0
      %3201 = vmatprep.subr.bf16.mxu0 %v2528
      %3202 = vmatpush1.bf16.msra.mxu0 %v2527
      %3203 = vmatprep.subr.bf16.mxu0 %v2532
      %3204 = vmatpush1.bf16.msra.mxu0 %v2531
      %3205 = vmatprep.subr.bf16.mxu0 %v2536
      %3206 = vmatpush1.bf16.msra.mxu0 %v2535
      %3207 = vmatprep.subr.bf16.mxu0 %v2540
      %3208 = vmatpush1.bf16.msra.mxu0 %v2539
      %3209 = vmatprep.subr.bf16.mxu0 %v2544
      %3210 = vmatpush1.bf16.msra.mxu0 %v2543
      %3211 = vmatprep.subr.bf16.mxu0 %v2548
      %3212 = vmatpush1.bf16.msra.mxu0 %v2547
      %3213 = vmatprep.subr.bf16.mxu0 %v2552
      %3214 = vmatpush1.bf16.msra.mxu0 %v2551
      %3215 = vmatprep.subr.bf16.mxu0 %v2556
      %3216 = vmatpush1.bf16.msra.mxu0 %v2555
      %3217 = vmatprep.subr.bf16.mxu0 %v2560
      %3218 = vmatpush1.bf16.msra.mxu0 %v2559
      %3219 = vmatprep.subr.bf16.mxu0 %v2564
      %3220 = vmatpush1.bf16.msra.mxu0 %v2563
      %3221 = vmatprep.subr.bf16.mxu0 %v2568
      %3222 = vmatpush1.bf16.msra.mxu0 %v2567
      %3223 = vmatprep.subr.bf16.mxu0 %v2572
      %3224 = vmatpush1.bf16.msra.mxu0 %v2571
      %3225 = vmatprep.subr.bf16.mxu0 %v2576
      %3226 = vmatpush1.bf16.msra.mxu0 %v2575
      %3227 = vmatprep.subr.bf16.mxu0 %v2580
      %3228 = vmatpush1.bf16.msra.mxu0 %v2579
      %3229 = vmatprep.subr.bf16.mxu0 %v2584
      %3230 = vmatpush1.bf16.msra.mxu0 %v2583
      %3231 = vmatprep.subr.bf16.mxu0 %v2588
      %3232 = vmatpush1.bf16.msra.mxu0 %v2587
      %3233 = vmatprep.mubr.bf16.mxu0 %v1472
      %3234 = vmatmul.mubr.bf16.gmra.mrb[0].mxu0 %v1471
      %v3235 = vpop.f32.mrb[0].mxu0
      %v3236 = vadd.f32 %v1748, %v3235
      %v3237 = vpop.f32.mrb[0].mxu0
      %v3238 = vadd.f32 %v1752, %v3237
      %v3239 = vpop.f32.mrb[0].mxu0
      %v3240 = vpop.f32.mrb[0].mxu0
      %3241 = vdwg.mxu0
      %3242 = vmatprep.subr.bf16.mxu0 %v2592
      %3243 = vmatpush1.bf16.msra.mxu0 %v2591
      %3244 = vmatprep.subr.bf16.mxu0 %v2596
      %3245 = vmatpush1.bf16.msra.mxu0 %v2595
      %3246 = vmatprep.subr.bf16.mxu0 %v2600
      %3247 = vmatpush1.bf16.msra.mxu0 %v2599
      %3248 = vmatprep.subr.bf16.mxu0 %v2604
      %3249 = vmatpush1.bf16.msra.mxu0 %v2603
      %3250 = vmatprep.subr.bf16.mxu0 %v2608
      %3251 = vmatpush1.bf16.msra.mxu0 %v2607
      %3252 = vmatprep.subr.bf16.mxu0 %v2612
      %3253 = vmatpush1.bf16.msra.mxu0 %v2611
      %3254 = vmatprep.subr.bf16.mxu0 %v2616
      %3255 = vmatpush1.bf16.msra.mxu0 %v2615
      %3256 = vmatprep.subr.bf16.mxu0 %v2620
      %3257 = vmatpush1.bf16.msra.mxu0 %v2619
      %3258 = vmatprep.subr.bf16.mxu0 %v2624
      %3259 = vmatpush1.bf16.msra.mxu0 %v2623
      %3260 = vmatprep.subr.bf16.mxu0 %v2628
      %3261 = vmatpush1.bf16.msra.mxu0 %v2627
      %3262 = vmatprep.subr.bf16.mxu0 %v2632
      %3263 = vmatpush1.bf16.msra.mxu0 %v2631
      %3264 = vmatprep.subr.bf16.mxu0 %v2636
      %3265 = vmatpush1.bf16.msra.mxu0 %v2635
      %3266 = vmatprep.subr.bf16.mxu0 %v2640
      %3267 = vmatpush1.bf16.msra.mxu0 %v2639
      %3268 = vmatprep.subr.bf16.mxu0 %v2644
      %3269 = vmatpush1.bf16.msra.mxu0 %v2643
      %3270 = vmatprep.subr.bf16.mxu0 %v2648
      %3271 = vmatpush1.bf16.msra.mxu0 %v2647
      %3272 = vmatprep.subr.bf16.mxu0 %v2652
      %3273 = vmatpush1.bf16.msra.mxu0 %v2651
      %3274 = vmatprep.mubr.bf16.mxu0 %v1474
      %3275 = vmatmul.mubr.bf16.gmra.mrb[0].mxu0 %v1473
      %v3276 = vpop.f32.mrb[0].mxu0
      %v3277 = vadd.f32 %v3236, %v3276
      %v3278 = vpop.f32.mrb[0].mxu0
      %v3279 = vadd.f32 %v3238, %v3278
      %v3280 = vpop.f32.mrb[0].mxu0
      %v3281 = vpop.f32.mrb[0].mxu0
      %3282 = vdwg.mxu0
      %3283 = vmatprep.subr.bf16.mxu0 %v2656
      %3284 = vmatpush1.bf16.msra.mxu0 %v2655
      %3285 = vmatprep.subr.bf16.mxu0 %v2660
      %3286 = vmatpush1.bf16.msra.mxu0 %v2659
      %3287 = vmatprep.subr.bf16.mxu0 %v2664
      %3288 = vmatpush1.bf16.msra.mxu0 %v2663
      %3289 = vmatprep.subr.bf16.mxu0 %v2668
      %3290 = vmatpush1.bf16.msra.mxu0 %v2667
      %3291 = vmatprep.subr.bf16.mxu0 %v2672
      %3292 = vmatpush1.bf16.msra.mxu0 %v2671
      %3293 = vmatprep.subr.bf16.mxu0 %v2676
      %3294 = vmatpush1.bf16.msra.mxu0 %v2675
      %3295 = vmatprep.subr.bf16.mxu0 %v2680
      %3296 = vmatpush1.bf16.msra.mxu0 %v2679
      %3297 = vmatprep.subr.bf16.mxu0 %v2684
      %3298 = vmatpush1.bf16.msra.mxu0 %v2683
      %3299 = vmatprep.subr.bf16.mxu0 %v2688
      %3300 = vmatpush1.bf16.msra.mxu0 %v2687
      %3301 = vmatprep.subr.bf16.mxu0 %v2692
      %3302 = vmatpush1.bf16.msra.mxu0 %v2691
      %3303 = vmatprep.subr.bf16.mxu0 %v2696
      %3304 = vmatpush1.bf16.msra.mxu0 %v2695
      %3305 = vmatprep.subr.bf16.mxu0 %v2700
      %3306 = vmatpush1.bf16.msra.mxu0 %v2699
      %3307 = vmatprep.subr.bf16.mxu0 %v2704
      %3308 = vmatpush1.bf16.msra.mxu0 %v2703
      %3309 = vmatprep.subr.bf16.mxu0 %v2708
      %3310 = vmatpush1.bf16.msra.mxu0 %v2707
      %3311 = vmatprep.subr.bf16.mxu0 %v2712
      %3312 = vmatpush1.bf16.msra.mxu0 %v2711
      %3313 = vmatprep.subr.bf16.mxu0 %v2716
      %3314 = vmatpush1.bf16.msra.mxu0 %v2715
      %3315 = vmatprep.mubr.bf16.mxu0 %v1476
      %3316 = vmatmul.mubr.bf16.gmra.mrb[0].mxu0 %v1475
      %v3317 = vpop.f32.mrb[0].mxu0
      %v3318 = vadd.f32 %v3277, %v3317
      %v3319 = vpop.f32.mrb[0].mxu0
      %v3320 = vadd.f32 %v3279, %v3319
      %v3321 = vpop.f32.mrb[0].mxu0
      %v3322 = vpop.f32.mrb[0].mxu0
      %3323 = vdwg.mxu0
      %3324 = vmatprep.subr.bf16.mxu0 %v2720
      %3325 = vmatpush1.bf16.msra.mxu0 %v2719
      %3326 = vmatprep.subr.bf16.mxu0 %v2724
      %3327 = vmatpush1.bf16.msra.mxu0 %v2723
      %3328 = vmatprep.subr.bf16.mxu0 %v2728
      %3329 = vmatpush1.bf16.msra.mxu0 %v2727
      %3330 = vmatprep.subr.bf16.mxu0 %v2732
      %3331 = vmatpush1.bf16.msra.mxu0 %v2731
      %3332 = vmatprep.subr.bf16.mxu0 %v2736
      %3333 = vmatpush1.bf16.msra.mxu0 %v2735
      %3334 = vmatprep.subr.bf16.mxu0 %v2740
      %3335 = vmatpush1.bf16.msra.mxu0 %v2739
      %3336 = vmatprep.subr.bf16.mxu0 %v2744
      %3337 = vmatpush1.bf16.msra.mxu0 %v2743
      %3338 = vmatprep.subr.bf16.mxu0 %v2748
      %3339 = vmatpush1.bf16.msra.mxu0 %v2747
      %3340 = vmatprep.subr.bf16.mxu0 %v2752
      %3341 = vmatpush1.bf16.msra.mxu0 %v2751
      %3342 = vmatprep.subr.bf16.mxu0 %v2756
      %3343 = vmatpush1.bf16.msra.mxu0 %v2755
      %3344 = vmatprep.subr.bf16.mxu0 %v2760
      %3345 = vmatpush1.bf16.msra.mxu0 %v2759
      %3346 = vmatprep.subr.bf16.mxu0 %v2764
      %3347 = vmatpush1.bf16.msra.mxu0 %v2763
      %3348 = vmatprep.subr.bf16.mxu0 %v2768
      %3349 = vmatpush1.bf16.msra.mxu0 %v2767
      %3350 = vmatprep.subr.bf16.mxu0 %v2772
      %3351 = vmatpush1.bf16.msra.mxu0 %v2771
      %3352 = vmatprep.subr.bf16.mxu0 %v2776
      %3353 = vmatpush1.bf16.msra.mxu0 %v2775
      %3354 = vmatprep.subr.bf16.mxu0 %v2780
      %3355 = vmatpush1.bf16.msra.mxu0 %v2779
      %3356 = vmatprep.mubr.bf16.mxu0 %v1478
      %3357 = vmatmul.mubr.bf16.gmra.mrb[0].mxu0 %v1477
      %v3358 = vpop.f32.mrb[0].mxu0
      %v3359 = vadd.f32 %v3318, %v3358
      %v3360 = vpop.f32.mrb[0].mxu0
      %v3361 = vadd.f32 %v3320, %v3360
      %v3362 = vpop.f32.mrb[0].mxu0
      %v3363 = vpop.f32.mrb[0].mxu0
      %3364 = vdwg.mxu0
      %v3365 = vmax.f32 %v3195, 0.0
      %v3366 = vmax.f32 %v3197, 0.0
      %v3367 = vmax.f32 %v3359, 0.0
      %v3368 = vmax.f32 %v3361, 0.0
      %v3369 = vpack.c.bf16 %v3365, %v3365
      %v3370 = vpack.c.bf16 %v3366, %v3366
      %v3371 = vpack.c.bf16 %v3367, %v3367
      %v3372 = vpack.c.bf16 %v3368, %v3368
      %v3373 = vld [vmem:[#allocation7] sm:$0xff]
      %v3374 = vld [vmem:[#allocation7 + $0x8] sm:$0xff]
      %v3375 = vld [vmem:[#allocation7 + $0x10] sm:$0xff]
      %v3376 = vld [vmem:[#allocation7 + $0x18] sm:$0xff]
      %v3377 = vld [vmem:[#allocation7 + $0x20] sm:$0xff]
      %v3378 = vld [vmem:[#allocation7 + $0x28] sm:$0xff]
      %v3379 = vld [vmem:[#allocation7 + $0x30] sm:$0xff]
      %v3380 = vld [vmem:[#allocation7 + $0x38] sm:$0xff]
      %v3381 = vld [vmem:[#allocation7 + $0x40] sm:$0xff]
      %v3382 = vld [vmem:[#allocation7 + $0x48] sm:$0xff]
      %v3383 = vld [vmem:[#allocation7 + $0x50] sm:$0xff]
      %v3384 = vld [vmem:[#allocation7 + $0x58] sm:$0xff]
      %v3385 = vld [vmem:[#allocation7 + $0x60] sm:$0xff]
      %v3386 = vld [vmem:[#allocation7 + $0x68] sm:$0xff]
      %v3387 = vld [vmem:[#allocation7 + $0x70] sm:$0xff]
      %v3388 = vld [vmem:[#allocation7 + $0x78] sm:$0xff]
      %v3389 = vld [vmem:[#allocation7 + $0x80] sm:$0xff]
      %v3390 = vld [vmem:[#allocation7 + $0x88] sm:$0xff]
      %v3391 = vld [vmem:[#allocation7 + $0x90] sm:$0xff]
      %v3392 = vld [vmem:[#allocation7 + $0x98] sm:$0xff]
      %v3393 = vld [vmem:[#allocation7 + $0xa0] sm:$0xff]
      %v3394 = vld [vmem:[#allocation7 + $0xa8] sm:$0xff]
      %v3395 = vld [vmem:[#allocation7 + $0xb0] sm:$0xff]
      %v3396 = vld [vmem:[#allocation7 + $0xb8] sm:$0xff]
      %v3397 = vld [vmem:[#allocation7 + $0xc0] sm:$0xff]
      %v3398 = vld [vmem:[#allocation7 + $0xc8] sm:$0xff]
      %v3399 = vld [vmem:[#allocation7 + $0xd0] sm:$0xff]
      %v3400 = vld [vmem:[#allocation7 + $0xd8] sm:$0xff]
      %v3401 = vld [vmem:[#allocation7 + $0xe0] sm:$0xff]
      %v3402 = vld [vmem:[#allocation7 + $0xe8] sm:$0xff]
      %v3403 = vld [vmem:[#allocation7 + $0xf0] sm:$0xff]
      %v3404 = vld [vmem:[#allocation7 + $0xf8] sm:$0xff]
      %v3405 = vld [vmem:[#allocation7 + $0x100] sm:$0xff]
      %v3406 = vld [vmem:[#allocation7 + $0x108] sm:$0xff]
      %v3407 = vld [vmem:[#allocation7 + $0x110] sm:$0xff]
      %v3408 = vld [vmem:[#allocation7 + $0x118] sm:$0xff]
      %v3409 = vld [vmem:[#allocation7 + $0x120] sm:$0xff]
      %v3410 = vld [vmem:[#allocation7 + $0x128] sm:$0xff]
      %v3411 = vld [vmem:[#allocation7 + $0x130] sm:$0xff]
      %v3412 = vld [vmem:[#allocation7 + $0x138] sm:$0xff]
      %v3413 = vld [vmem:[#allocation7 + $0x140] sm:$0xff]
      %v3414 = vld [vmem:[#allocation7 + $0x148] sm:$0xff]
      %v3415 = vld [vmem:[#allocation7 + $0x150] sm:$0xff]
      %v3416 = vld [vmem:[#allocation7 + $0x158] sm:$0xff]
      %v3417 = vld [vmem:[#allocation7 + $0x160] sm:$0xff]
      %v3418 = vld [vmem:[#allocation7 + $0x168] sm:$0xff]
      %v3419 = vld [vmem:[#allocation7 + $0x170] sm:$0xff]
      %v3420 = vld [vmem:[#allocation7 + $0x178] sm:$0xff]
      %v3421 = vld [vmem:[#allocation7 + $0x180] sm:$0xff]
      %v3422 = vld [vmem:[#allocation7 + $0x188] sm:$0xff]
      %v3423 = vld [vmem:[#allocation7 + $0x190] sm:$0xff]
      %v3424 = vld [vmem:[#allocation7 + $0x198] sm:$0xff]
      %v3425 = vld [vmem:[#allocation7 + $0x1a0] sm:$0xff]
      %v3426 = vld [vmem:[#allocation7 + $0x1a8] sm:$0xff]
      %v3427 = vld [vmem:[#allocation7 + $0x1b0] sm:$0xff]
      %v3428 = vld [vmem:[#allocation7 + $0x1b8] sm:$0xff]
      %v3429 = vld [vmem:[#allocation7 + $0x1c0] sm:$0xff]
      %v3430 = vld [vmem:[#allocation7 + $0x1c8] sm:$0xff]
      %v3431 = vld [vmem:[#allocation7 + $0x1d0] sm:$0xff]
      %v3432 = vld [vmem:[#allocation7 + $0x1d8] sm:$0xff]
      %v3433 = vld [vmem:[#allocation7 + $0x1e0] sm:$0xff]
      %v3434 = vld [vmem:[#allocation7 + $0x1e8] sm:$0xff]
      %v3435 = vld [vmem:[#allocation7 + $0x1f0] sm:$0xff]
      %v3436 = vld [vmem:[#allocation7 + $0x1f8] sm:$0xff]
      %v3437 = vld [vmem:[%s10] sm:$0x3]
      %v3439 = vlaneseq
      %v3440 = vshrl.u32 %v3439, 7
      %v3441 = vsub.s32 0, %v3440
      %v3442 = vrot.slane %v3437, %v3441
      %v3443 = vlaneseq
      %v3444 = vshrl.u32 %v3443, 7
      %v3445 = vsub.s32 1, %v3444
      %v3446 = vrot.slane %v3437, %v3445
      %v3513 = vunpack.c.l.b16 %v3373
      %v3514 = vunpack.c.h.b16 %v3373
      %v3515 = vunpack.c.l.b16 %v3374
      %v3516 = vunpack.c.h.b16 %v3374
      %v3517 = vunpack.c.l.b16 %v3375
      %v3518 = vunpack.c.h.b16 %v3375
      %v3519 = vunpack.c.l.b16 %v3376
      %v3520 = vunpack.c.h.b16 %v3376
      %v3521 = vunpack.c.l.b16 %v3377
      %v3522 = vunpack.c.h.b16 %v3377
      %v3523 = vunpack.c.l.b16 %v3378
      %v3524 = vunpack.c.h.b16 %v3378
      %v3525 = vunpack.c.l.b16 %v3379
      %v3526 = vunpack.c.h.b16 %v3379
      %v3527 = vunpack.c.l.b16 %v3380
      %v3528 = vunpack.c.h.b16 %v3380
      %v3529 = vunpack.c.l.b16 %v3381
      %v3530 = vunpack.c.h.b16 %v3381
      %v3531 = vunpack.c.l.b16 %v3382
      %v3532 = vunpack.c.h.b16 %v3382
      %v3533 = vunpack.c.l.b16 %v3383
      %v3534 = vunpack.c.h.b16 %v3383
      %v3535 = vunpack.c.l.b16 %v3384
      %v3536 = vunpack.c.h.b16 %v3384
      %v3537 = vunpack.c.l.b16 %v3385
      %v3538 = vunpack.c.h.b16 %v3385
      %v3539 = vunpack.c.l.b16 %v3386
      %v3540 = vunpack.c.h.b16 %v3386
      %v3541 = vunpack.c.l.b16 %v3387
      %v3542 = vunpack.c.h.b16 %v3387
      %v3543 = vunpack.c.l.b16 %v3388
      %v3544 = vunpack.c.h.b16 %v3388
      %v3545 = vunpack.c.l.b16 %v3389
      %v3546 = vunpack.c.h.b16 %v3389
      %v3547 = vunpack.c.l.b16 %v3390
      %v3548 = vunpack.c.h.b16 %v3390
      %v3549 = vunpack.c.l.b16 %v3391
      %v3550 = vunpack.c.h.b16 %v3391
      %v3551 = vunpack.c.l.b16 %v3392
      %v3552 = vunpack.c.h.b16 %v3392
      %v3553 = vunpack.c.l.b16 %v3393
      %v3554 = vunpack.c.h.b16 %v3393
      %v3555 = vunpack.c.l.b16 %v3394
      %v3556 = vunpack.c.h.b16 %v3394
      %v3557 = vunpack.c.l.b16 %v3395
      %v3558 = vunpack.c.h.b16 %v3395
      %v3559 = vunpack.c.l.b16 %v3396
      %v3560 = vunpack.c.h.b16 %v3396
      %v3561 = vunpack.c.l.b16 %v3397
      %v3562 = vunpack.c.h.b16 %v3397
      %v3563 = vunpack.c.l.b16 %v3398
      %v3564 = vunpack.c.h.b16 %v3398
      %v3565 = vunpack.c.l.b16 %v3399
      %v3566 = vunpack.c.h.b16 %v3399
      %v3567 = vunpack.c.l.b16 %v3400
      %v3568 = vunpack.c.h.b16 %v3400
      %v3569 = vunpack.c.l.b16 %v3401
      %v3570 = vunpack.c.h.b16 %v3401
      %v3571 = vunpack.c.l.b16 %v3402
      %v3572 = vunpack.c.h.b16 %v3402
      %v3573 = vunpack.c.l.b16 %v3403
      %v3574 = vunpack.c.h.b16 %v3403
      %v3575 = vunpack.c.l.b16 %v3404
      %v3576 = vunpack.c.h.b16 %v3404
      %v3577 = vunpack.c.l.b16 %v3405
      %v3578 = vunpack.c.h.b16 %v3405
      %v3579 = vunpack.c.l.b16 %v3406
      %v3580 = vunpack.c.h.b16 %v3406
      %v3581 = vunpack.c.l.b16 %v3407
      %v3582 = vunpack.c.h.b16 %v3407
      %v3583 = vunpack.c.l.b16 %v3408
      %v3584 = vunpack.c.h.b16 %v3408
      %v3585 = vunpack.c.l.b16 %v3409
      %v3586 = vunpack.c.h.b16 %v3409
      %v3587 = vunpack.c.l.b16 %v3410
      %v3588 = vunpack.c.h.b16 %v3410
      %v3589 = vunpack.c.l.b16 %v3411
      %v3590 = vunpack.c.h.b16 %v3411
      %v3591 = vunpack.c.l.b16 %v3412
      %v3592 = vunpack.c.h.b16 %v3412
      %v3593 = vunpack.c.l.b16 %v3413
      %v3594 = vunpack.c.h.b16 %v3413
      %v3595 = vunpack.c.l.b16 %v3414
      %v3596 = vunpack.c.h.b16 %v3414
      %v3597 = vunpack.c.l.b16 %v3415
      %v3598 = vunpack.c.h.b16 %v3415
      %v3599 = vunpack.c.l.b16 %v3416
      %v3600 = vunpack.c.h.b16 %v3416
      %v3601 = vunpack.c.l.b16 %v3417
      %v3602 = vunpack.c.h.b16 %v3417
      %v3603 = vunpack.c.l.b16 %v3418
      %v3604 = vunpack.c.h.b16 %v3418
      %v3605 = vunpack.c.l.b16 %v3419
      %v3606 = vunpack.c.h.b16 %v3419
      %v3607 = vunpack.c.l.b16 %v3420
      %v3608 = vunpack.c.h.b16 %v3420
      %v3609 = vunpack.c.l.b16 %v3421
      %v3610 = vunpack.c.h.b16 %v3421
      %v3611 = vunpack.c.l.b16 %v3422
      %v3612 = vunpack.c.h.b16 %v3422
      %v3613 = vunpack.c.l.b16 %v3423
      %v3614 = vunpack.c.h.b16 %v3423
      %v3615 = vunpack.c.l.b16 %v3424
      %v3616 = vunpack.c.h.b16 %v3424
      %v3617 = vunpack.c.l.b16 %v3425
      %v3618 = vunpack.c.h.b16 %v3425
      %v3619 = vunpack.c.l.b16 %v3426
      %v3620 = vunpack.c.h.b16 %v3426
      %v3621 = vunpack.c.l.b16 %v3427
      %v3622 = vunpack.c.h.b16 %v3427
      %v3623 = vunpack.c.l.b16 %v3428
      %v3624 = vunpack.c.h.b16 %v3428
      %v3625 = vunpack.c.l.b16 %v3429
      %v3626 = vunpack.c.h.b16 %v3429
      %v3627 = vunpack.c.l.b16 %v3430
      %v3628 = vunpack.c.h.b16 %v3430
      %v3629 = vunpack.c.l.b16 %v3431
      %v3630 = vunpack.c.h.b16 %v3431
      %v3631 = vunpack.c.l.b16 %v3432
      %v3632 = vunpack.c.h.b16 %v3432
      %v3633 = vunpack.c.l.b16 %v3433
      %v3634 = vunpack.c.h.b16 %v3433
      %v3635 = vunpack.c.l.b16 %v3434
      %v3636 = vunpack.c.h.b16 %v3434
      %v3637 = vunpack.c.l.b16 %v3435
      %v3638 = vunpack.c.h.b16 %v3435
      %v3639 = vunpack.c.l.b16 %v3436
      %v3640 = vunpack.c.h.b16 %v3436
      %v3641 = vpack.c.b16 %v3515, %v3513
      %v3642 = vpack.c.b16 %v3516, %v3514
      %v3643 = vpack.c.b16 %v3519, %v3517
      %v3644 = vpack.c.b16 %v3520, %v3518
      %v3645 = vpack.c.b16 %v3523, %v3521
      %v3646 = vpack.c.b16 %v3524, %v3522
      %v3647 = vpack.c.b16 %v3527, %v3525
      %v3648 = vpack.c.b16 %v3528, %v3526
      %v3649 = vpack.c.b16 %v3531, %v3529
      %v3650 = vpack.c.b16 %v3532, %v3530
      %v3651 = vpack.c.b16 %v3535, %v3533
      %v3652 = vpack.c.b16 %v3536, %v3534
      %v3653 = vpack.c.b16 %v3539, %v3537
      %v3654 = vpack.c.b16 %v3540, %v3538
      %v3655 = vpack.c.b16 %v3543, %v3541
      %v3656 = vpack.c.b16 %v3544, %v3542
      %v3657 = vpack.c.b16 %v3547, %v3545
      %v3658 = vpack.c.b16 %v3548, %v3546
      %v3659 = vpack.c.b16 %v3551, %v3549
      %v3660 = vpack.c.b16 %v3552, %v3550
      %v3661 = vpack.c.b16 %v3555, %v3553
      %v3662 = vpack.c.b16 %v3556, %v3554
      %v3663 = vpack.c.b16 %v3559, %v3557
      %v3664 = vpack.c.b16 %v3560, %v3558
      %v3665 = vpack.c.b16 %v3563, %v3561
      %v3666 = vpack.c.b16 %v3564, %v3562
      %v3667 = vpack.c.b16 %v3567, %v3565
      %v3668 = vpack.c.b16 %v3568, %v3566
      %v3669 = vpack.c.b16 %v3571, %v3569
      %v3670 = vpack.c.b16 %v3572, %v3570
      %v3671 = vpack.c.b16 %v3575, %v3573
      %v3672 = vpack.c.b16 %v3576, %v3574
      %v3673 = vpack.c.b16 %v3579, %v3577
      %v3674 = vpack.c.b16 %v3580, %v3578
      %v3675 = vpack.c.b16 %v3583, %v3581
      %v3676 = vpack.c.b16 %v3584, %v3582
      %v3677 = vpack.c.b16 %v3587, %v3585
      %v3678 = vpack.c.b16 %v3588, %v3586
      %v3679 = vpack.c.b16 %v3591, %v3589
      %v3680 = vpack.c.b16 %v3592, %v3590
      %v3681 = vpack.c.b16 %v3595, %v3593
      %v3682 = vpack.c.b16 %v3596, %v3594
      %v3683 = vpack.c.b16 %v3599, %v3597
      %v3684 = vpack.c.b16 %v3600, %v3598
      %v3685 = vpack.c.b16 %v3603, %v3601
      %v3686 = vpack.c.b16 %v3604, %v3602
      %v3687 = vpack.c.b16 %v3607, %v3605
      %v3688 = vpack.c.b16 %v3608, %v3606
      %v3689 = vpack.c.b16 %v3611, %v3609
      %v3690 = vpack.c.b16 %v3612, %v3610
      %v3691 = vpack.c.b16 %v3615, %v3613
      %v3692 = vpack.c.b16 %v3616, %v3614
      %v3693 = vpack.c.b16 %v3619, %v3617
      %v3694 = vpack.c.b16 %v3620, %v3618
      %v3695 = vpack.c.b16 %v3623, %v3621
      %v3696 = vpack.c.b16 %v3624, %v3622
      %v3697 = vpack.c.b16 %v3627, %v3625
      %v3698 = vpack.c.b16 %v3628, %v3626
      %v3699 = vpack.c.b16 %v3631, %v3629
      %v3700 = vpack.c.b16 %v3632, %v3630
      %v3701 = vpack.c.b16 %v3635, %v3633
      %v3702 = vpack.c.b16 %v3636, %v3634
      %v3703 = vpack.c.b16 %v3639, %v3637
      %v3704 = vpack.c.b16 %v3640, %v3638
      %3769 = vmatprep.subr.bf16.mxu0 %v3642
      %3770 = vmatpush1.bf16.msra.mxu0 %v3641
      %3771 = vmatprep.subr.bf16.mxu0 %v3644
      %3772 = vmatpush1.bf16.msra.mxu0 %v3643
      %3773 = vmatprep.subr.bf16.mxu0 %v3646
      %3774 = vmatpush1.bf16.msra.mxu0 %v3645
      %3775 = vmatprep.subr.bf16.mxu0 %v3648
      %3776 = vmatpush1.bf16.msra.mxu0 %v3647
      %3777 = vmatprep.subr.bf16.mxu0 %v3650
      %3778 = vmatpush1.bf16.msra.mxu0 %v3649
      %3779 = vmatprep.subr.bf16.mxu0 %v3652
      %3780 = vmatpush1.bf16.msra.mxu0 %v3651
      %3781 = vmatprep.subr.bf16.mxu0 %v3654
      %3782 = vmatpush1.bf16.msra.mxu0 %v3653
      %3783 = vmatprep.subr.bf16.mxu0 %v3656
      %3784 = vmatpush1.bf16.msra.mxu0 %v3655
      %3785 = vmatprep.subr.bf16.mxu0 %v3658
      %3786 = vmatpush1.bf16.msra.mxu0 %v3657
      %3787 = vmatprep.subr.bf16.mxu0 %v3660
      %3788 = vmatpush1.bf16.msra.mxu0 %v3659
      %3789 = vmatprep.subr.bf16.mxu0 %v3662
      %3790 = vmatpush1.bf16.msra.mxu0 %v3661
      %3791 = vmatprep.subr.bf16.mxu0 %v3664
      %3792 = vmatpush1.bf16.msra.mxu0 %v3663
      %3793 = vmatprep.subr.bf16.mxu0 %v3666
      %3794 = vmatpush1.bf16.msra.mxu0 %v3665
      %3795 = vmatprep.subr.bf16.mxu0 %v3668
      %3796 = vmatpush1.bf16.msra.mxu0 %v3667
      %3797 = vmatprep.subr.bf16.mxu0 %v3670
      %3798 = vmatpush1.bf16.msra.mxu0 %v3669
      %3799 = vmatprep.subr.bf16.mxu0 %v3672
      %3800 = vmatpush1.bf16.msra.mxu0 %v3671
      %3801 = vmatprep.mubr.bf16.mxu0 %v3370
      %3802 = vmatmul.mubr.bf16.gmra.mrb[0].mxu0 %v3369
      %v3803 = vpop.f32.mrb[0].mxu0
      %v3804 = vadd.f32 %v3442, %v3803
      %v3805 = vpop.f32.mrb[0].mxu0
      %v3806 = vadd.f32 %v3446, %v3805
      %v3807 = vpop.f32.mrb[0].mxu0
      %v3808 = vpop.f32.mrb[0].mxu0
      %3809 = vdwg.mxu0
      %3810 = vmatprep.subr.bf16.mxu0 %v3674
      %3811 = vmatpush1.bf16.msra.mxu0 %v3673
      %3812 = vmatprep.subr.bf16.mxu0 %v3676
      %3813 = vmatpush1.bf16.msra.mxu0 %v3675
      %3814 = vmatprep.subr.bf16.mxu0 %v3678
      %3815 = vmatpush1.bf16.msra.mxu0 %v3677
      %3816 = vmatprep.subr.bf16.mxu0 %v3680
      %3817 = vmatpush1.bf16.msra.mxu0 %v3679
      %3818 = vmatprep.subr.bf16.mxu0 %v3682
      %3819 = vmatpush1.bf16.msra.mxu0 %v3681
      %3820 = vmatprep.subr.bf16.mxu0 %v3684
      %3821 = vmatpush1.bf16.msra.mxu0 %v3683
      %3822 = vmatprep.subr.bf16.mxu0 %v3686
      %3823 = vmatpush1.bf16.msra.mxu0 %v3685
      %3824 = vmatprep.subr.bf16.mxu0 %v3688
      %3825 = vmatpush1.bf16.msra.mxu0 %v3687
      %3826 = vmatprep.subr.bf16.mxu0 %v3690
      %3827 = vmatpush1.bf16.msra.mxu0 %v3689
      %3828 = vmatprep.subr.bf16.mxu0 %v3692
      %3829 = vmatpush1.bf16.msra.mxu0 %v3691
      %3830 = vmatprep.subr.bf16.mxu0 %v3694
      %3831 = vmatpush1.bf16.msra.mxu0 %v3693
      %3832 = vmatprep.subr.bf16.mxu0 %v3696
      %3833 = vmatpush1.bf16.msra.mxu0 %v3695
      %3834 = vmatprep.subr.bf16.mxu0 %v3698
      %3835 = vmatpush1.bf16.msra.mxu0 %v3697
      %3836 = vmatprep.subr.bf16.mxu0 %v3700
      %3837 = vmatpush1.bf16.msra.mxu0 %v3699
      %3838 = vmatprep.subr.bf16.mxu0 %v3702
      %3839 = vmatpush1.bf16.msra.mxu0 %v3701
      %3840 = vmatprep.subr.bf16.mxu0 %v3704
      %3841 = vmatpush1.bf16.msra.mxu0 %v3703
      %3842 = vmatprep.mubr.bf16.mxu0 %v3372
      %3843 = vmatmul.mubr.bf16.gmra.mrb[0].mxu0 %v3371
      %v3844 = vpop.f32.mrb[0].mxu0
      %v3845 = vadd.f32 %v3804, %v3844
      %v3846 = vpop.f32.mrb[0].mxu0
      %v3847 = vadd.f32 %v3806, %v3846
      %v3848 = vpop.f32.mrb[0].mxu0
      %v3849 = vpop.f32.mrb[0].mxu0
      %3850 = vdwg.mxu0
      %v3851 = vmax.f32 %v3845, 0.0
      %v3852 = vmax.f32 %v3847, 0.0
      %v3853 = vpack.c.bf16 %v3851, %v3851
      %v3854 = vpack.c.bf16 %v3852, %v3852
      %v3855 = vld [vmem:[#allocation8] sm:$0xf]
      %v3856 = vld [vmem:[#allocation8 + $0x4] sm:$0xf]
      %v3857 = vld [vmem:[#allocation8 + $0x8] sm:$0xf]
      %v3858 = vld [vmem:[#allocation8 + $0xc] sm:$0xf]
      %v3859 = vld [vmem:[#allocation8 + $0x10] sm:$0xf]
      %v3860 = vld [vmem:[#allocation8 + $0x14] sm:$0xf]
      %v3861 = vld [vmem:[#allocation8 + $0x18] sm:$0xf]
      %v3862 = vld [vmem:[#allocation8 + $0x1c] sm:$0xf]
      %v3863 = vld [vmem:[#allocation8 + $0x20] sm:$0xf]
      %v3864 = vld [vmem:[#allocation8 + $0x24] sm:$0xf]
      %v3865 = vld [vmem:[#allocation8 + $0x28] sm:$0xf]
      %v3866 = vld [vmem:[#allocation8 + $0x2c] sm:$0xf]
      %v3867 = vld [vmem:[#allocation8 + $0x30] sm:$0xf]
      %v3868 = vld [vmem:[#allocation8 + $0x34] sm:$0xf]
      %v3869 = vld [vmem:[#allocation8 + $0x38] sm:$0xf]
      %v3870 = vld [vmem:[#allocation8 + $0x3c] sm:$0xf]
      %v3871 = vld [vmem:[#allocation8 + $0x40] sm:$0xf]
      %v3872 = vld [vmem:[#allocation8 + $0x44] sm:$0xf]
      %v3873 = vld [vmem:[#allocation8 + $0x48] sm:$0xf]
      %v3874 = vld [vmem:[#allocation8 + $0x4c] sm:$0xf]
      %v3875 = vld [vmem:[#allocation8 + $0x50] sm:$0xf]
      %v3876 = vld [vmem:[#allocation8 + $0x54] sm:$0xf]
      %v3877 = vld [vmem:[#allocation8 + $0x58] sm:$0xf]
      %v3878 = vld [vmem:[#allocation8 + $0x5c] sm:$0xf]
      %v3879 = vld [vmem:[#allocation8 + $0x60] sm:$0xf]
      %v3880 = vld [vmem:[#allocation8 + $0x64] sm:$0xf]
      %v3881 = vld [vmem:[#allocation8 + $0x68] sm:$0xf]
      %v3882 = vld [vmem:[#allocation8 + $0x6c] sm:$0xf]
      %v3883 = vld [vmem:[#allocation8 + $0x70] sm:$0xf]
      %v3884 = vld [vmem:[#allocation8 + $0x74] sm:$0xf]
      %v3885 = vld [vmem:[#allocation8 + $0x78] sm:$0xf]
      %v3886 = vld [vmem:[#allocation8 + $0x7c] sm:$0xf]
      %v3887 = vld [vmem:[%s12] sm:$0x1]
      %v3889 = vlaneseq
      %v3890 = vshrl.u32 %v3889, 7
      %v3891 = vsub.s32 0, %v3890
      %v3892 = vrot.slane %v3887, %v3891
      %v3926 = vunpack.c.l.b16 %v3855
      %v3927 = vunpack.c.l.b16 %v3856
      %v3928 = vunpack.c.l.b16 %v3857
      %v3929 = vunpack.c.l.b16 %v3858
      %v3930 = vunpack.c.l.b16 %v3859
      %v3931 = vunpack.c.l.b16 %v3860
      %v3932 = vunpack.c.l.b16 %v3861
      %v3933 = vunpack.c.l.b16 %v3862
      %v3934 = vunpack.c.l.b16 %v3863
      %v3935 = vunpack.c.l.b16 %v3864
      %v3936 = vunpack.c.l.b16 %v3865
      %v3937 = vunpack.c.l.b16 %v3866
      %v3938 = vunpack.c.l.b16 %v3867
      %v3939 = vunpack.c.l.b16 %v3868
      %v3940 = vunpack.c.l.b16 %v3869
      %v3941 = vunpack.c.l.b16 %v3870
      %v3942 = vunpack.c.l.b16 %v3871
      %v3943 = vunpack.c.l.b16 %v3872
      %v3944 = vunpack.c.l.b16 %v3873
      %v3945 = vunpack.c.l.b16 %v3874
      %v3946 = vunpack.c.l.b16 %v3875
      %v3947 = vunpack.c.l.b16 %v3876
      %v3948 = vunpack.c.l.b16 %v3877
      %v3949 = vunpack.c.l.b16 %v3878
      %v3950 = vunpack.c.l.b16 %v3879
      %v3951 = vunpack.c.l.b16 %v3880
      %v3952 = vunpack.c.l.b16 %v3881
      %v3953 = vunpack.c.l.b16 %v3882
      %v3954 = vunpack.c.l.b16 %v3883
      %v3955 = vunpack.c.l.b16 %v3884
      %v3956 = vunpack.c.l.b16 %v3885
      %v3957 = vunpack.c.l.b16 %v3886
      %v3958 = vpack.c.b16 %v3927, %v3926
      %v3959 = vpack.c.b16 %v3929, %v3928
      %v3960 = vpack.c.b16 %v3931, %v3930
      %v3961 = vpack.c.b16 %v3933, %v3932
      %v3962 = vpack.c.b16 %v3935, %v3934
      %v3963 = vpack.c.b16 %v3937, %v3936
      %v3964 = vpack.c.b16 %v3939, %v3938
      %v3965 = vpack.c.b16 %v3941, %v3940
      %v3966 = vpack.c.b16 %v3943, %v3942
      %v3967 = vpack.c.b16 %v3945, %v3944
      %v3968 = vpack.c.b16 %v3947, %v3946
      %v3969 = vpack.c.b16 %v3949, %v3948
      %v3970 = vpack.c.b16 %v3951, %v3950
      %v3971 = vpack.c.b16 %v3953, %v3952
      %v3972 = vpack.c.b16 %v3955, %v3954
      %v3973 = vpack.c.b16 %v3957, %v3956
      %3990 = vmatprep.subr.bf16.mxu0 0
      %3991 = vmatpush1.bf16.msra.mxu0 %v3958
      %3992 = vmatprep.subr.bf16.mxu0 0
      %3993 = vmatpush1.bf16.msra.mxu0 %v3959
      %3994 = vmatprep.subr.bf16.mxu0 0
      %3995 = vmatpush1.bf16.msra.mxu0 %v3960
      %3996 = vmatprep.subr.bf16.mxu0 0
      %3997 = vmatpush1.bf16.msra.mxu0 %v3961
      %3998 = vmatprep.subr.bf16.mxu0 0
      %3999 = vmatpush1.bf16.msra.mxu0 %v3962
      %4000 = vmatprep.subr.bf16.mxu0 0
      %4001 = vmatpush1.bf16.msra.mxu0 %v3963
      %4002 = vmatprep.subr.bf16.mxu0 0
      %4003 = vmatpush1.bf16.msra.mxu0 %v3964
      %4004 = vmatprep.subr.bf16.mxu0 0
      %4005 = vmatpush1.bf16.msra.mxu0 %v3965
      %4006 = vmatprep.subr.bf16.mxu0 0
      %4007 = vmatpush1.bf16.msra.mxu0 %v3966
      %4008 = vmatprep.subr.bf16.mxu0 0
      %4009 = vmatpush1.bf16.msra.mxu0 %v3967
      %4010 = vmatprep.subr.bf16.mxu0 0
      %4011 = vmatpush1.bf16.msra.mxu0 %v3968
      %4012 = vmatprep.subr.bf16.mxu0 0
      %4013 = vmatpush1.bf16.msra.mxu0 %v3969
      %4014 = vmatprep.subr.bf16.mxu0 0
      %4015 = vmatpush1.bf16.msra.mxu0 %v3970
      %4016 = vmatprep.subr.bf16.mxu0 0
      %4017 = vmatpush1.bf16.msra.mxu0 %v3971
      %4018 = vmatprep.subr.bf16.mxu0 0
      %4019 = vmatpush1.bf16.msra.mxu0 %v3972
      %4020 = vmatprep.subr.bf16.mxu0 0
      %4021 = vmatpush1.bf16.msra.mxu0 %v3973
      %4022 = vmatprep.mubr.bf16.mxu0 %v3854
      %4023 = vmatmul.mubr.bf16.gmra.mrb[0].mxu0 %v3853
      %v4024 = vpop.f32.mrb[0].mxu0
      %v4025 = vadd.f32 %v3892, %v4024
      %v4026 = vpop.f32.mrb[0].mxu0
      %v4027 = vpop.f32.mrb[0].mxu0
      %v4028 = vpop.f32.mrb[0].mxu0
      %4029 = vdwg.mxu0
      %4030 = vst [vmem:[%s13] sm:$0x3] %v4025
    $region77: #{stn2d_forward.1} parent=1 // pred_fallthru
      _
    // Predicated region
    $region78: #{stn2d_forward.1} parent=1 // pred_check
      _
    $region79: #{stn2d_forward.1} parent=1 // pred_check_branch
      %4032 = sbr.rel (0) target = $region81
    $region80: #{stn2d_forward.1} parent=1 // pred_region
      _
    $region81: #{stn2d_forward.1} parent=1 // pred_fallthru
      _
    // Predicated region
    $region82: #{stn2d_forward.1} parent=1 // pred_check
      _
    $region83: #{stn2d_forward.1} parent=1 // pred_check_branch
      %4034 = sbr.rel (0) target = $region85
    $region84: #{stn2d_forward.1} parent=1 // pred_region
      _
    $region85: #{stn2d_forward.1} parent=1 // pred_fallthru
      _
    %4035 = vsyncpa [#allocation4], 1
    %4036 = vsyncpa [#allocation6], 1
    %4037 = vsyncpa [#allocation9], 1

</llo_original>
